<compile_context>
chip_gen: v5e
topology: v5e:2x2
jax: 0.10.0
libtpu: 0.0.40
codegen_flags: <defaults>
</compile_context>

<pallas_src>
import functools

import jax
import jax.numpy as jnp
from jax.experimental import pallas as pl
from jax.experimental.pallas import tpu as pltpu

NF = 64       # nf
GC = 32       # gc
KSIZE = 3
N_RDB = 3
N_CONV = 5
PAD_ROWS = 8  # top halo rows in the feature scratch (keeps scratch stores sublane-aligned)


# ---------------- fused RRDB kernel --------------------------------------------

def _rrdb_kernel(x_ref, w_ref, b_ref, o_ref, feat_ref, *, seq_len, nf, gc):
    """Entire RRDB for one batch element (channels-last).

    x_ref:    (1, L, nf)
    w_ref:    (15, 3*(nf+4*gc), max(nf,gc))  packed merged-K weights (zero-padded)
    b_ref:    (15, 1, max(nf,gc))            packed biases (zero-padded)
    o_ref:    (1, L, nf)
    feat_ref: VMEM scratch (PAD_ROWS + L + 8, nf + 4*gc) feature buffer
    """
    L = seq_len
    P = PAD_ROWS

    # Zero the scratch once per grid step: guarantees the conv halo rows (P-1 and P+L)
    # read as zeros (SAME padding) for every conv in every RDB.
    feat_ref[...] = jnp.zeros_like(feat_ref)

    x_in = x_ref[0].astype(jnp.float32)                      # (L, nf)

    out = x_in
    conv_idx = 0
    for _ in range(N_RDB):                                   # 3 residual dense blocks
        rdb_in = out
        feat_ref[P:P + L, 0:nf] = rdb_in                     # feature slot 0 = RDB input
        for ci in range(N_CONV):                             # 5 convs per RDB
            cin = nf + ci * gc                               # growing channel prefix
            kk = KSIZE * cin
            # Aligned full load of the scratch, then value-level slicing (cheap, vreg ops).
            fwin = feat_ref[...]                             # (P + L + 8, nf + 4*gc)
            # Merged-K conv input: [x[l-1] | x[l] | x[l+1]]  -> (L, 3*cin)
            xcat = jnp.concatenate(
                [fwin[P - 1:P - 1 + L, :cin],
                 fwin[P:P + L, :cin],
                 fwin[P + 1:P + 1 + L, :cin]], axis=-1)
            y = jnp.dot(xcat, w_ref[conv_idx, 0:kk, :],
                        preferred_element_type=jnp.float32) + b_ref[conv_idx]
            conv_idx += 1
            if ci < N_CONV - 1:
                y = jnp.where(y >= 0.0, y, 0.2 * y)          # LeakyReLU(0.2)
                feat_ref[P:P + L, cin:cin + gc] = y[:, :gc]  # write into channel slice
            else:
                out = y[:, :nf] * 0.2 + rdb_in               # RDB residual (fused)
    out = out * 0.2 + x_in                                   # RRDB residual (fused)
    o_ref[0] = out.astype(o_ref.dtype)


def rrdb_forward(x_ncl, packed_w, packed_b, nf=NF, gc=GC):
    """RRDB forward; input/output in PyTorch NCL layout (N, nf, L)."""
    n, _, L = x_ncl.shape
    x_nlc = jnp.transpose(x_ncl, (0, 2, 1))                  # NCL -> NLC (once per RRDB)
    kernel = functools.partial(_rrdb_kernel, seq_len=L, nf=nf, gc=gc)
    out_nlc = pl.pallas_call(
        kernel,
        out_shape=jax.ShapeDtypeStruct((n, L, nf), x_nlc.dtype),
        grid=(n,),
        in_specs=[
            pl.BlockSpec((1, L, nf), lambda i: (i, 0, 0)),
            # Constant index maps: weights/biases are fetched into VMEM once and reused.
            pl.BlockSpec(packed_w.shape, lambda i: (0, 0, 0)),
            pl.BlockSpec(packed_b.shape, lambda i: (0, 0, 0)),
        ],
        out_specs=pl.BlockSpec((1, L, nf), lambda i: (i, 0, 0)),
        scratch_shapes=[pltpu.VMEM((PAD_ROWS + L + 8, nf + 4 * gc), jnp.float32)],
        compiler_params=pltpu.CompilerParams(
            dimension_semantics=("parallel",),
            vmem_limit_bytes=32 * 1024 * 1024),
    )(x_nlc, packed_w, packed_b)
    return jnp.transpose(out_nlc, (0, 2, 1))                 # NLC -> NCL


# ---------------- parameters (PyTorch-style init + merged-K packing) ------------

def init_rrdb_params(key, nf=NF, gc=GC):
    """15 Conv1d layers (3 RDBs x 5); PyTorch weight layout (Cout, Cin, K), bias (Cout,)."""
    cins = [nf, nf + gc, nf + 2 * gc, nf + 3 * gc, nf + 4 * gc]
    couts = [gc, gc, gc, gc, nf]
    all_params = []
    for _ in range(N_RDB):
        params = []
        for cin, cout in zip(cins, couts):
            key, kw, kb = jax.random.split(key, 3)
            bound = 1.0 / float(cin * KSIZE) ** 0.5
            w = jax.random.uniform(kw, (cout, cin, KSIZE), jnp.float32, -bound, bound)
            b = jax.random.uniform(kb, (cout,), jnp.float32, -bound, bound)
            params.append((w, b))
        all_params.append(params)
    return all_params, key


def pack_rrdb_params(all_params, nf=NF, gc=GC):
    """Pack all 15 conv weights into (15, 3*(nf+4*gc), max(nf,gc)) merged-K layout."""
    kmax = KSIZE * (nf + 4 * gc)
    cpad = max(nf, gc)
    ws, bs = [], []
    for params in all_params:
        for w_t, b in params:                               # w_t: (Cout, Cin, K)
            cout, cin, _ = w_t.shape
            # (Cout, Cin, K) -> (K, Cin, Cout) -> (K*Cin, Cout): row k*Cin+c matches the
            # in-kernel concat order [x[l-1] | x[l] | x[l+1]].
            wp = jnp.transpose(w_t, (2, 1, 0)).reshape(KSIZE * cin, cout)
            wp = jnp.pad(wp, ((0, kmax - KSIZE * cin), (0, cpad - cout)))
            bp = jnp.pad(b, (0, cpad - cout)).reshape(1, cpad)
            ws.append(wp)
            bs.append(bp)
    return jnp.stack(ws), jnp.stack(bs)                      # (15, kmax, cpad), (15, 1, cpad)


# ---------------- pure-JAX reference (silent correctness check) -----------------

def _conv1d_ref(x_nlc, w_t, b):
    """Conv1d(k=3, stride=1, pad=1); x_nlc: (N, L, Cin); w_t: (Cout, Cin, 3)."""
    L = x_nlc.shape[1]
    x_pad = jnp.pad(x_nlc, ((0, 0), (1, 1), (0, 0)))
    acc = b[None, None, :]
    for k in range(KSIZE):
        acc = acc + jnp.einsum('nlc,oc->nlo', x_pad[:, k:k + L, :], w_t[:, :, k])
    return acc


def _rrdb_ref(x_ncl, all_params):
    x = jnp.transpose(x_ncl, (0, 2, 1))
    out = x
    for params in all_params:
        h = out
        feats = [h]
        for i, (w, b) in enumerate(params):
            y = _conv1d_ref(jnp.concatenate(feats, axis=-1), w, b)
            if i < N_CONV - 1:
                y = jnp.where(y >= 0.0, y, 0.2 * y)
            feats.append(y)
        out = feats[-1] * 0.2 + h
    out = out * 0.2 + x
    return jnp.transpose(out, (0, 2, 1))


# ---------------- main ----------------------------------------------------------

if __name__ == "__main__":
    key = jax.random.PRNGKey(0)
    key, kx = jax.random.split(key)

    N, L = 2, 16
    x = jax.random.normal(kx, (N, NF, L), dtype=jnp.float32)    # PyTorch NCL input

    all_params, key = init_rrdb_params(key, NF, GC)
    packed_w, packed_b = pack_rrdb_params(all_params, NF, GC)

    out = rrdb_forward(x, packed_w, packed_b, NF, GC)
    out = jax.block_until_ready(out)

    assert out.shape == (N, NF, L), out.shape

    ref = _rrdb_ref(x, all_params)
    assert jnp.allclose(out, ref, rtol=2e-4, atol=2e-4), float(jnp.max(jnp.abs(out - ref)))

    print("KERNEL_OK")
</pallas_src>

<mosaic_0001>
module attributes {stable_mosaic.version = 11 : i64} {
  func.func @_rrdb_kernel(%arg0: i32, %arg1: memref<1x16x64xf32, #tpu.memory_space<vmem>>, %arg2: memref<15x576x64xf32, #tpu.memory_space<vmem>>, %arg3: memref<15x1x64xf32, #tpu.memory_space<vmem>>, %arg4: memref<1x16x64xf32, #tpu.memory_space<vmem>>, %arg5: memref<32x192xf32, #tpu.memory_space<vmem>>) attributes {dimension_semantics = [#tpu.dimension_semantics<parallel>], iteration_bounds = array<i64: 2>, scalar_prefetch = 0 : i64, scratch_operands = 1 : i64, tpu.core_type = #tpu.core_type<tc>, window_params = [{transform_indices = @transform_0, window_bounds = array<i64: 1, 16, 64>}, {pipeline_mode = #tpu.pipeline_mode<synchronous>, transform_indices = @transform_1, window_bounds = array<i64: 15, 576, 64>}, {pipeline_mode = #tpu.pipeline_mode<synchronous>, transform_indices = @transform_2, window_bounds = array<i64: 15, 1, 64>}, {transform_indices = @transform_3, window_bounds = array<i64: 1, 16, 64>}]} {
    %cst = arith.constant 0.000000e+00 : f32
    %0 = vector.broadcast %cst : f32 to vector<32x192xf32>
    %c0 = arith.constant 0 : index
    %c0_0 = arith.constant 0 : index
    %1 = vector.load %arg5[%c0, %c0_0] : memref<32x192xf32, #tpu.memory_space<vmem>>, vector<32x192xf32>
    tpu.vector_store %arg5[%c0, %c0_0], %0 {strides = array<i32>} : memref<32x192xf32, #tpu.memory_space<vmem>>, vector<32x192xf32>,
    %c0_1 = arith.constant 0 : index
    %c0_2 = arith.constant 0 : index
    %c0_3 = arith.constant 0 : index
    %2 = vector.load %arg1[%c0_1, %c0_2, %c0_3] : memref<1x16x64xf32, #tpu.memory_space<vmem>>, vector<1x16x64xf32>
    %3 = vector.shape_cast %2 : vector<1x16x64xf32> to vector<16x64xf32>
    %c8 = arith.constant 8 : index
    %c0_4 = arith.constant 0 : index
    %4 = vector.load %arg5[%c8, %c0_4] : memref<32x192xf32, #tpu.memory_space<vmem>>, vector<16x64xf32>
    tpu.vector_store %arg5[%c8, %c0_4], %3 {strides = array<i32>} : memref<32x192xf32, #tpu.memory_space<vmem>>, vector<16x64xf32>,
    %c0_5 = arith.constant 0 : index
    %c0_6 = arith.constant 0 : index
    %5 = vector.load %arg5[%c0_5, %c0_6] : memref<32x192xf32, #tpu.memory_space<vmem>>, vector<32x192xf32>
    %6 = vector.extract_strided_slice %5 {offsets = [7, 0], sizes = [16, 64], strides = [1, 1]} : vector<32x192xf32> to vector<16x64xf32>
    %7 = vector.extract_strided_slice %5 {offsets = [8, 0], sizes = [16, 64], strides = [1, 1]} : vector<32x192xf32> to vector<16x64xf32>
    %8 = vector.extract_strided_slice %5 {offsets = [9, 0], sizes = [16, 64], strides = [1, 1]} : vector<32x192xf32> to vector<16x64xf32>
    %9 = tpu.concatenate %6, %7, %8 in 1 : vector<16x64xf32>, vector<16x64xf32>, vector<16x64xf32> -> vector<16x192xf32>
    %c0_7 = arith.constant 0 : index
    %c0_8 = arith.constant 0 : index
    %c0_9 = arith.constant 0 : index
    %10 = vector.load %arg2[%c0_7, %c0_8, %c0_9] : memref<15x576x64xf32, #tpu.memory_space<vmem>>, vector<1x192x64xf32>
    %11 = vector.shape_cast %10 : vector<1x192x64xf32> to vector<192x64xf32>
    %cst_10 = arith.constant dense<0.000000e+00> : vector<16x64xf32>
    %12 = tpu.matmul %9, %11, %cst_10 {dimension_numbers = #tpu.dot_dimension_numbers<[1], [0], [0], [1], [0, 0, 1, 1], [], []>} : vector<16x192xf32>, vector<192x64xf32>, vector<16x64xf32> -> vector<16x64xf32>
    %c0_11 = arith.constant 0 : index
    %c0_12 = arith.constant 0 : index
    %c0_13 = arith.constant 0 : index
    %13 = vector.load %arg3[%c0_11, %c0_12, %c0_13] : memref<15x1x64xf32, #tpu.memory_space<vmem>>, vector<1x1x64xf32>
    %14 = vector.shape_cast %13 : vector<1x1x64xf32> to vector<1x64xf32>
    %15 = vector.broadcast %14 : vector<1x64xf32> to vector<16x64xf32>
    %16 = arith.addf %12, %15 : vector<16x64xf32>
    %cst_14 = arith.constant 0.000000e+00 : f32
    %17 = vector.broadcast %cst_14 : f32 to vector<16x64xf32>
    %18 = arith.cmpf oge, %16, %17 : vector<16x64xf32>
    %cst_15 = arith.constant 2.000000e-01 : f32
    %19 = vector.broadcast %cst_15 : f32 to vector<16x64xf32>
    %20 = arith.mulf %19, %16 : vector<16x64xf32>
    %21 = arith.select %18, %16, %20 : vector<16x64xi1>, vector<16x64xf32>
    %22 = vector.extract_strided_slice %21 {offsets = [0, 0], sizes = [16, 32], strides = [1, 1]} : vector<16x64xf32> to vector<16x32xf32>
    %c8_16 = arith.constant 8 : index
    %c64 = arith.constant 64 : index
    %23 = vector.load %arg5[%c8_16, %c64] : memref<32x192xf32, #tpu.memory_space<vmem>>, vector<16x32xf32>
    tpu.vector_store %arg5[%c8_16, %c64], %22 {strides = array<i32>} : memref<32x192xf32, #tpu.memory_space<vmem>>, vector<16x32xf32>,
    %c0_17 = arith.constant 0 : index
    %c0_18 = arith.constant 0 : index
    %24 = vector.load %arg5[%c0_17, %c0_18] : memref<32x192xf32, #tpu.memory_space<vmem>>, vector<32x192xf32>
    %25 = vector.extract_strided_slice %24 {offsets = [7, 0], sizes = [16, 96], strides = [1, 1]} : vector<32x192xf32> to vector<16x96xf32>
    %26 = vector.extract_strided_slice %24 {offsets = [8, 0], sizes = [16, 96], strides = [1, 1]} : vector<32x192xf32> to vector<16x96xf32>
    %27 = vector.extract_strided_slice %24 {offsets = [9, 0], sizes = [16, 96], strides = [1, 1]} : vector<32x192xf32> to vector<16x96xf32>
    %28 = tpu.concatenate %25, %26, %27 in 1 : vector<16x96xf32>, vector<16x96xf32>, vector<16x96xf32> -> vector<16x288xf32>
    %c1 = arith.constant 1 : index
    %c0_19 = arith.constant 0 : index
    %c0_20 = arith.constant 0 : index
    %29 = vector.load %arg2[%c1, %c0_19, %c0_20] : memref<15x576x64xf32, #tpu.memory_space<vmem>>, vector<1x288x64xf32>
    %30 = vector.shape_cast %29 : vector<1x288x64xf32> to vector<288x64xf32>
    %cst_21 = arith.constant dense<0.000000e+00> : vector<16x64xf32>
    %31 = tpu.matmul %28, %30, %cst_21 {dimension_numbers = #tpu.dot_dimension_numbers<[1], [0], [0], [1], [0, 0, 1, 1], [], []>} : vector<16x288xf32>, vector<288x64xf32>, vector<16x64xf32> -> vector<16x64xf32>
    %c1_22 = arith.constant 1 : index
    %c0_23 = arith.constant 0 : index
    %c0_24 = arith.constant 0 : index
    %32 = vector.load %arg3[%c1_22, %c0_23, %c0_24] : memref<15x1x64xf32, #tpu.memory_space<vmem>>, vector<1x1x64xf32>
    %33 = vector.shape_cast %32 : vector<1x1x64xf32> to vector<1x64xf32>
    %34 = vector.broadcast %33 : vector<1x64xf32> to vector<16x64xf32>
    %35 = arith.addf %31, %34 : vector<16x64xf32>
    %cst_25 = arith.constant 0.000000e+00 : f32
    %36 = vector.broadcast %cst_25 : f32 to vector<16x64xf32>
    %37 = arith.cmpf oge, %35, %36 : vector<16x64xf32>
    %cst_26 = arith.constant 2.000000e-01 : f32
    %38 = vector.broadcast %cst_26 : f32 to vector<16x64xf32>
    %39 = arith.mulf %38, %35 : vector<16x64xf32>
    %40 = arith.select %37, %35, %39 : vector<16x64xi1>, vector<16x64xf32>
    %41 = vector.extract_strided_slice %40 {offsets = [0, 0], sizes = [16, 32], strides = [1, 1]} : vector<16x64xf32> to vector<16x32xf32>
    %c8_27 = arith.constant 8 : index
    %c96 = arith.constant 96 : index
    %42 = vector.load %arg5[%c8_27, %c96] : memref<32x192xf32, #tpu.memory_space<vmem>>, vector<16x32xf32>
    tpu.vector_store %arg5[%c8_27, %c96], %41 {strides = array<i32>} : memref<32x192xf32, #tpu.memory_space<vmem>>, vector<16x32xf32>,
    %c0_28 = arith.constant 0 : index
    %c0_29 = arith.constant 0 : index
    %43 = vector.load %arg5[%c0_28, %c0_29] : memref<32x192xf32, #tpu.memory_space<vmem>>, vector<32x192xf32>
    %44 = vector.extract_strided_slice %43 {offsets = [7, 0], sizes = [16, 128], strides = [1, 1]} : vector<32x192xf32> to vector<16x128xf32>
    %45 = vector.extract_strided_slice %43 {offsets = [8, 0], sizes = [16, 128], strides = [1, 1]} : vector<32x192xf32> to vector<16x128xf32>
    %46 = vector.extract_strided_slice %43 {offsets = [9, 0], sizes = [16, 128], strides = [1, 1]} : vector<32x192xf32> to vector<16x128xf32>
    %47 = tpu.concatenate %44, %45, %46 in 1 : vector<16x128xf32>, vector<16x128xf32>, vector<16x128xf32> -> vector<16x384xf32>
    %c2 = arith.constant 2 : index
    %c0_30 = arith.constant 0 : index
    %c0_31 = arith.constant 0 : index
    %48 = vector.load %arg2[%c2, %c0_30, %c0_31] : memref<15x576x64xf32, #tpu.memory_space<vmem>>, vector<1x384x64xf32>
    %49 = vector.shape_cast %48 : vector<1x384x64xf32> to vector<384x64xf32>
    %cst_32 = arith.constant dense<0.000000e+00> : vector<16x64xf32>
    %50 = tpu.matmul %47, %49, %cst_32 {dimension_numbers = #tpu.dot_dimension_numbers<[1], [0], [0], [1], [0, 0, 1, 1], [], []>} : vector<16x384xf32>, vector<384x64xf32>, vector<16x64xf32> -> vector<16x64xf32>
    %c2_33 = arith.constant 2 : index
    %c0_34 = arith.constant 0 : index
    %c0_35 = arith.constant 0 : index
    %51 = vector.load %arg3[%c2_33, %c0_34, %c0_35] : memref<15x1x64xf32, #tpu.memory_space<vmem>>, vector<1x1x64xf32>
    %52 = vector.shape_cast %51 : vector<1x1x64xf32> to vector<1x64xf32>
    %53 = vector.broadcast %52 : vector<1x64xf32> to vector<16x64xf32>
    %54 = arith.addf %50, %53 : vector<16x64xf32>
    %cst_36 = arith.constant 0.000000e+00 : f32
    %55 = vector.broadcast %cst_36 : f32 to vector<16x64xf32>
    %56 = arith.cmpf oge, %54, %55 : vector<16x64xf32>
    %cst_37 = arith.constant 2.000000e-01 : f32
    %57 = vector.broadcast %cst_37 : f32 to vector<16x64xf32>
    %58 = arith.mulf %57, %54 : vector<16x64xf32>
    %59 = arith.select %56, %54, %58 : vector<16x64xi1>, vector<16x64xf32>
    %60 = vector.extract_strided_slice %59 {offsets = [0, 0], sizes = [16, 32], strides = [1, 1]} : vector<16x64xf32> to vector<16x32xf32>
    %c8_38 = arith.constant 8 : index
    %c128 = arith.constant 128 : index
    %61 = vector.load %arg5[%c8_38, %c128] : memref<32x192xf32, #tpu.memory_space<vmem>>, vector<16x32xf32>
    tpu.vector_store %arg5[%c8_38, %c128], %60 {strides = array<i32>} : memref<32x192xf32, #tpu.memory_space<vmem>>, vector<16x32xf32>,
    %c0_39 = arith.constant 0 : index
    %c0_40 = arith.constant 0 : index
    %62 = vector.load %arg5[%c0_39, %c0_40] : memref<32x192xf32, #tpu.memory_space<vmem>>, vector<32x192xf32>
    %63 = vector.extract_strided_slice %62 {offsets = [7, 0], sizes = [16, 160], strides = [1, 1]} : vector<32x192xf32> to vector<16x160xf32>
    %64 = vector.extract_strided_slice %62 {offsets = [8, 0], sizes = [16, 160], strides = [1, 1]} : vector<32x192xf32> to vector<16x160xf32>
    %65 = vector.extract_strided_slice %62 {offsets = [9, 0], sizes = [16, 160], strides = [1, 1]} : vector<32x192xf32> to vector<16x160xf32>
    %66 = tpu.concatenate %63, %64, %65 in 1 : vector<16x160xf32>, vector<16x160xf32>, vector<16x160xf32> -> vector<16x480xf32>
    %c3 = arith.constant 3 : index
    %c0_41 = arith.constant 0 : index
    %c0_42 = arith.constant 0 : index
    %67 = vector.load %arg2[%c3, %c0_41, %c0_42] : memref<15x576x64xf32, #tpu.memory_space<vmem>>, vector<1x480x64xf32>
    %68 = vector.shape_cast %67 : vector<1x480x64xf32> to vector<480x64xf32>
    %cst_43 = arith.constant dense<0.000000e+00> : vector<16x64xf32>
    %69 = tpu.matmul %66, %68, %cst_43 {dimension_numbers = #tpu.dot_dimension_numbers<[1], [0], [0], [1], [0, 0, 1, 1], [], []>} : vector<16x480xf32>, vector<480x64xf32>, vector<16x64xf32> -> vector<16x64xf32>
    %c3_44 = arith.constant 3 : index
    %c0_45 = arith.constant 0 : index
    %c0_46 = arith.constant 0 : index
    %70 = vector.load %arg3[%c3_44, %c0_45, %c0_46] : memref<15x1x64xf32, #tpu.memory_space<vmem>>, vector<1x1x64xf32>
    %71 = vector.shape_cast %70 : vector<1x1x64xf32> to vector<1x64xf32>
    %72 = vector.broadcast %71 : vector<1x64xf32> to vector<16x64xf32>
    %73 = arith.addf %69, %72 : vector<16x64xf32>
    %cst_47 = arith.constant 0.000000e+00 : f32
    %74 = vector.broadcast %cst_47 : f32 to vector<16x64xf32>
    %75 = arith.cmpf oge, %73, %74 : vector<16x64xf32>
    %cst_48 = arith.constant 2.000000e-01 : f32
    %76 = vector.broadcast %cst_48 : f32 to vector<16x64xf32>
    %77 = arith.mulf %76, %73 : vector<16x64xf32>
    %78 = arith.select %75, %73, %77 : vector<16x64xi1>, vector<16x64xf32>
    %79 = vector.extract_strided_slice %78 {offsets = [0, 0], sizes = [16, 32], strides = [1, 1]} : vector<16x64xf32> to vector<16x32xf32>
    %c8_49 = arith.constant 8 : index
    %c160 = arith.constant 160 : index
    %80 = vector.load %arg5[%c8_49, %c160] : memref<32x192xf32, #tpu.memory_space<vmem>>, vector<16x32xf32>
    tpu.vector_store %arg5[%c8_49, %c160], %79 {strides = array<i32>} : memref<32x192xf32, #tpu.memory_space<vmem>>, vector<16x32xf32>,
    %c0_50 = arith.constant 0 : index
    %c0_51 = arith.constant 0 : index
    %81 = vector.load %arg5[%c0_50, %c0_51] : memref<32x192xf32, #tpu.memory_space<vmem>>, vector<32x192xf32>
    %82 = vector.extract_strided_slice %81 {offsets = [7, 0], sizes = [16, 192], strides = [1, 1]} : vector<32x192xf32> to vector<16x192xf32>
    %83 = vector.extract_strided_slice %81 {offsets = [8, 0], sizes = [16, 192], strides = [1, 1]} : vector<32x192xf32> to vector<16x192xf32>
    %84 = vector.extract_strided_slice %81 {offsets = [9, 0], sizes = [16, 192], strides = [1, 1]} : vector<32x192xf32> to vector<16x192xf32>
    %85 = tpu.concatenate %82, %83, %84 in 1 : vector<16x192xf32>, vector<16x192xf32>, vector<16x192xf32> -> vector<16x576xf32>
    %c4 = arith.constant 4 : index
    %c0_52 = arith.constant 0 : index
    %c0_53 = arith.constant 0 : index
    %86 = vector.load %arg2[%c4, %c0_52, %c0_53] : memref<15x576x64xf32, #tpu.memory_space<vmem>>, vector<1x576x64xf32>
    %87 = vector.shape_cast %86 : vector<1x576x64xf32> to vector<576x64xf32>
    %cst_54 = arith.constant dense<0.000000e+00> : vector<16x64xf32>
    %88 = tpu.matmul %85, %87, %cst_54 {dimension_numbers = #tpu.dot_dimension_numbers<[1], [0], [0], [1], [0, 0, 1, 1], [], []>} : vector<16x576xf32>, vector<576x64xf32>, vector<16x64xf32> -> vector<16x64xf32>
    %c4_55 = arith.constant 4 : index
    %c0_56 = arith.constant 0 : index
    %c0_57 = arith.constant 0 : index
    %89 = vector.load %arg3[%c4_55, %c0_56, %c0_57] : memref<15x1x64xf32, #tpu.memory_space<vmem>>, vector<1x1x64xf32>
    %90 = vector.shape_cast %89 : vector<1x1x64xf32> to vector<1x64xf32>
    %91 = vector.broadcast %90 : vector<1x64xf32> to vector<16x64xf32>
    %92 = arith.addf %88, %91 : vector<16x64xf32>
    %cst_58 = arith.constant 2.000000e-01 : f32
    %93 = vector.broadcast %cst_58 : f32 to vector<16x64xf32>
    %94 = arith.mulf %92, %93 : vector<16x64xf32>
    %95 = arith.addf %94, %3 : vector<16x64xf32>
    %c8_59 = arith.constant 8 : index
    %c0_60 = arith.constant 0 : index
    %96 = vector.load %arg5[%c8_59, %c0_60] : memref<32x192xf32, #tpu.memory_space<vmem>>, vector<16x64xf32>
    tpu.vector_store %arg5[%c8_59, %c0_60], %95 {strides = array<i32>} : memref<32x192xf32, #tpu.memory_space<vmem>>, vector<16x64xf32>,
    %c0_61 = arith.constant 0 : index
    %c0_62 = arith.constant 0 : index
    %97 = vector.load %arg5[%c0_61, %c0_62] : memref<32x192xf32, #tpu.memory_space<vmem>>, vector<32x192xf32>
    %98 = vector.extract_strided_slice %97 {offsets = [7, 0], sizes = [16, 64], strides = [1, 1]} : vector<32x192xf32> to vector<16x64xf32>
    %99 = vector.extract_strided_slice %97 {offsets = [8, 0], sizes = [16, 64], strides = [1, 1]} : vector<32x192xf32> to vector<16x64xf32>
    %100 = vector.extract_strided_slice %97 {offsets = [9, 0], sizes = [16, 64], strides = [1, 1]} : vector<32x192xf32> to vector<16x64xf32>
    %101 = tpu.concatenate %98, %99, %100 in 1 : vector<16x64xf32>, vector<16x64xf32>, vector<16x64xf32> -> vector<16x192xf32>
    %c5 = arith.constant 5 : index
    %c0_63 = arith.constant 0 : index
    %c0_64 = arith.constant 0 : index
    %102 = vector.load %arg2[%c5, %c0_63, %c0_64] : memref<15x576x64xf32, #tpu.memory_space<vmem>>, vector<1x192x64xf32>
    %103 = vector.shape_cast %102 : vector<1x192x64xf32> to vector<192x64xf32>
    %cst_65 = arith.constant dense<0.000000e+00> : vector<16x64xf32>
    %104 = tpu.matmul %101, %103, %cst_65 {dimension_numbers = #tpu.dot_dimension_numbers<[1], [0], [0], [1], [0, 0, 1, 1], [], []>} : vector<16x192xf32>, vector<192x64xf32>, vector<16x64xf32> -> vector<16x64xf32>
    %c5_66 = arith.constant 5 : index
    %c0_67 = arith.constant 0 : index
    %c0_68 = arith.constant 0 : index
    %105 = vector.load %arg3[%c5_66, %c0_67, %c0_68] : memref<15x1x64xf32, #tpu.memory_space<vmem>>, vector<1x1x64xf32>
    %106 = vector.shape_cast %105 : vector<1x1x64xf32> to vector<1x64xf32>
    %107 = vector.broadcast %106 : vector<1x64xf32> to vector<16x64xf32>
    %108 = arith.addf %104, %107 : vector<16x64xf32>
    %cst_69 = arith.constant 0.000000e+00 : f32
    %109 = vector.broadcast %cst_69 : f32 to vector<16x64xf32>
    %110 = arith.cmpf oge, %108, %109 : vector<16x64xf32>
    %cst_70 = arith.constant 2.000000e-01 : f32
    %111 = vector.broadcast %cst_70 : f32 to vector<16x64xf32>
    %112 = arith.mulf %111, %108 : vector<16x64xf32>
    %113 = arith.select %110, %108, %112 : vector<16x64xi1>, vector<16x64xf32>
    %114 = vector.extract_strided_slice %113 {offsets = [0, 0], sizes = [16, 32], strides = [1, 1]} : vector<16x64xf32> to vector<16x32xf32>
    %c8_71 = arith.constant 8 : index
    %c64_72 = arith.constant 64 : index
    %115 = vector.load %arg5[%c8_71, %c64_72] : memref<32x192xf32, #tpu.memory_space<vmem>>, vector<16x32xf32>
    tpu.vector_store %arg5[%c8_71, %c64_72], %114 {strides = array<i32>} : memref<32x192xf32, #tpu.memory_space<vmem>>, vector<16x32xf32>,
    %c0_73 = arith.constant 0 : index
    %c0_74 = arith.constant 0 : index
    %116 = vector.load %arg5[%c0_73, %c0_74] : memref<32x192xf32, #tpu.memory_space<vmem>>, vector<32x192xf32>
    %117 = vector.extract_strided_slice %116 {offsets = [7, 0], sizes = [16, 96], strides = [1, 1]} : vector<32x192xf32> to vector<16x96xf32>
    %118 = vector.extract_strided_slice %116 {offsets = [8, 0], sizes = [16, 96], strides = [1, 1]} : vector<32x192xf32> to vector<16x96xf32>
    %119 = vector.extract_strided_slice %116 {offsets = [9, 0], sizes = [16, 96], strides = [1, 1]} : vector<32x192xf32> to vector<16x96xf32>
    %120 = tpu.concatenate %117, %118, %119 in 1 : vector<16x96xf32>, vector<16x96xf32>, vector<16x96xf32> -> vector<16x288xf32>
    %c6 = arith.constant 6 : index
    %c0_75 = arith.constant 0 : index
    %c0_76 = arith.constant 0 : index
    %121 = vector.load %arg2[%c6, %c0_75, %c0_76] : memref<15x576x64xf32, #tpu.memory_space<vmem>>, vector<1x288x64xf32>
    %122 = vector.shape_cast %121 : vector<1x288x64xf32> to vector<288x64xf32>
    %cst_77 = arith.constant dense<0.000000e+00> : vector<16x64xf32>
    %123 = tpu.matmul %120, %122, %cst_77 {dimension_numbers = #tpu.dot_dimension_numbers<[1], [0], [0], [1], [0, 0, 1, 1], [], []>} : vector<16x288xf32>, vector<288x64xf32>, vector<16x64xf32> -> vector<16x64xf32>
    %c6_78 = arith.constant 6 : index
    %c0_79 = arith.constant 0 : index
    %c0_80 = arith.constant 0 : index
    %124 = vector.load %arg3[%c6_78, %c0_79, %c0_80] : memref<15x1x64xf32, #tpu.memory_space<vmem>>, vector<1x1x64xf32>
    %125 = vector.shape_cast %124 : vector<1x1x64xf32> to vector<1x64xf32>
    %126 = vector.broadcast %125 : vector<1x64xf32> to vector<16x64xf32>
    %127 = arith.addf %123, %126 : vector<16x64xf32>
    %cst_81 = arith.constant 0.000000e+00 : f32
    %128 = vector.broadcast %cst_81 : f32 to vector<16x64xf32>
    %129 = arith.cmpf oge, %127, %128 : vector<16x64xf32>
    %cst_82 = arith.constant 2.000000e-01 : f32
    %130 = vector.broadcast %cst_82 : f32 to vector<16x64xf32>
    %131 = arith.mulf %130, %127 : vector<16x64xf32>
    %132 = arith.select %129, %127, %131 : vector<16x64xi1>, vector<16x64xf32>
    %133 = vector.extract_strided_slice %132 {offsets = [0, 0], sizes = [16, 32], strides = [1, 1]} : vector<16x64xf32> to vector<16x32xf32>
    %c8_83 = arith.constant 8 : index
    %c96_84 = arith.constant 96 : index
    %134 = vector.load %arg5[%c8_83, %c96_84] : memref<32x192xf32, #tpu.memory_space<vmem>>, vector<16x32xf32>
    tpu.vector_store %arg5[%c8_83, %c96_84], %133 {strides = array<i32>} : memref<32x192xf32, #tpu.memory_space<vmem>>, vector<16x32xf32>,
    %c0_85 = arith.constant 0 : index
    %c0_86 = arith.constant 0 : index
    %135 = vector.load %arg5[%c0_85, %c0_86] : memref<32x192xf32, #tpu.memory_space<vmem>>, vector<32x192xf32>
    %136 = vector.extract_strided_slice %135 {offsets = [7, 0], sizes = [16, 128], strides = [1, 1]} : vector<32x192xf32> to vector<16x128xf32>
    %137 = vector.extract_strided_slice %135 {offsets = [8, 0], sizes = [16, 128], strides = [1, 1]} : vector<32x192xf32> to vector<16x128xf32>
    %138 = vector.extract_strided_slice %135 {offsets = [9, 0], sizes = [16, 128], strides = [1, 1]} : vector<32x192xf32> to vector<16x128xf32>
    %139 = tpu.concatenate %136, %137, %138 in 1 : vector<16x128xf32>, vector<16x128xf32>, vector<16x128xf32> -> vector<16x384xf32>
    %c7 = arith.constant 7 : index
    %c0_87 = arith.constant 0 : index
    %c0_88 = arith.constant 0 : index
    %140 = vector.load %arg2[%c7, %c0_87, %c0_88] : memref<15x576x64xf32, #tpu.memory_space<vmem>>, vector<1x384x64xf32>
    %141 = vector.shape_cast %140 : vector<1x384x64xf32> to vector<384x64xf32>
    %cst_89 = arith.constant dense<0.000000e+00> : vector<16x64xf32>
    %142 = tpu.matmul %139, %141, %cst_89 {dimension_numbers = #tpu.dot_dimension_numbers<[1], [0], [0], [1], [0, 0, 1, 1], [], []>} : vector<16x384xf32>, vector<384x64xf32>, vector<16x64xf32> -> vector<16x64xf32>
    %c7_90 = arith.constant 7 : index
    %c0_91 = arith.constant 0 : index
    %c0_92 = arith.constant 0 : index
    %143 = vector.load %arg3[%c7_90, %c0_91, %c0_92] : memref<15x1x64xf32, #tpu.memory_space<vmem>>, vector<1x1x64xf32>
    %144 = vector.shape_cast %143 : vector<1x1x64xf32> to vector<1x64xf32>
    %145 = vector.broadcast %144 : vector<1x64xf32> to vector<16x64xf32>
    %146 = arith.addf %142, %145 : vector<16x64xf32>
    %cst_93 = arith.constant 0.000000e+00 : f32
    %147 = vector.broadcast %cst_93 : f32 to vector<16x64xf32>
    %148 = arith.cmpf oge, %146, %147 : vector<16x64xf32>
    %cst_94 = arith.constant 2.000000e-01 : f32
    %149 = vector.broadcast %cst_94 : f32 to vector<16x64xf32>
    %150 = arith.mulf %149, %146 : vector<16x64xf32>
    %151 = arith.select %148, %146, %150 : vector<16x64xi1>, vector<16x64xf32>
    %152 = vector.extract_strided_slice %151 {offsets = [0, 0], sizes = [16, 32], strides = [1, 1]} : vector<16x64xf32> to vector<16x32xf32>
    %c8_95 = arith.constant 8 : index
    %c128_96 = arith.constant 128 : index
    %153 = vector.load %arg5[%c8_95, %c128_96] : memref<32x192xf32, #tpu.memory_space<vmem>>, vector<16x32xf32>
    tpu.vector_store %arg5[%c8_95, %c128_96], %152 {strides = array<i32>} : memref<32x192xf32, #tpu.memory_space<vmem>>, vector<16x32xf32>,
    %c0_97 = arith.constant 0 : index
    %c0_98 = arith.constant 0 : index
    %154 = vector.load %arg5[%c0_97, %c0_98] : memref<32x192xf32, #tpu.memory_space<vmem>>, vector<32x192xf32>
    %155 = vector.extract_strided_slice %154 {offsets = [7, 0], sizes = [16, 160], strides = [1, 1]} : vector<32x192xf32> to vector<16x160xf32>
    %156 = vector.extract_strided_slice %154 {offsets = [8, 0], sizes = [16, 160], strides = [1, 1]} : vector<32x192xf32> to vector<16x160xf32>
    %157 = vector.extract_strided_slice %154 {offsets = [9, 0], sizes = [16, 160], strides = [1, 1]} : vector<32x192xf32> to vector<16x160xf32>
    %158 = tpu.concatenate %155, %156, %157 in 1 : vector<16x160xf32>, vector<16x160xf32>, vector<16x160xf32> -> vector<16x480xf32>
    %c8_99 = arith.constant 8 : index
    %c0_100 = arith.constant 0 : index
    %c0_101 = arith.constant 0 : index
    %159 = vector.load %arg2[%c8_99, %c0_100, %c0_101] : memref<15x576x64xf32, #tpu.memory_space<vmem>>, vector<1x480x64xf32>
    %160 = vector.shape_cast %159 : vector<1x480x64xf32> to vector<480x64xf32>
    %cst_102 = arith.constant dense<0.000000e+00> : vector<16x64xf32>
    %161 = tpu.matmul %158, %160, %cst_102 {dimension_numbers = #tpu.dot_dimension_numbers<[1], [0], [0], [1], [0, 0, 1, 1], [], []>} : vector<16x480xf32>, vector<480x64xf32>, vector<16x64xf32> -> vector<16x64xf32>
    %c8_103 = arith.constant 8 : index
    %c0_104 = arith.constant 0 : index
    %c0_105 = arith.constant 0 : index
    %162 = vector.load %arg3[%c8_103, %c0_104, %c0_105] : memref<15x1x64xf32, #tpu.memory_space<vmem>>, vector<1x1x64xf32>
    %163 = vector.shape_cast %162 : vector<1x1x64xf32> to vector<1x64xf32>
    %164 = vector.broadcast %163 : vector<1x64xf32> to vector<16x64xf32>
    %165 = arith.addf %161, %164 : vector<16x64xf32>
    %cst_106 = arith.constant 0.000000e+00 : f32
    %166 = vector.broadcast %cst_106 : f32 to vector<16x64xf32>
    %167 = arith.cmpf oge, %165, %166 : vector<16x64xf32>
    %cst_107 = arith.constant 2.000000e-01 : f32
    %168 = vector.broadcast %cst_107 : f32 to vector<16x64xf32>
    %169 = arith.mulf %168, %165 : vector<16x64xf32>
    %170 = arith.select %167, %165, %169 : vector<16x64xi1>, vector<16x64xf32>
    %171 = vector.extract_strided_slice %170 {offsets = [0, 0], sizes = [16, 32], strides = [1, 1]} : vector<16x64xf32> to vector<16x32xf32>
    %c8_108 = arith.constant 8 : index
    %c160_109 = arith.constant 160 : index
    %172 = vector.load %arg5[%c8_108, %c160_109] : memref<32x192xf32, #tpu.memory_space<vmem>>, vector<16x32xf32>
    tpu.vector_store %arg5[%c8_108, %c160_109], %171 {strides = array<i32>} : memref<32x192xf32, #tpu.memory_space<vmem>>, vector<16x32xf32>,
    %c0_110 = arith.constant 0 : index
    %c0_111 = arith.constant 0 : index
    %173 = vector.load %arg5[%c0_110, %c0_111] : memref<32x192xf32, #tpu.memory_space<vmem>>, vector<32x192xf32>
    %174 = vector.extract_strided_slice %173 {offsets = [7, 0], sizes = [16, 192], strides = [1, 1]} : vector<32x192xf32> to vector<16x192xf32>
    %175 = vector.extract_strided_slice %173 {offsets = [8, 0], sizes = [16, 192], strides = [1, 1]} : vector<32x192xf32> to vector<16x192xf32>
    %176 = vector.extract_strided_slice %173 {offsets = [9, 0], sizes = [16, 192], strides = [1, 1]} : vector<32x192xf32> to vector<16x192xf32>
    %177 = tpu.concatenate %174, %175, %176 in 1 : vector<16x192xf32>, vector<16x192xf32>, vector<16x192xf32> -> vector<16x576xf32>
    %c9 = arith.constant 9 : index
    %c0_112 = arith.constant 0 : index
    %c0_113 = arith.constant 0 : index
    %178 = vector.load %arg2[%c9, %c0_112, %c0_113] : memref<15x576x64xf32, #tpu.memory_space<vmem>>, vector<1x576x64xf32>
    %179 = vector.shape_cast %178 : vector<1x576x64xf32> to vector<576x64xf32>
    %cst_114 = arith.constant dense<0.000000e+00> : vector<16x64xf32>
    %180 = tpu.matmul %177, %179, %cst_114 {dimension_numbers = #tpu.dot_dimension_numbers<[1], [0], [0], [1], [0, 0, 1, 1], [], []>} : vector<16x576xf32>, vector<576x64xf32>, vector<16x64xf32> -> vector<16x64xf32>
    %c9_115 = arith.constant 9 : index
    %c0_116 = arith.constant 0 : index
    %c0_117 = arith.constant 0 : index
    %181 = vector.load %arg3[%c9_115, %c0_116, %c0_117] : memref<15x1x64xf32, #tpu.memory_space<vmem>>, vector<1x1x64xf32>
    %182 = vector.shape_cast %181 : vector<1x1x64xf32> to vector<1x64xf32>
    %183 = vector.broadcast %182 : vector<1x64xf32> to vector<16x64xf32>
    %184 = arith.addf %180, %183 : vector<16x64xf32>
    %cst_118 = arith.constant 2.000000e-01 : f32
    %185 = vector.broadcast %cst_118 : f32 to vector<16x64xf32>
    %186 = arith.mulf %184, %185 : vector<16x64xf32>
    %187 = arith.addf %186, %95 : vector<16x64xf32>
    %c8_119 = arith.constant 8 : index
    %c0_120 = arith.constant 0 : index
    %188 = vector.load %arg5[%c8_119, %c0_120] : memref<32x192xf32, #tpu.memory_space<vmem>>, vector<16x64xf32>
    tpu.vector_store %arg5[%c8_119, %c0_120], %187 {strides = array<i32>} : memref<32x192xf32, #tpu.memory_space<vmem>>, vector<16x64xf32>,
    %c0_121 = arith.constant 0 : index
    %c0_122 = arith.constant 0 : index
    %189 = vector.load %arg5[%c0_121, %c0_122] : memref<32x192xf32, #tpu.memory_space<vmem>>, vector<32x192xf32>
    %190 = vector.extract_strided_slice %189 {offsets = [7, 0], sizes = [16, 64], strides = [1, 1]} : vector<32x192xf32> to vector<16x64xf32>
    %191 = vector.extract_strided_slice %189 {offsets = [8, 0], sizes = [16, 64], strides = [1, 1]} : vector<32x192xf32> to vector<16x64xf32>
    %192 = vector.extract_strided_slice %189 {offsets = [9, 0], sizes = [16, 64], strides = [1, 1]} : vector<32x192xf32> to vector<16x64xf32>
    %193 = tpu.concatenate %190, %191, %192 in 1 : vector<16x64xf32>, vector<16x64xf32>, vector<16x64xf32> -> vector<16x192xf32>
    %c10 = arith.constant 10 : index
    %c0_123 = arith.constant 0 : index
    %c0_124 = arith.constant 0 : index
    %194 = vector.load %arg2[%c10, %c0_123, %c0_124] : memref<15x576x64xf32, #tpu.memory_space<vmem>>, vector<1x192x64xf32>
    %195 = vector.shape_cast %194 : vector<1x192x64xf32> to vector<192x64xf32>
    %cst_125 = arith.constant dense<0.000000e+00> : vector<16x64xf32>
    %196 = tpu.matmul %193, %195, %cst_125 {dimension_numbers = #tpu.dot_dimension_numbers<[1], [0], [0], [1], [0, 0, 1, 1], [], []>} : vector<16x192xf32>, vector<192x64xf32>, vector<16x64xf32> -> vector<16x64xf32>
    %c10_126 = arith.constant 10 : index
    %c0_127 = arith.constant 0 : index
    %c0_128 = arith.constant 0 : index
    %197 = vector.load %arg3[%c10_126, %c0_127, %c0_128] : memref<15x1x64xf32, #tpu.memory_space<vmem>>, vector<1x1x64xf32>
    %198 = vector.shape_cast %197 : vector<1x1x64xf32> to vector<1x64xf32>
    %199 = vector.broadcast %198 : vector<1x64xf32> to vector<16x64xf32>
    %200 = arith.addf %196, %199 : vector<16x64xf32>
    %cst_129 = arith.constant 0.000000e+00 : f32
    %201 = vector.broadcast %cst_129 : f32 to vector<16x64xf32>
    %202 = arith.cmpf oge, %200, %201 : vector<16x64xf32>
    %cst_130 = arith.constant 2.000000e-01 : f32
    %203 = vector.broadcast %cst_130 : f32 to vector<16x64xf32>
    %204 = arith.mulf %203, %200 : vector<16x64xf32>
    %205 = arith.select %202, %200, %204 : vector<16x64xi1>, vector<16x64xf32>
    %206 = vector.extract_strided_slice %205 {offsets = [0, 0], sizes = [16, 32], strides = [1, 1]} : vector<16x64xf32> to vector<16x32xf32>
    %c8_131 = arith.constant 8 : index
    %c64_132 = arith.constant 64 : index
    %207 = vector.load %arg5[%c8_131, %c64_132] : memref<32x192xf32, #tpu.memory_space<vmem>>, vector<16x32xf32>
    tpu.vector_store %arg5[%c8_131, %c64_132], %206 {strides = array<i32>} : memref<32x192xf32, #tpu.memory_space<vmem>>, vector<16x32xf32>,
    %c0_133 = arith.constant 0 : index
    %c0_134 = arith.constant 0 : index
    %208 = vector.load %arg5[%c0_133, %c0_134] : memref<32x192xf32, #tpu.memory_space<vmem>>, vector<32x192xf32>
    %209 = vector.extract_strided_slice %208 {offsets = [7, 0], sizes = [16, 96], strides = [1, 1]} : vector<32x192xf32> to vector<16x96xf32>
    %210 = vector.extract_strided_slice %208 {offsets = [8, 0], sizes = [16, 96], strides = [1, 1]} : vector<32x192xf32> to vector<16x96xf32>
    %211 = vector.extract_strided_slice %208 {offsets = [9, 0], sizes = [16, 96], strides = [1, 1]} : vector<32x192xf32> to vector<16x96xf32>
    %212 = tpu.concatenate %209, %210, %211 in 1 : vector<16x96xf32>, vector<16x96xf32>, vector<16x96xf32> -> vector<16x288xf32>
    %c11 = arith.constant 11 : index
    %c0_135 = arith.constant 0 : index
    %c0_136 = arith.constant 0 : index
    %213 = vector.load %arg2[%c11, %c0_135, %c0_136] : memref<15x576x64xf32, #tpu.memory_space<vmem>>, vector<1x288x64xf32>
    %214 = vector.shape_cast %213 : vector<1x288x64xf32> to vector<288x64xf32>
    %cst_137 = arith.constant dense<0.000000e+00> : vector<16x64xf32>
    %215 = tpu.matmul %212, %214, %cst_137 {dimension_numbers = #tpu.dot_dimension_numbers<[1], [0], [0], [1], [0, 0, 1, 1], [], []>} : vector<16x288xf32>, vector<288x64xf32>, vector<16x64xf32> -> vector<16x64xf32>
    %c11_138 = arith.constant 11 : index
    %c0_139 = arith.constant 0 : index
    %c0_140 = arith.constant 0 : index
    %216 = vector.load %arg3[%c11_138, %c0_139, %c0_140] : memref<15x1x64xf32, #tpu.memory_space<vmem>>, vector<1x1x64xf32>
    %217 = vector.shape_cast %216 : vector<1x1x64xf32> to vector<1x64xf32>
    %218 = vector.broadcast %217 : vector<1x64xf32> to vector<16x64xf32>
    %219 = arith.addf %215, %218 : vector<16x64xf32>
    %cst_141 = arith.constant 0.000000e+00 : f32
    %220 = vector.broadcast %cst_141 : f32 to vector<16x64xf32>
    %221 = arith.cmpf oge, %219, %220 : vector<16x64xf32>
    %cst_142 = arith.constant 2.000000e-01 : f32
    %222 = vector.broadcast %cst_142 : f32 to vector<16x64xf32>
    %223 = arith.mulf %222, %219 : vector<16x64xf32>
    %224 = arith.select %221, %219, %223 : vector<16x64xi1>, vector<16x64xf32>
    %225 = vector.extract_strided_slice %224 {offsets = [0, 0], sizes = [16, 32], strides = [1, 1]} : vector<16x64xf32> to vector<16x32xf32>
    %c8_143 = arith.constant 8 : index
    %c96_144 = arith.constant 96 : index
    %226 = vector.load %arg5[%c8_143, %c96_144] : memref<32x192xf32, #tpu.memory_space<vmem>>, vector<16x32xf32>
    tpu.vector_store %arg5[%c8_143, %c96_144], %225 {strides = array<i32>} : memref<32x192xf32, #tpu.memory_space<vmem>>, vector<16x32xf32>,
    %c0_145 = arith.constant 0 : index
    %c0_146 = arith.constant 0 : index
    %227 = vector.load %arg5[%c0_145, %c0_146] : memref<32x192xf32, #tpu.memory_space<vmem>>, vector<32x192xf32>
    %228 = vector.extract_strided_slice %227 {offsets = [7, 0], sizes = [16, 128], strides = [1, 1]} : vector<32x192xf32> to vector<16x128xf32>
    %229 = vector.extract_strided_slice %227 {offsets = [8, 0], sizes = [16, 128], strides = [1, 1]} : vector<32x192xf32> to vector<16x128xf32>
    %230 = vector.extract_strided_slice %227 {offsets = [9, 0], sizes = [16, 128], strides = [1, 1]} : vector<32x192xf32> to vector<16x128xf32>
    %231 = tpu.concatenate %228, %229, %230 in 1 : vector<16x128xf32>, vector<16x128xf32>, vector<16x128xf32> -> vector<16x384xf32>
    %c12 = arith.constant 12 : index
    %c0_147 = arith.constant 0 : index
    %c0_148 = arith.constant 0 : index
    %232 = vector.load %arg2[%c12, %c0_147, %c0_148] : memref<15x576x64xf32, #tpu.memory_space<vmem>>, vector<1x384x64xf32>
    %233 = vector.shape_cast %232 : vector<1x384x64xf32> to vector<384x64xf32>
    %cst_149 = arith.constant dense<0.000000e+00> : vector<16x64xf32>
    %234 = tpu.matmul %231, %233, %cst_149 {dimension_numbers = #tpu.dot_dimension_numbers<[1], [0], [0], [1], [0, 0, 1, 1], [], []>} : vector<16x384xf32>, vector<384x64xf32>, vector<16x64xf32> -> vector<16x64xf32>
    %c12_150 = arith.constant 12 : index
    %c0_151 = arith.constant 0 : index
    %c0_152 = arith.constant 0 : index
    %235 = vector.load %arg3[%c12_150, %c0_151, %c0_152] : memref<15x1x64xf32, #tpu.memory_space<vmem>>, vector<1x1x64xf32>
    %236 = vector.shape_cast %235 : vector<1x1x64xf32> to vector<1x64xf32>
    %237 = vector.broadcast %236 : vector<1x64xf32> to vector<16x64xf32>
    %238 = arith.addf %234, %237 : vector<16x64xf32>
    %cst_153 = arith.constant 0.000000e+00 : f32
    %239 = vector.broadcast %cst_153 : f32 to vector<16x64xf32>
    %240 = arith.cmpf oge, %238, %239 : vector<16x64xf32>
    %cst_154 = arith.constant 2.000000e-01 : f32
    %241 = vector.broadcast %cst_154 : f32 to vector<16x64xf32>
    %242 = arith.mulf %241, %238 : vector<16x64xf32>
    %243 = arith.select %240, %238, %242 : vector<16x64xi1>, vector<16x64xf32>
    %244 = vector.extract_strided_slice %243 {offsets = [0, 0], sizes = [16, 32], strides = [1, 1]} : vector<16x64xf32> to vector<16x32xf32>
    %c8_155 = arith.constant 8 : index
    %c128_156 = arith.constant 128 : index
    %245 = vector.load %arg5[%c8_155, %c128_156] : memref<32x192xf32, #tpu.memory_space<vmem>>, vector<16x32xf32>
    tpu.vector_store %arg5[%c8_155, %c128_156], %244 {strides = array<i32>} : memref<32x192xf32, #tpu.memory_space<vmem>>, vector<16x32xf32>,
    %c0_157 = arith.constant 0 : index
    %c0_158 = arith.constant 0 : index
    %246 = vector.load %arg5[%c0_157, %c0_158] : memref<32x192xf32, #tpu.memory_space<vmem>>, vector<32x192xf32>
    %247 = vector.extract_strided_slice %246 {offsets = [7, 0], sizes = [16, 160], strides = [1, 1]} : vector<32x192xf32> to vector<16x160xf32>
    %248 = vector.extract_strided_slice %246 {offsets = [8, 0], sizes = [16, 160], strides = [1, 1]} : vector<32x192xf32> to vector<16x160xf32>
    %249 = vector.extract_strided_slice %246 {offsets = [9, 0], sizes = [16, 160], strides = [1, 1]} : vector<32x192xf32> to vector<16x160xf32>
    %250 = tpu.concatenate %247, %248, %249 in 1 : vector<16x160xf32>, vector<16x160xf32>, vector<16x160xf32> -> vector<16x480xf32>
    %c13 = arith.constant 13 : index
    %c0_159 = arith.constant 0 : index
    %c0_160 = arith.constant 0 : index
    %251 = vector.load %arg2[%c13, %c0_159, %c0_160] : memref<15x576x64xf32, #tpu.memory_space<vmem>>, vector<1x480x64xf32>
    %252 = vector.shape_cast %251 : vector<1x480x64xf32> to vector<480x64xf32>
    %cst_161 = arith.constant dense<0.000000e+00> : vector<16x64xf32>
    %253 = tpu.matmul %250, %252, %cst_161 {dimension_numbers = #tpu.dot_dimension_numbers<[1], [0], [0], [1], [0, 0, 1, 1], [], []>} : vector<16x480xf32>, vector<480x64xf32>, vector<16x64xf32> -> vector<16x64xf32>
    %c13_162 = arith.constant 13 : index
    %c0_163 = arith.constant 0 : index
    %c0_164 = arith.constant 0 : index
    %254 = vector.load %arg3[%c13_162, %c0_163, %c0_164] : memref<15x1x64xf32, #tpu.memory_space<vmem>>, vector<1x1x64xf32>
    %255 = vector.shape_cast %254 : vector<1x1x64xf32> to vector<1x64xf32>
    %256 = vector.broadcast %255 : vector<1x64xf32> to vector<16x64xf32>
    %257 = arith.addf %253, %256 : vector<16x64xf32>
    %cst_165 = arith.constant 0.000000e+00 : f32
    %258 = vector.broadcast %cst_165 : f32 to vector<16x64xf32>
    %259 = arith.cmpf oge, %257, %258 : vector<16x64xf32>
    %cst_166 = arith.constant 2.000000e-01 : f32
    %260 = vector.broadcast %cst_166 : f32 to vector<16x64xf32>
    %261 = arith.mulf %260, %257 : vector<16x64xf32>
    %262 = arith.select %259, %257, %261 : vector<16x64xi1>, vector<16x64xf32>
    %263 = vector.extract_strided_slice %262 {offsets = [0, 0], sizes = [16, 32], strides = [1, 1]} : vector<16x64xf32> to vector<16x32xf32>
    %c8_167 = arith.constant 8 : index
    %c160_168 = arith.constant 160 : index
    %264 = vector.load %arg5[%c8_167, %c160_168] : memref<32x192xf32, #tpu.memory_space<vmem>>, vector<16x32xf32>
    tpu.vector_store %arg5[%c8_167, %c160_168], %263 {strides = array<i32>} : memref<32x192xf32, #tpu.memory_space<vmem>>, vector<16x32xf32>,
    %c0_169 = arith.constant 0 : index
    %c0_170 = arith.constant 0 : index
    %265 = vector.load %arg5[%c0_169, %c0_170] : memref<32x192xf32, #tpu.memory_space<vmem>>, vector<32x192xf32>
    %266 = vector.extract_strided_slice %265 {offsets = [7, 0], sizes = [16, 192], strides = [1, 1]} : vector<32x192xf32> to vector<16x192xf32>
    %267 = vector.extract_strided_slice %265 {offsets = [8, 0], sizes = [16, 192], strides = [1, 1]} : vector<32x192xf32> to vector<16x192xf32>
    %268 = vector.extract_strided_slice %265 {offsets = [9, 0], sizes = [16, 192], strides = [1, 1]} : vector<32x192xf32> to vector<16x192xf32>
    %269 = tpu.concatenate %266, %267, %268 in 1 : vector<16x192xf32>, vector<16x192xf32>, vector<16x192xf32> -> vector<16x576xf32>
    %c14 = arith.constant 14 : index
    %c0_171 = arith.constant 0 : index
    %c0_172 = arith.constant 0 : index
    %270 = vector.load %arg2[%c14, %c0_171, %c0_172] : memref<15x576x64xf32, #tpu.memory_space<vmem>>, vector<1x576x64xf32>
    %271 = vector.shape_cast %270 : vector<1x576x64xf32> to vector<576x64xf32>
    %cst_173 = arith.constant dense<0.000000e+00> : vector<16x64xf32>
    %272 = tpu.matmul %269, %271, %cst_173 {dimension_numbers = #tpu.dot_dimension_numbers<[1], [0], [0], [1], [0, 0, 1, 1], [], []>} : vector<16x576xf32>, vector<576x64xf32>, vector<16x64xf32> -> vector<16x64xf32>
    %c14_174 = arith.constant 14 : index
    %c0_175 = arith.constant 0 : index
    %c0_176 = arith.constant 0 : index
    %273 = vector.load %arg3[%c14_174, %c0_175, %c0_176] : memref<15x1x64xf32, #tpu.memory_space<vmem>>, vector<1x1x64xf32>
    %274 = vector.shape_cast %273 : vector<1x1x64xf32> to vector<1x64xf32>
    %275 = vector.broadcast %274 : vector<1x64xf32> to vector<16x64xf32>
    %276 = arith.addf %272, %275 : vector<16x64xf32>
    %cst_177 = arith.constant 2.000000e-01 : f32
    %277 = vector.broadcast %cst_177 : f32 to vector<16x64xf32>
    %278 = arith.mulf %276, %277 : vector<16x64xf32>
    %279 = arith.addf %278, %187 : vector<16x64xf32>
    %cst_178 = arith.constant 2.000000e-01 : f32
    %280 = vector.broadcast %cst_178 : f32 to vector<16x64xf32>
    %281 = arith.mulf %279, %280 : vector<16x64xf32>
    %282 = arith.addf %281, %3 : vector<16x64xf32>
    %c0_179 = arith.constant 0 : index
    %c0_180 = arith.constant 0 : index
    %c0_181 = arith.constant 0 : index
    %283 = vector.load %arg4[%c0_179, %c0_180, %c0_181] : memref<1x16x64xf32, #tpu.memory_space<vmem>>, vector<1x16x64xf32>
    %284 = vector.shape_cast %283 : vector<1x16x64xf32> to vector<16x64xf32>
    %285 = vector.shape_cast %282 : vector<16x64xf32> to vector<1x16x64xf32>
    tpu.vector_store %arg4[%c0_179, %c0_180, %c0_181], %285 {strides = array<i32>} : memref<1x16x64xf32, #tpu.memory_space<vmem>>, vector<1x16x64xf32>,
    return
  }
  func.func @transform_0(%arg0: i32) -> (i32, i32, i32) {
    %c0_i32 = arith.constant 0 : i32
    %c0_i32_0 = arith.constant 0 : i32
    %c0_i32_1 = arith.constant 0 : i32
    return %arg0, %c0_i32, %c0_i32_0 : i32, i32, i32
  }
  func.func @transform_1(%arg0: i32) -> (i32, i32, i32) {
    %c0_i32 = arith.constant 0 : i32
    %c0_i32_0 = arith.constant 0 : i32
    %c0_i32_1 = arith.constant 0 : i32
    %c0_i32_2 = arith.constant 0 : i32
    return %c0_i32, %c0_i32_0, %c0_i32_1 : i32, i32, i32
  }
  func.func @transform_2(%arg0: i32) -> (i32, i32, i32) {
    %c0_i32 = arith.constant 0 : i32
    %c0_i32_0 = arith.constant 0 : i32
    %c0_i32_1 = arith.constant 0 : i32
    %c0_i32_2 = arith.constant 0 : i32
    return %c0_i32, %c0_i32_0, %c0_i32_1 : i32, i32, i32
  }
  func.func @transform_3(%arg0: i32) -> (i32, i32, i32) {
    %c0_i32 = arith.constant 0 : i32
    %c0_i32_0 = arith.constant 0 : i32
    %c0_i32_1 = arith.constant 0 : i32
    return %arg0, %c0_i32, %c0_i32_0 : i32, i32, i32
  }
}

</mosaic_0001>

<llo_original>
// kernel: tpu_custom_call.1
$region0: #{tpu_custom_call.1}
  #allocation0 [shape = 'u32[]', space=smem, size = 0x4, offset = 0x4, fixed_abs, tag = 'smem constant byte address 0x4 - core index']
  #allocation1 [shape = 'u32[72,128]{1,0:T(1,128)}', space=vmem, size = 0x9000, scoped, tag = 'internal scratch']
  #allocation2 [shape = 'f32[32,192]{1,0:T(8,128)}', space=vmem, size = 0x8000, scoped, tag = 'scratch operand']
  %s0 = inlined_call_operand.vmem [shape: f32[2,16,64], index: 0, kind: input, shape index: {}]
  %s1 = inlined_call_operand.vmem [shape: f32[15,576,64], index: 1, kind: input, shape index: {}]
  %s2 = inlined_call_operand.vmem [shape: f32[15,1,64], index: 2, kind: input, shape index: {}]
  %s3 = inlined_call_operand.hbm [shape: f32[2,16,64], index: 3, kind: output, shape index: {}]
  %s4 = sld [smem:[#allocation0]]
  $region45: #{tpu_custom_call.1} parent=0
    _
  %s6 = ssub.s32 1, %s4
  %s7 = scalar_select 0, %s6, %s4
  $region1: #{tpu_custom_call.1} parent=0
    #allocation3 [shape = 'u8[16384]{0}', space=vmem, size = 0x4000, scoped, tag = 'output window, operand 0']
    #allocation4 [shape = 's32[2]{0}', space=sflag, size = 0x8, scoped, tag = 'scoped memory for tpu_custom_call.1']
    %8 = vsyncpa [#allocation4], 0
    %s9 = scalar_lea.sflag [#allocation4], 1
    %10 = vsyncpa %s9, 0
    loop: start=0, step=1, limit=4
    $region2: #{tpu_custom_call.1} parent=1 // loop_pre_header
      _
    $region3: #{tpu_custom_call.1} parent=1 // loop_header
      %s12 = sphi 0, %s16
      %p13 = scmp.ge.s32.totalorder %s12, 4
      %s22 = sphi 0, %s24
      %s25 = sphi 0, %s22
      %s26 = sphi 0, %s25
      %s42 = sphi 0, %s26
      %s46 = sphi 0, %s46
      %s48 = sphi 0, %s46
      %s49 = sphi 0, %s48
      %s63 = sphi 0, %s49
      %s67 = sphi 0, %s67
      %s69 = sphi 0, %s67
      %s70 = sphi 0, %s69
      %s84 = sphi 0, %s70
      %s90 = sphi 0, %s92
      %s93 = sphi 0, %s90
      %s94 = sphi 0, %s93
      %s110 = sphi 0, %s94
    $region4: #{tpu_custom_call.1} parent=1 // loop_header_branch
      %15 = sbr.rel (%p13) target = $region8
    $region5: #{tpu_custom_call.1} parent=1 // loop_body
      %s17 = ssub.s32 %s12, 1
      %s18 = ssub.s32 %s12, 2
      %s19 = sadd.s32 %s12, 1
      %s20 = ssub.s32 %s12, %s19
      %p21 = scmp.eq.s32.totalorder %s20, 0
      %s23 = sadd.s32 %s22, 1
      %s24 = scalar_select %p21, %s22, %s23
      %p27 = pneg %p21
      %p28 = scmp.eq.s32.totalorder %s12, 1
      %p29 = por %p27, %p28
      %p30 = scmp.ne.s32.totalorder %s22, %s25
      %p31 = scmp.eq.s32.totalorder %s12, 0
      %p32 = por %p30, %p31
      %p33 = scmp.ne.s32.totalorder %s22, %s25
      %p34 = scmp.eq.s32.totalorder %s17, 1
      %p35 = por %p33, %p34
      %p36 = scmp.ne.s32.totalorder %s25, %s26
      %p37 = scmp.eq.s32.totalorder %s17, 0
      %p38 = por %p36, %p37
      %p39 = scmp.ne.s32.totalorder %s25, %s26
      %p40 = scmp.eq.s32.totalorder %s18, 1
      %p41 = por %p39, %p40
      %p43 = scmp.ne.s32.totalorder %s26, %s42
      %p44 = scmp.eq.s32.totalorder %s18, 0
      %p45 = por %p43, %p44
      %s47 = sadd.s32 %s46, 1
      %p50 = scmp.eq.s32.totalorder %s12, 1
      %p51 = scmp.ne.s32.totalorder %s46, %s48
      %p52 = scmp.eq.s32.totalorder %s12, 0
      %p53 = por %p51, %p52
      %p54 = scmp.ne.s32.totalorder %s46, %s48
      %p55 = scmp.eq.s32.totalorder %s17, 1
      %p56 = por %p54, %p55
      %p57 = scmp.ne.s32.totalorder %s48, %s49
      %p58 = scmp.eq.s32.totalorder %s17, 0
      %p59 = por %p57, %p58
      %p60 = scmp.ne.s32.totalorder %s48, %s49
      %p61 = scmp.eq.s32.totalorder %s18, 1
      %p62 = por %p60, %p61
      %p64 = scmp.ne.s32.totalorder %s49, %s63
      %p65 = scmp.eq.s32.totalorder %s18, 0
      %p66 = por %p64, %p65
      %s68 = sadd.s32 %s67, 1
      %p71 = scmp.eq.s32.totalorder %s12, 1
      %p72 = scmp.ne.s32.totalorder %s67, %s69
      %p73 = scmp.eq.s32.totalorder %s12, 0
      %p74 = por %p72, %p73
      %p75 = scmp.ne.s32.totalorder %s67, %s69
      %p76 = scmp.eq.s32.totalorder %s17, 1
      %p77 = por %p75, %p76
      %p78 = scmp.ne.s32.totalorder %s69, %s70
      %p79 = scmp.eq.s32.totalorder %s17, 0
      %p80 = por %p78, %p79
      %p81 = scmp.ne.s32.totalorder %s69, %s70
      %p82 = scmp.eq.s32.totalorder %s18, 1
      %p83 = por %p81, %p82
      %p85 = scmp.ne.s32.totalorder %s70, %s84
      %p86 = scmp.eq.s32.totalorder %s18, 0
      %p87 = por %p85, %p86
      %s88 = ssub.s32 %s12, %s19
      %p89 = scmp.eq.s32.totalorder %s88, 0
      %s91 = sadd.s32 %s90, 1
      %s92 = scalar_select %p89, %s90, %s91
      %p95 = pneg %p89
      %p96 = scmp.eq.s32.totalorder %s12, 1
      %p97 = por %p95, %p96
      %p98 = scmp.ne.s32.totalorder %s90, %s93
      %p99 = scmp.eq.s32.totalorder %s12, 0
      %p100 = por %p98, %p99
      %p101 = scmp.ne.s32.totalorder %s90, %s93
      %p102 = scmp.eq.s32.totalorder %s17, 1
      %p103 = por %p101, %p102
      %p104 = scmp.ne.s32.totalorder %s93, %s94
      %p105 = scmp.eq.s32.totalorder %s17, 0
      %p106 = por %p104, %p105
      %p107 = scmp.ne.s32.totalorder %s93, %s94
      %p108 = scmp.eq.s32.totalorder %s18, 1
      %p109 = por %p107, %p108
      %p111 = scmp.ne.s32.totalorder %s94, %s110
      %p112 = scmp.eq.s32.totalorder %s18, 0
      %p113 = por %p111, %p112
      %p114 = scmp.le.s32.totalorder 1, %s12
      %p115 = scmp.lt.s32.totalorder %s12, 3
      %p116 = pnand %p114, %p115
      %p117 = pneg %p116
      // Predicated region
      $region9: #{tpu_custom_call.1} parent=5 // pred_check
        _
      $region10: #{tpu_custom_call.1} parent=5 // pred_check_branch
        %119 = sbr.rel (%p116) target = $region12
      $region11: #{tpu_custom_call.1} parent=5 // pred_region
        %s120 = ssub.s32 %s12, 1
        // Predicated region
        $region13: #{tpu_custom_call.1} parent=11 // pred_check
          %p121 = pneg %p59
        $region14: #{tpu_custom_call.1} parent=11 // pred_check_branch
          %123 = sbr.rel (%p121) target = $region16
        $region15: #{tpu_custom_call.1} parent=11 // pred_region
          _
        $region16: #{tpu_custom_call.1} parent=11 // pred_fallthru
          _
        // Predicated region
        $region17: #{tpu_custom_call.1} parent=11 // pred_check
          %p124 = pneg %p80
        $region18: #{tpu_custom_call.1} parent=11 // pred_check_branch
          %126 = sbr.rel (%p124) target = $region20
        $region19: #{tpu_custom_call.1} parent=11 // pred_region
          _
        $region20: #{tpu_custom_call.1} parent=11 // pred_fallthru
          _
      $region12: #{tpu_custom_call.1} parent=5 // pred_fallthru
        _
      %p127 = scmp.lt.s32.totalorder %s12, 2
      // Predicated region
      $region21: #{tpu_custom_call.1} parent=5 // pred_check
        %p128 = pneg %p127
      $region22: #{tpu_custom_call.1} parent=5 // pred_check_branch
        %130 = sbr.rel (%p128) target = $region24
      $region23: #{tpu_custom_call.1} parent=5 // pred_region
        // Predicated region
        $region25: #{tpu_custom_call.1} parent=23 // pred_check
          %p131 = pneg %p32
        $region26: #{tpu_custom_call.1} parent=23 // pred_check_branch
          %133 = sbr.rel (%p131) target = $region28
        $region27: #{tpu_custom_call.1} parent=23 // pred_region
          %p134 = scmp.lt.s32.totalorder %s12, 1
          %s135 = scalar_select %p134, %s12, 1
          %s136 = smul.addr %s135, 2
          %s137 = smul.addr %s136, 8
          %s138 = scalar_lea.vmem %s0, %s137
        $region28: #{tpu_custom_call.1} parent=23 // pred_fallthru
          _
      $region24: #{tpu_custom_call.1} parent=5 // pred_fallthru
        _
      %p139 = scmp.le.s32.totalorder 1, %s12
      %p140 = scmp.lt.s32.totalorder %s12, 3
      %p141 = pnand %p139, %p140
      %p142 = pneg %p141
      // Predicated region
      $region29: #{tpu_custom_call.1} parent=5 // pred_check
        _
      $region30: #{tpu_custom_call.1} parent=5 // pred_check_branch
        %144 = sbr.rel (%p141) target = $region32
      $region31: #{tpu_custom_call.1} parent=5 // pred_region
        %s145 = ssub.s32 %s12, 1
        %p146 = scmp.lt.s32.totalorder %s17, 1
        %s147 = scalar_select %p146, %s17, 1
        %s148 = smul.addr %s147, 2
        %s149 = smul.addr %s148, 8
        %s150 = scalar_lea.vmem %s0, %s149
        %p151 = pneg %p38
        %p152 = pneg %p35
        %p153 = pneg %p59
        %p154 = pneg %p56
        %p155 = pneg %p80
        %p156 = pneg %p77
        %p157 = pneg %p106
        %p158 = pneg %p103
        %s159 = sand.u32 %s93, 1
        %s160 = scalar_lea.sflag [#allocation4], %s159
        %s161 = sand.u32 %s93, 1
        %s162 = smul.addr %s161, 16
        %s163 = scalar_lea.vmem [#allocation3], %s162
        %p164 = scmp.lt.s32.totalorder %s17, 1
        %s165 = scalar_select %p164, %s17, 1
        %s166 = smul.addr %s165, 2
        %s167 = smul.addr %s166, 8
        %s168 = scalar_lea.vmem %s0, %s167
        %169 = vst [vmem:[#allocation2] sm:$0xff] 0.0
        %vm170 = vcmask 523264
        %171 = vst.msk [vmem:[#allocation2 + $0x8] sm:$0xff] %vm170, 0.0
        %172 = vst [vmem:[#allocation2 + $0x10] sm:$0xff] 0.0
        %173 = vst.msk [vmem:[#allocation2 + $0x18] sm:$0xff] %vm170, 0.0
        %174 = vst [vmem:[#allocation2 + $0x20] sm:$0xff] 0.0
        %175 = vst.msk [vmem:[#allocation2 + $0x28] sm:$0xff] %vm170, 0.0
        %176 = vst [vmem:[#allocation2 + $0x30] sm:$0xff] 0.0
        %177 = vst.msk [vmem:[#allocation2 + $0x38] sm:$0xff] %vm170, 0.0
        %v178 = vld [vmem:[%s168] sm:$0xff]
        %v179 = vld [vmem:[%s168 + $0x8] sm:$0xff]
        %180 = vst.msk [vmem:[#allocation2 + $0x10] sm:$0xff] %vm170, %v178
        %181 = vst.msk [vmem:[#allocation2 + $0x20] sm:$0xff] %vm170, %v179
        %v182 = vld [vmem:[#allocation2] sm:$0xff]
        %v183 = vld [vmem:[#allocation2 + $0x10] sm:$0xff]
        %v184 = vld [vmem:[#allocation2 + $0x20] sm:$0xff]
        %v185 = vld [vmem:[#allocation2 + $0x30] sm:$0xff]
        %vm188 = vcmask 1046528
        %v189 = vrot.slane %v183, 1
        %v190 = vrot.slane %v184, 1
        %v191 = vsel %vm188, %v189, %v190
        %192 = vrot.lane.b32.xlu0 %v189, 64
        %v193 = vpop.permute.xlu0 %192
        %194 = vrot.lane.b32.xlu0 %v191, 64
        %v195 = vpop.permute.xlu0 %194
        %196 = vrot.lane.b32.xlu0 %v190, 64
        %v197 = vpop.permute.xlu0 %196
        %vm202 = vcmask 1045504
        %v203 = vrot.slane %v183, 2
        %v204 = vrot.slane %v184, 2
        %v205 = vsel %vm202, %v203, %v204
        %v206 = vrot.slane %v185, 2
        %v207 = vsel %vm202, %v204, %v206
        %v208 = vsel %vm170, %v182, %v193
        %v209 = vsel %vm170, %v183, %v195
        %v210 = vsel %vm170, %v184, %v197
        %v211 = vld [vmem:[%s1] sm:$0xff]
        %v212 = vld [vmem:[%s1 + $0x8] sm:$0xff]
        %v213 = vld [vmem:[%s1 + $0x10] sm:$0xff]
        %v214 = vld [vmem:[%s1 + $0x18] sm:$0xff]
        %v215 = vld [vmem:[%s1 + $0x20] sm:$0xff]
        %v216 = vld [vmem:[%s1 + $0x28] sm:$0xff]
        %v217 = vld [vmem:[%s1 + $0x30] sm:$0xff]
        %v218 = vld [vmem:[%s1 + $0x38] sm:$0xff]
        %v219 = vld [vmem:[%s1 + $0x40] sm:$0xff]
        %v220 = vld [vmem:[%s1 + $0x48] sm:$0xff]
        %v221 = vld [vmem:[%s1 + $0x50] sm:$0xff]
        %v222 = vld [vmem:[%s1 + $0x58] sm:$0xff]
        %v223 = vld [vmem:[%s1 + $0x60] sm:$0xff]
        %v224 = vld [vmem:[%s1 + $0x68] sm:$0xff]
        %v225 = vld [vmem:[%s1 + $0x70] sm:$0xff]
        %v226 = vld [vmem:[%s1 + $0x78] sm:$0xff]
        %v227 = vld [vmem:[%s1 + $0x80] sm:$0xff]
        %v228 = vld [vmem:[%s1 + $0x88] sm:$0xff]
        %v229 = vld [vmem:[%s1 + $0x90] sm:$0xff]
        %v230 = vld [vmem:[%s1 + $0x98] sm:$0xff]
        %v231 = vld [vmem:[%s1 + $0xa0] sm:$0xff]
        %v232 = vld [vmem:[%s1 + $0xa8] sm:$0xff]
        %v233 = vld [vmem:[%s1 + $0xb0] sm:$0xff]
        %v234 = vld [vmem:[%s1 + $0xb8] sm:$0xff]
        %v235 = vld [vmem:[%s2] sm:$0x1]
        %v237 = vperm.slane %v235, 0
        %vm242 = vcmask 1040384
        %v243 = vrot.slane %v208, 7
        %v244 = vrot.slane %v209, 7
        %v245 = vsel %vm242, %v243, %v244
        %v246 = vrot.slane %v203, 7
        %v247 = vrot.slane %v205, 7
        %v248 = vsel %vm242, %v246, %v247
        %v249 = vrot.slane %v210, 7
        %v250 = vsel %vm242, %v244, %v249
        %v251 = vrot.slane %v207, 7
        %v252 = vsel %vm242, %v247, %v251
        %v255 = vsel %vm170, %v248, 0
        %v257 = vsel %vm170, %v252, 0
        %259 = vmatpush.msra.mxu0 %v226
        %260 = vmatpush.msra.mxu0 %v225
        %261 = vmatpush.msra.mxu0 %v224
        %262 = vmatpush.msra.mxu0 %v223
        %263 = vmatpush.msra.mxu0 %v222
        %264 = vmatpush.msra.mxu0 %v221
        %265 = vmatpush.msra.mxu0 %v220
        %266 = vmatpush.msra.mxu0 %v219
        %267 = vmatpush.msra.mxu0 %v218
        %268 = vmatpush.msra.mxu0 %v217
        %269 = vmatpush.msra.mxu0 %v216
        %270 = vmatpush.msra.mxu0 %v215
        %271 = vmatpush.msra.mxu0 %v214
        %272 = vmatpush.msra.mxu0 %v213
        %273 = vmatpush.msra.mxu0 %v212
        %274 = vmatpush.msra.mxu0 %v211
        %275 = vmatmul.f32.gmra.mxu0 %v245
        %v276 = vpop.f32.mrf.mxu0
        %v277 = vadd.f32 %v237, %v276
        %278 = vmatmul.f32.gmra.mxu0 %v250
        %v279 = vpop.f32.mrf.mxu0
        %v280 = vadd.f32 %v237, %v279
        %281 = vdwg.mxu0
        %282 = vmatpush.msra.mxu0 0.0
        %283 = vmatpush.msra.mxu0 0.0
        %284 = vmatpush.msra.mxu0 0.0
        %285 = vmatpush.msra.mxu0 0.0
        %286 = vmatpush.msra.mxu0 0.0
        %287 = vmatpush.msra.mxu0 0.0
        %288 = vmatpush.msra.mxu0 0.0
        %289 = vmatpush.msra.mxu0 0.0
        %290 = vmatpush.msra.mxu0 %v234
        %291 = vmatpush.msra.mxu0 %v233
        %292 = vmatpush.msra.mxu0 %v232
        %293 = vmatpush.msra.mxu0 %v231
        %294 = vmatpush.msra.mxu0 %v230
        %295 = vmatpush.msra.mxu0 %v229
        %296 = vmatpush.msra.mxu0 %v228
        %297 = vmatpush.msra.mxu0 %v227
        %298 = vmatmul.f32.gmra.mxu0 %v255
        %v299 = vpop.f32.mrf.mxu0
        %v300 = vadd.f32 %v277, %v299
        %301 = vmatmul.f32.gmra.mxu0 %v257
        %v302 = vpop.f32.mrf.mxu0
        %v303 = vadd.f32 %v280, %v302
        %304 = vdwg.mxu0
        %vm305 = vcmp.ge.f32.partialorder %v300, 0.0
        %vm306 = vcmp.ge.f32.partialorder %v303, 0.0
        %v307 = vmul.f32 %v300, 0.2
        %v308 = vmul.f32 %v303, 0.2
        %v309 = vsel %vm305, %v300, %v307
        %v310 = vsel %vm306, %v303, %v308
        %313 = vrot.lane.b32.xlu0 %v309, 64
        %v314 = vpop.permute.xlu0 %313
        %315 = vrot.lane.b32.xlu0 %v310, 64
        %v316 = vpop.permute.xlu0 %315
        %vm319 = vcmask 785920
        %320 = vst.msk [vmem:[#allocation2 + $0x10] sm:$0xff] %vm319, %v314
        %321 = vst.msk [vmem:[#allocation2 + $0x20] sm:$0xff] %vm319, %v316
        %v322 = vld [vmem:[#allocation2] sm:$0xff]
        %v323 = vld [vmem:[#allocation2 + $0x10] sm:$0xff]
        %v324 = vld [vmem:[#allocation2 + $0x20] sm:$0xff]
        %v325 = vld [vmem:[#allocation2 + $0x30] sm:$0xff]
        %v328 = vrot.slane %v323, 1
        %v329 = vrot.slane %v324, 1
        %v330 = vsel %vm188, %v328, %v329
        %331 = vrot.lane.b32.xlu0 %v328, 96
        %v332 = vpop.permute.xlu0 %331
        %333 = vrot.lane.b32.xlu0 %v330, 96
        %v334 = vpop.permute.xlu0 %333
        %335 = vrot.lane.b32.xlu0 %v329, 96
        %v336 = vpop.permute.xlu0 %335
        %v341 = vrot.slane %v323, 2
        %v342 = vrot.slane %v324, 2
        %v343 = vsel %vm202, %v341, %v342
        %v344 = vrot.slane %v325, 2
        %v345 = vsel %vm202, %v342, %v344
        %346 = vrot.lane.b32.xlu0 %v341, 64
        %v347 = vpop.permute.xlu0 %346
        %348 = vrot.lane.b32.xlu0 %v343, 64
        %v349 = vpop.permute.xlu0 %348
        %350 = vrot.lane.b32.xlu0 %v345, 64
        %v351 = vpop.permute.xlu0 %350
        %vm355 = vcmask 785408
        %v356 = vsel %vm355, %v322, %v332
        %v357 = vsel %vm355, %v323, %v334
        %v358 = vsel %vm355, %v324, %v336
        %v359 = vsel %vm170, %v332, %v347
        %v360 = vsel %vm170, %v334, %v349
        %v361 = vsel %vm170, %v336, %v351
        %s362 = scalar_lea.vmem %s1, 576
        %v363 = vld [vmem:[%s362] sm:$0xff]
        %v364 = vld [vmem:[%s362 + $0x8] sm:$0xff]
        %v365 = vld [vmem:[%s362 + $0x10] sm:$0xff]
        %v366 = vld [vmem:[%s362 + $0x18] sm:$0xff]
        %v367 = vld [vmem:[%s362 + $0x20] sm:$0xff]
        %v368 = vld [vmem:[%s362 + $0x28] sm:$0xff]
        %v369 = vld [vmem:[%s362 + $0x30] sm:$0xff]
        %v370 = vld [vmem:[%s362 + $0x38] sm:$0xff]
        %v371 = vld [vmem:[%s362 + $0x40] sm:$0xff]
        %v372 = vld [vmem:[%s362 + $0x48] sm:$0xff]
        %v373 = vld [vmem:[%s362 + $0x50] sm:$0xff]
        %v374 = vld [vmem:[%s362 + $0x58] sm:$0xff]
        %v375 = vld [vmem:[%s362 + $0x60] sm:$0xff]
        %v376 = vld [vmem:[%s362 + $0x68] sm:$0xff]
        %v377 = vld [vmem:[%s362 + $0x70] sm:$0xff]
        %v378 = vld [vmem:[%s362 + $0x78] sm:$0xff]
        %v379 = vld [vmem:[%s362 + $0x80] sm:$0xff]
        %v380 = vld [vmem:[%s362 + $0x88] sm:$0xff]
        %v381 = vld [vmem:[%s362 + $0x90] sm:$0xff]
        %v382 = vld [vmem:[%s362 + $0x98] sm:$0xff]
        %v383 = vld [vmem:[%s362 + $0xa0] sm:$0xff]
        %v384 = vld [vmem:[%s362 + $0xa8] sm:$0xff]
        %v385 = vld [vmem:[%s362 + $0xb0] sm:$0xff]
        %v386 = vld [vmem:[%s362 + $0xb8] sm:$0xff]
        %v387 = vld [vmem:[%s362 + $0xc0] sm:$0xff]
        %v388 = vld [vmem:[%s362 + $0xc8] sm:$0xff]
        %v389 = vld [vmem:[%s362 + $0xd0] sm:$0xff]
        %v390 = vld [vmem:[%s362 + $0xd8] sm:$0xff]
        %v391 = vld [vmem:[%s362 + $0xe0] sm:$0xff]
        %v392 = vld [vmem:[%s362 + $0xe8] sm:$0xff]
        %v393 = vld [vmem:[%s362 + $0xf0] sm:$0xff]
        %v394 = vld [vmem:[%s362 + $0xf8] sm:$0xff]
        %v395 = vld [vmem:[%s362 + $0x100] sm:$0xff]
        %v396 = vld [vmem:[%s362 + $0x108] sm:$0xff]
        %v397 = vld [vmem:[%s362 + $0x110] sm:$0xff]
        %v398 = vld [vmem:[%s362 + $0x118] sm:$0xff]
        %s399 = scalar_lea.vmem %s2, 1
        %v400 = vld [vmem:[%s399] sm:$0x1]
        %v402 = vperm.slane %v400, 0
        %v410 = vrot.slane %v356, 7
        %v411 = vrot.slane %v357, 7
        %v412 = vsel %vm242, %v410, %v411
        %v413 = vrot.slane %v359, 7
        %v414 = vrot.slane %v360, 7
        %v415 = vsel %vm242, %v413, %v414
        %v416 = vrot.slane %v347, 7
        %v417 = vrot.slane %v349, 7
        %v418 = vsel %vm242, %v416, %v417
        %v419 = vrot.slane %v358, 7
        %v420 = vsel %vm242, %v411, %v419
        %v421 = vrot.slane %v361, 7
        %v422 = vsel %vm242, %v414, %v421
        %v423 = vrot.slane %v351, 7
        %v424 = vsel %vm242, %v417, %v423
        %vm429 = vcmask 261120
        %v430 = vsel %vm429, %v418, 0
        %v432 = vsel %vm429, %v424, 0
        %434 = vmatpush.msra.mxu0 %v378
        %435 = vmatpush.msra.mxu0 %v377
        %436 = vmatpush.msra.mxu0 %v376
        %437 = vmatpush.msra.mxu0 %v375
        %438 = vmatpush.msra.mxu0 %v374
        %439 = vmatpush.msra.mxu0 %v373
        %440 = vmatpush.msra.mxu0 %v372
        %441 = vmatpush.msra.mxu0 %v371
        %442 = vmatpush.msra.mxu0 %v370
        %443 = vmatpush.msra.mxu0 %v369
        %444 = vmatpush.msra.mxu0 %v368
        %445 = vmatpush.msra.mxu0 %v367
        %446 = vmatpush.msra.mxu0 %v366
        %447 = vmatpush.msra.mxu0 %v365
        %448 = vmatpush.msra.mxu0 %v364
        %449 = vmatpush.msra.mxu0 %v363
        %450 = vmatmul.f32.gmra.mxu0 %v412
        %v451 = vpop.f32.mrf.mxu0
        %v452 = vadd.f32 %v402, %v451
        %453 = vmatmul.f32.gmra.mxu0 %v420
        %v454 = vpop.f32.mrf.mxu0
        %v455 = vadd.f32 %v402, %v454
        %456 = vdwg.mxu0
        %457 = vmatpush.msra.mxu0 %v394
        %458 = vmatpush.msra.mxu0 %v393
        %459 = vmatpush.msra.mxu0 %v392
        %460 = vmatpush.msra.mxu0 %v391
        %461 = vmatpush.msra.mxu0 %v390
        %462 = vmatpush.msra.mxu0 %v389
        %463 = vmatpush.msra.mxu0 %v388
        %464 = vmatpush.msra.mxu0 %v387
        %465 = vmatpush.msra.mxu0 %v386
        %466 = vmatpush.msra.mxu0 %v385
        %467 = vmatpush.msra.mxu0 %v384
        %468 = vmatpush.msra.mxu0 %v383
        %469 = vmatpush.msra.mxu0 %v382
        %470 = vmatpush.msra.mxu0 %v381
        %471 = vmatpush.msra.mxu0 %v380
        %472 = vmatpush.msra.mxu0 %v379
        %473 = vmatmul.f32.gmra.mxu0 %v415
        %v474 = vpop.f32.mrf.mxu0
        %v475 = vadd.f32 %v452, %v474
        %476 = vmatmul.f32.gmra.mxu0 %v422
        %v477 = vpop.f32.mrf.mxu0
        %v478 = vadd.f32 %v455, %v477
        %479 = vdwg.mxu0
        %480 = vmatpush.msra.mxu0 0.0
        %481 = vmatpush.msra.mxu0 0.0
        %482 = vmatpush.msra.mxu0 0.0
        %483 = vmatpush.msra.mxu0 0.0
        %484 = vmatpush.msra.mxu0 0.0
        %485 = vmatpush.msra.mxu0 0.0
        %486 = vmatpush.msra.mxu0 0.0
        %487 = vmatpush.msra.mxu0 0.0
        %488 = vmatpush.msra.mxu0 0.0
        %489 = vmatpush.msra.mxu0 0.0
        %490 = vmatpush.msra.mxu0 0.0
        %491 = vmatpush.msra.mxu0 0.0
        %492 = vmatpush.msra.mxu0 %v398
        %493 = vmatpush.msra.mxu0 %v397
        %494 = vmatpush.msra.mxu0 %v396
        %495 = vmatpush.msra.mxu0 %v395
        %496 = vmatmul.f32.gmra.mxu0 %v430
        %v497 = vpop.f32.mrf.mxu0
        %v498 = vadd.f32 %v475, %v497
        %499 = vmatmul.f32.gmra.mxu0 %v432
        %v500 = vpop.f32.mrf.mxu0
        %v501 = vadd.f32 %v478, %v500
        %502 = vdwg.mxu0
        %vm503 = vcmp.ge.f32.partialorder %v498, 0.0
        %vm504 = vcmp.ge.f32.partialorder %v501, 0.0
        %v505 = vmul.f32 %v498, 0.2
        %v506 = vmul.f32 %v501, 0.2
        %v507 = vsel %vm503, %v498, %v505
        %v508 = vsel %vm504, %v501, %v506
        %511 = vrot.lane.b32.xlu0 %v507, 96
        %v512 = vpop.permute.xlu0 %511
        %513 = vrot.lane.b32.xlu0 %v508, 96
        %v514 = vpop.permute.xlu0 %513
        %vm517 = vcmask 1048320
        %518 = vst.msk [vmem:[#allocation2 + $0x10] sm:$0xff] %vm517, %v512
        %519 = vst.msk [vmem:[#allocation2 + $0x20] sm:$0xff] %vm517, %v514
        %v520 = vld [vmem:[#allocation2] sm:$0xff]
        %v521 = vld [vmem:[#allocation2 + $0x10] sm:$0xff]
        %v522 = vld [vmem:[#allocation2 + $0x20] sm:$0xff]
        %v523 = vld [vmem:[#allocation2 + $0x30] sm:$0xff]
        %v526 = vrot.slane %v521, 1
        %v527 = vrot.slane %v522, 1
        %v528 = vsel %vm188, %v526, %v527
        %v530 = vrot.slane %v521, 2
        %v531 = vrot.slane %v522, 2
        %v532 = vsel %vm202, %v530, %v531
        %v533 = vrot.slane %v523, 2
        %v534 = vsel %vm202, %v531, %v533
        %s535 = scalar_lea.vmem %s1, 1152
        %v536 = vld [vmem:[%s535] sm:$0xff]
        %v537 = vld [vmem:[%s535 + $0x8] sm:$0xff]
        %v538 = vld [vmem:[%s535 + $0x10] sm:$0xff]
        %v539 = vld [vmem:[%s535 + $0x18] sm:$0xff]
        %v540 = vld [vmem:[%s535 + $0x20] sm:$0xff]
        %v541 = vld [vmem:[%s535 + $0x28] sm:$0xff]
        %v542 = vld [vmem:[%s535 + $0x30] sm:$0xff]
        %v543 = vld [vmem:[%s535 + $0x38] sm:$0xff]
        %v544 = vld [vmem:[%s535 + $0x40] sm:$0xff]
        %v545 = vld [vmem:[%s535 + $0x48] sm:$0xff]
        %v546 = vld [vmem:[%s535 + $0x50] sm:$0xff]
        %v547 = vld [vmem:[%s535 + $0x58] sm:$0xff]
        %v548 = vld [vmem:[%s535 + $0x60] sm:$0xff]
        %v549 = vld [vmem:[%s535 + $0x68] sm:$0xff]
        %v550 = vld [vmem:[%s535 + $0x70] sm:$0xff]
        %v551 = vld [vmem:[%s535 + $0x78] sm:$0xff]
        %v552 = vld [vmem:[%s535 + $0x80] sm:$0xff]
        %v553 = vld [vmem:[%s535 + $0x88] sm:$0xff]
        %v554 = vld [vmem:[%s535 + $0x90] sm:$0xff]
        %v555 = vld [vmem:[%s535 + $0x98] sm:$0xff]
        %v556 = vld [vmem:[%s535 + $0xa0] sm:$0xff]
        %v557 = vld [vmem:[%s535 + $0xa8] sm:$0xff]
        %v558 = vld [vmem:[%s535 + $0xb0] sm:$0xff]
        %v559 = vld [vmem:[%s535 + $0xb8] sm:$0xff]
        %v560 = vld [vmem:[%s535 + $0xc0] sm:$0xff]
        %v561 = vld [vmem:[%s535 + $0xc8] sm:$0xff]
        %v562 = vld [vmem:[%s535 + $0xd0] sm:$0xff]
        %v563 = vld [vmem:[%s535 + $0xd8] sm:$0xff]
        %v564 = vld [vmem:[%s535 + $0xe0] sm:$0xff]
        %v565 = vld [vmem:[%s535 + $0xe8] sm:$0xff]
        %v566 = vld [vmem:[%s535 + $0xf0] sm:$0xff]
        %v567 = vld [vmem:[%s535 + $0xf8] sm:$0xff]
        %v568 = vld [vmem:[%s535 + $0x100] sm:$0xff]
        %v569 = vld [vmem:[%s535 + $0x108] sm:$0xff]
        %v570 = vld [vmem:[%s535 + $0x110] sm:$0xff]
        %v571 = vld [vmem:[%s535 + $0x118] sm:$0xff]
        %v572 = vld [vmem:[%s535 + $0x120] sm:$0xff]
        %v573 = vld [vmem:[%s535 + $0x128] sm:$0xff]
        %v574 = vld [vmem:[%s535 + $0x130] sm:$0xff]
        %v575 = vld [vmem:[%s535 + $0x138] sm:$0xff]
        %v576 = vld [vmem:[%s535 + $0x140] sm:$0xff]
        %v577 = vld [vmem:[%s535 + $0x148] sm:$0xff]
        %v578 = vld [vmem:[%s535 + $0x150] sm:$0xff]
        %v579 = vld [vmem:[%s535 + $0x158] sm:$0xff]
        %v580 = vld [vmem:[%s535 + $0x160] sm:$0xff]
        %v581 = vld [vmem:[%s535 + $0x168] sm:$0xff]
        %v582 = vld [vmem:[%s535 + $0x170] sm:$0xff]
        %v583 = vld [vmem:[%s535 + $0x178] sm:$0xff]
        %s584 = scalar_lea.vmem %s2, 2
        %v585 = vld [vmem:[%s584] sm:$0x1]
        %v587 = vperm.slane %v585, 0
        %v590 = vrot.slane %v520, 7
        %v591 = vrot.slane %v521, 7
        %v592 = vsel %vm242, %v590, %v591
        %v593 = vrot.slane %v526, 7
        %v594 = vrot.slane %v528, 7
        %v595 = vsel %vm242, %v593, %v594
        %v596 = vrot.slane %v530, 7
        %v597 = vrot.slane %v532, 7
        %v598 = vsel %vm242, %v596, %v597
        %v599 = vrot.slane %v522, 7
        %v600 = vsel %vm242, %v591, %v599
        %v601 = vrot.slane %v527, 7
        %v602 = vsel %vm242, %v594, %v601
        %v603 = vrot.slane %v534, 7
        %v604 = vsel %vm242, %v597, %v603
        %611 = vmatpush.msra.mxu0 %v551
        %612 = vmatpush.msra.mxu0 %v550
        %613 = vmatpush.msra.mxu0 %v549
        %614 = vmatpush.msra.mxu0 %v548
        %615 = vmatpush.msra.mxu0 %v547
        %616 = vmatpush.msra.mxu0 %v546
        %617 = vmatpush.msra.mxu0 %v545
        %618 = vmatpush.msra.mxu0 %v544
        %619 = vmatpush.msra.mxu0 %v543
        %620 = vmatpush.msra.mxu0 %v542
        %621 = vmatpush.msra.mxu0 %v541
        %622 = vmatpush.msra.mxu0 %v540
        %623 = vmatpush.msra.mxu0 %v539
        %624 = vmatpush.msra.mxu0 %v538
        %625 = vmatpush.msra.mxu0 %v537
        %626 = vmatpush.msra.mxu0 %v536
        %627 = vmatmul.f32.gmra.mxu0 %v592
        %v628 = vpop.f32.mrf.mxu0
        %v629 = vadd.f32 %v587, %v628
        %630 = vmatmul.f32.gmra.mxu0 %v600
        %v631 = vpop.f32.mrf.mxu0
        %v632 = vadd.f32 %v587, %v631
        %633 = vdwg.mxu0
        %634 = vmatpush.msra.mxu0 %v567
        %635 = vmatpush.msra.mxu0 %v566
        %636 = vmatpush.msra.mxu0 %v565
        %637 = vmatpush.msra.mxu0 %v564
        %638 = vmatpush.msra.mxu0 %v563
        %639 = vmatpush.msra.mxu0 %v562
        %640 = vmatpush.msra.mxu0 %v561
        %641 = vmatpush.msra.mxu0 %v560
        %642 = vmatpush.msra.mxu0 %v559
        %643 = vmatpush.msra.mxu0 %v558
        %644 = vmatpush.msra.mxu0 %v557
        %645 = vmatpush.msra.mxu0 %v556
        %646 = vmatpush.msra.mxu0 %v555
        %647 = vmatpush.msra.mxu0 %v554
        %648 = vmatpush.msra.mxu0 %v553
        %649 = vmatpush.msra.mxu0 %v552
        %650 = vmatmul.f32.gmra.mxu0 %v595
        %v651 = vpop.f32.mrf.mxu0
        %v652 = vadd.f32 %v629, %v651
        %653 = vmatmul.f32.gmra.mxu0 %v602
        %v654 = vpop.f32.mrf.mxu0
        %v655 = vadd.f32 %v632, %v654
        %656 = vdwg.mxu0
        %657 = vmatpush.msra.mxu0 %v583
        %658 = vmatpush.msra.mxu0 %v582
        %659 = vmatpush.msra.mxu0 %v581
        %660 = vmatpush.msra.mxu0 %v580
        %661 = vmatpush.msra.mxu0 %v579
        %662 = vmatpush.msra.mxu0 %v578
        %663 = vmatpush.msra.mxu0 %v577
        %664 = vmatpush.msra.mxu0 %v576
        %665 = vmatpush.msra.mxu0 %v575
        %666 = vmatpush.msra.mxu0 %v574
        %667 = vmatpush.msra.mxu0 %v573
        %668 = vmatpush.msra.mxu0 %v572
        %669 = vmatpush.msra.mxu0 %v571
        %670 = vmatpush.msra.mxu0 %v570
        %671 = vmatpush.msra.mxu0 %v569
        %672 = vmatpush.msra.mxu0 %v568
        %673 = vmatmul.f32.gmra.mxu0 %v598
        %v674 = vpop.f32.mrf.mxu0
        %v675 = vadd.f32 %v652, %v674
        %676 = vmatmul.f32.gmra.mxu0 %v604
        %v677 = vpop.f32.mrf.mxu0
        %v678 = vadd.f32 %v655, %v677
        %679 = vdwg.mxu0
        %vm680 = vcmp.ge.f32.partialorder %v675, 0.0
        %vm681 = vcmp.ge.f32.partialorder %v678, 0.0
        %v682 = vmul.f32 %v675, 0.2
        %v683 = vmul.f32 %v678, 0.2
        %v684 = vsel %vm680, %v675, %v682
        %v685 = vsel %vm681, %v678, %v683
        %686 = vst.msk [vmem:[#allocation2 + $0x18] sm:$0xff] %vm429, %v684
        %687 = vst.msk [vmem:[#allocation2 + $0x28] sm:$0xff] %vm429, %v685
        %v688 = vld [vmem:[#allocation2] sm:$0xff]
        %v689 = vld [vmem:[#allocation2 + $0x8] sm:$0xff]
        %v690 = vld [vmem:[#allocation2 + $0x10] sm:$0xff]
        %v691 = vld [vmem:[#allocation2 + $0x18] sm:$0xff]
        %v692 = vld [vmem:[#allocation2 + $0x20] sm:$0xff]
        %v693 = vld [vmem:[#allocation2 + $0x28] sm:$0xff]
        %v694 = vld [vmem:[#allocation2 + $0x30] sm:$0xff]
        %v695 = vld [vmem:[#allocation2 + $0x38] sm:$0xff]
        %v700 = vrot.slane %v690, 1
        %v701 = vrot.slane %v691, 1
        %v702 = vrot.slane %v692, 1
        %v703 = vsel %vm188, %v700, %v702
        %v704 = vrot.slane %v693, 1
        %v705 = vsel %vm188, %v701, %v704
        %706 = vrot.lane.b32.xlu0 %v700, 32
        %v707 = vpop.permute.xlu0 %706
        %708 = vrot.lane.b32.xlu0 %v701, 32
        %v709 = vpop.permute.xlu0 %708
        %710 = vrot.lane.b32.xlu0 %v703, 32
        %v711 = vpop.permute.xlu0 %710
        %712 = vrot.lane.b32.xlu0 %v705, 32
        %v713 = vpop.permute.xlu0 %712
        %714 = vrot.lane.b32.xlu0 %v702, 32
        %v715 = vpop.permute.xlu0 %714
        %716 = vrot.lane.b32.xlu0 %v704, 32
        %v717 = vpop.permute.xlu0 %716
        %v718 = vsel %vm429, %v707, %v709
        %v719 = vsel %vm429, %v711, %v713
        %v720 = vsel %vm429, %v715, %v717
        %v729 = vrot.slane %v690, 2
        %v730 = vrot.slane %v691, 2
        %v731 = vrot.slane %v692, 2
        %v732 = vsel %vm202, %v729, %v731
        %v733 = vrot.slane %v693, 2
        %v734 = vsel %vm202, %v730, %v733
        %v735 = vrot.slane %v694, 2
        %v736 = vsel %vm202, %v731, %v735
        %v737 = vrot.slane %v695, 2
        %v738 = vsel %vm202, %v733, %v737
        %739 = vrot.lane.b32.xlu0 %v729, 64
        %v740 = vpop.permute.xlu0 %739
        %741 = vrot.lane.b32.xlu0 %v730, 64
        %v742 = vpop.permute.xlu0 %741
        %743 = vrot.lane.b32.xlu0 %v732, 64
        %v744 = vpop.permute.xlu0 %743
        %745 = vrot.lane.b32.xlu0 %v734, 64
        %v746 = vpop.permute.xlu0 %745
        %747 = vrot.lane.b32.xlu0 %v736, 64
        %v748 = vpop.permute.xlu0 %747
        %749 = vrot.lane.b32.xlu0 %v738, 64
        %v750 = vpop.permute.xlu0 %749
        %v751 = vsel %vm170, %v740, %v742
        %v752 = vsel %vm170, %v744, %v746
        %v753 = vsel %vm170, %v748, %v750
        %v757 = vsel %vm429, %v689, %v707
        %v758 = vsel %vm429, %v691, %v711
        %v759 = vsel %vm429, %v693, %v715
        %v760 = vsel %vm170, %v718, %v740
        %v761 = vsel %vm170, %v719, %v744
        %v762 = vsel %vm170, %v720, %v748
        %s763 = scalar_lea.vmem %s1, 1728
        %v764 = vld [vmem:[%s763] sm:$0xff]
        %v765 = vld [vmem:[%s763 + $0x8] sm:$0xff]
        %v766 = vld [vmem:[%s763 + $0x10] sm:$0xff]
        %v767 = vld [vmem:[%s763 + $0x18] sm:$0xff]
        %v768 = vld [vmem:[%s763 + $0x20] sm:$0xff]
        %v769 = vld [vmem:[%s763 + $0x28] sm:$0xff]
        %v770 = vld [vmem:[%s763 + $0x30] sm:$0xff]
        %v771 = vld [vmem:[%s763 + $0x38] sm:$0xff]
        %v772 = vld [vmem:[%s763 + $0x40] sm:$0xff]
        %v773 = vld [vmem:[%s763 + $0x48] sm:$0xff]
        %v774 = vld [vmem:[%s763 + $0x50] sm:$0xff]
        %v775 = vld [vmem:[%s763 + $0x58] sm:$0xff]
        %v776 = vld [vmem:[%s763 + $0x60] sm:$0xff]
        %v777 = vld [vmem:[%s763 + $0x68] sm:$0xff]
        %v778 = vld [vmem:[%s763 + $0x70] sm:$0xff]
        %v779 = vld [vmem:[%s763 + $0x78] sm:$0xff]
        %v780 = vld [vmem:[%s763 + $0x80] sm:$0xff]
        %v781 = vld [vmem:[%s763 + $0x88] sm:$0xff]
        %v782 = vld [vmem:[%s763 + $0x90] sm:$0xff]
        %v783 = vld [vmem:[%s763 + $0x98] sm:$0xff]
        %v784 = vld [vmem:[%s763 + $0xa0] sm:$0xff]
        %v785 = vld [vmem:[%s763 + $0xa8] sm:$0xff]
        %v786 = vld [vmem:[%s763 + $0xb0] sm:$0xff]
        %v787 = vld [vmem:[%s763 + $0xb8] sm:$0xff]
        %v788 = vld [vmem:[%s763 + $0xc0] sm:$0xff]
        %v789 = vld [vmem:[%s763 + $0xc8] sm:$0xff]
        %v790 = vld [vmem:[%s763 + $0xd0] sm:$0xff]
        %v791 = vld [vmem:[%s763 + $0xd8] sm:$0xff]
        %v792 = vld [vmem:[%s763 + $0xe0] sm:$0xff]
        %v793 = vld [vmem:[%s763 + $0xe8] sm:$0xff]
        %v794 = vld [vmem:[%s763 + $0xf0] sm:$0xff]
        %v795 = vld [vmem:[%s763 + $0xf8] sm:$0xff]
        %v796 = vld [vmem:[%s763 + $0x100] sm:$0xff]
        %v797 = vld [vmem:[%s763 + $0x108] sm:$0xff]
        %v798 = vld [vmem:[%s763 + $0x110] sm:$0xff]
        %v799 = vld [vmem:[%s763 + $0x118] sm:$0xff]
        %v800 = vld [vmem:[%s763 + $0x120] sm:$0xff]
        %v801 = vld [vmem:[%s763 + $0x128] sm:$0xff]
        %v802 = vld [vmem:[%s763 + $0x130] sm:$0xff]
        %v803 = vld [vmem:[%s763 + $0x138] sm:$0xff]
        %v804 = vld [vmem:[%s763 + $0x140] sm:$0xff]
        %v805 = vld [vmem:[%s763 + $0x148] sm:$0xff]
        %v806 = vld [vmem:[%s763 + $0x150] sm:$0xff]
        %v807 = vld [vmem:[%s763 + $0x158] sm:$0xff]
        %v808 = vld [vmem:[%s763 + $0x160] sm:$0xff]
        %v809 = vld [vmem:[%s763 + $0x168] sm:$0xff]
        %v810 = vld [vmem:[%s763 + $0x170] sm:$0xff]
        %v811 = vld [vmem:[%s763 + $0x178] sm:$0xff]
        %v812 = vld [vmem:[%s763 + $0x180] sm:$0xff]
        %v813 = vld [vmem:[%s763 + $0x188] sm:$0xff]
        %v814 = vld [vmem:[%s763 + $0x190] sm:$0xff]
        %v815 = vld [vmem:[%s763 + $0x198] sm:$0xff]
        %v816 = vld [vmem:[%s763 + $0x1a0] sm:$0xff]
        %v817 = vld [vmem:[%s763 + $0x1a8] sm:$0xff]
        %v818 = vld [vmem:[%s763 + $0x1b0] sm:$0xff]
        %v819 = vld [vmem:[%s763 + $0x1b8] sm:$0xff]
        %v820 = vld [vmem:[%s763 + $0x1c0] sm:$0xff]
        %v821 = vld [vmem:[%s763 + $0x1c8] sm:$0xff]
        %v822 = vld [vmem:[%s763 + $0x1d0] sm:$0xff]
        %v823 = vld [vmem:[%s763 + $0x1d8] sm:$0xff]
        %s824 = scalar_lea.vmem %s2, 3
        %v825 = vld [vmem:[%s824] sm:$0x1]
        %v827 = vperm.slane %v825, 0
        %v836 = vrot.slane %v688, 7
        %v837 = vrot.slane %v690, 7
        %v838 = vsel %vm242, %v836, %v837
        %v839 = vrot.slane %v757, 7
        %v840 = vrot.slane %v758, 7
        %v841 = vsel %vm242, %v839, %v840
        %v842 = vrot.slane %v760, 7
        %v843 = vrot.slane %v761, 7
        %v844 = vsel %vm242, %v842, %v843
        %v845 = vrot.slane %v751, 7
        %v846 = vrot.slane %v752, 7
        %v847 = vsel %vm242, %v845, %v846
        %v848 = vrot.slane %v692, 7
        %v849 = vsel %vm242, %v837, %v848
        %v850 = vrot.slane %v759, 7
        %v851 = vsel %vm242, %v840, %v850
        %v852 = vrot.slane %v762, 7
        %v853 = vsel %vm242, %v843, %v852
        %v854 = vrot.slane %v753, 7
        %v855 = vsel %vm242, %v846, %v854
        %v862 = vsel %vm355, %v847, 0
        %v864 = vsel %vm355, %v855, 0
        %866 = vmatpush.msra.mxu0 %v779
        %867 = vmatpush.msra.mxu0 %v778
        %868 = vmatpush.msra.mxu0 %v777
        %869 = vmatpush.msra.mxu0 %v776
        %870 = vmatpush.msra.mxu0 %v775
        %871 = vmatpush.msra.mxu0 %v774
        %872 = vmatpush.msra.mxu0 %v773
        %873 = vmatpush.msra.mxu0 %v772
        %874 = vmatpush.msra.mxu0 %v771
        %875 = vmatpush.msra.mxu0 %v770
        %876 = vmatpush.msra.mxu0 %v769
        %877 = vmatpush.msra.mxu0 %v768
        %878 = vmatpush.msra.mxu0 %v767
        %879 = vmatpush.msra.mxu0 %v766
        %880 = vmatpush.msra.mxu0 %v765
        %881 = vmatpush.msra.mxu0 %v764
        %882 = vmatmul.f32.gmra.mxu0 %v838
        %v883 = vpop.f32.mrf.mxu0
        %v884 = vadd.f32 %v827, %v883
        %885 = vmatmul.f32.gmra.mxu0 %v849
        %v886 = vpop.f32.mrf.mxu0
        %v887 = vadd.f32 %v827, %v886
        %888 = vdwg.mxu0
        %889 = vmatpush.msra.mxu0 %v795
        %890 = vmatpush.msra.mxu0 %v794
        %891 = vmatpush.msra.mxu0 %v793
        %892 = vmatpush.msra.mxu0 %v792
        %893 = vmatpush.msra.mxu0 %v791
        %894 = vmatpush.msra.mxu0 %v790
        %895 = vmatpush.msra.mxu0 %v789
        %896 = vmatpush.msra.mxu0 %v788
        %897 = vmatpush.msra.mxu0 %v787
        %898 = vmatpush.msra.mxu0 %v786
        %899 = vmatpush.msra.mxu0 %v785
        %900 = vmatpush.msra.mxu0 %v784
        %901 = vmatpush.msra.mxu0 %v783
        %902 = vmatpush.msra.mxu0 %v782
        %903 = vmatpush.msra.mxu0 %v781
        %904 = vmatpush.msra.mxu0 %v780
        %905 = vmatmul.f32.gmra.mxu0 %v841
        %v906 = vpop.f32.mrf.mxu0
        %v907 = vadd.f32 %v884, %v906
        %908 = vmatmul.f32.gmra.mxu0 %v851
        %v909 = vpop.f32.mrf.mxu0
        %v910 = vadd.f32 %v887, %v909
        %911 = vdwg.mxu0
        %912 = vmatpush.msra.mxu0 %v811
        %913 = vmatpush.msra.mxu0 %v810
        %914 = vmatpush.msra.mxu0 %v809
        %915 = vmatpush.msra.mxu0 %v808
        %916 = vmatpush.msra.mxu0 %v807
        %917 = vmatpush.msra.mxu0 %v806
        %918 = vmatpush.msra.mxu0 %v805
        %919 = vmatpush.msra.mxu0 %v804
        %920 = vmatpush.msra.mxu0 %v803
        %921 = vmatpush.msra.mxu0 %v802
        %922 = vmatpush.msra.mxu0 %v801
        %923 = vmatpush.msra.mxu0 %v800
        %924 = vmatpush.msra.mxu0 %v799
        %925 = vmatpush.msra.mxu0 %v798
        %926 = vmatpush.msra.mxu0 %v797
        %927 = vmatpush.msra.mxu0 %v796
        %928 = vmatmul.f32.gmra.mxu0 %v844
        %v929 = vpop.f32.mrf.mxu0
        %v930 = vadd.f32 %v907, %v929
        %931 = vmatmul.f32.gmra.mxu0 %v853
        %v932 = vpop.f32.mrf.mxu0
        %v933 = vadd.f32 %v910, %v932
        %934 = vdwg.mxu0
        %935 = vmatpush.msra.mxu0 0.0
        %936 = vmatpush.msra.mxu0 0.0
        %937 = vmatpush.msra.mxu0 0.0
        %938 = vmatpush.msra.mxu0 0.0
        %939 = vmatpush.msra.mxu0 %v823
        %940 = vmatpush.msra.mxu0 %v822
        %941 = vmatpush.msra.mxu0 %v821
        %942 = vmatpush.msra.mxu0 %v820
        %943 = vmatpush.msra.mxu0 %v819
        %944 = vmatpush.msra.mxu0 %v818
        %945 = vmatpush.msra.mxu0 %v817
        %946 = vmatpush.msra.mxu0 %v816
        %947 = vmatpush.msra.mxu0 %v815
        %948 = vmatpush.msra.mxu0 %v814
        %949 = vmatpush.msra.mxu0 %v813
        %950 = vmatpush.msra.mxu0 %v812
        %951 = vmatmul.f32.gmra.mxu0 %v862
        %v952 = vpop.f32.mrf.mxu0
        %v953 = vadd.f32 %v930, %v952
        %954 = vmatmul.f32.gmra.mxu0 %v864
        %v955 = vpop.f32.mrf.mxu0
        %v956 = vadd.f32 %v933, %v955
        %957 = vdwg.mxu0
        %vm958 = vcmp.ge.f32.partialorder %v953, 0.0
        %vm959 = vcmp.ge.f32.partialorder %v956, 0.0
        %v960 = vmul.f32 %v953, 0.2
        %v961 = vmul.f32 %v956, 0.2
        %v962 = vsel %vm958, %v953, %v960
        %v963 = vsel %vm959, %v956, %v961
        %966 = vrot.lane.b32.xlu0 %v962, 32
        %v967 = vpop.permute.xlu0 %966
        %968 = vrot.lane.b32.xlu0 %v963, 32
        %v969 = vpop.permute.xlu0 %968
        %vm972 = vcmask 523520
        %973 = vst.msk [vmem:[#allocation2 + $0x18] sm:$0xff] %vm972, %v967
        %974 = vst.msk [vmem:[#allocation2 + $0x28] sm:$0xff] %vm972, %v969
        %v975 = vld [vmem:[#allocation2] sm:$0xff]
        %v976 = vld [vmem:[#allocation2 + $0x8] sm:$0xff]
        %v977 = vld [vmem:[#allocation2 + $0x10] sm:$0xff]
        %v978 = vld [vmem:[#allocation2 + $0x18] sm:$0xff]
        %v979 = vld [vmem:[#allocation2 + $0x20] sm:$0xff]
        %v980 = vld [vmem:[#allocation2 + $0x28] sm:$0xff]
        %v981 = vld [vmem:[#allocation2 + $0x30] sm:$0xff]
        %v982 = vld [vmem:[#allocation2 + $0x38] sm:$0xff]
        %v987 = vrot.slane %v977, 1
        %v988 = vrot.slane %v978, 1
        %v989 = vrot.slane %v979, 1
        %v990 = vsel %vm188, %v987, %v989
        %v991 = vrot.slane %v980, 1
        %v992 = vsel %vm188, %v988, %v991
        %993 = vrot.lane.b32.xlu0 %v987, 64
        %v994 = vpop.permute.xlu0 %993
        %995 = vrot.lane.b32.xlu0 %v988, 64
        %v996 = vpop.permute.xlu0 %995
        %997 = vrot.lane.b32.xlu0 %v990, 64
        %v998 = vpop.permute.xlu0 %997
        %999 = vrot.lane.b32.xlu0 %v992, 64
        %v1000 = vpop.permute.xlu0 %999
        %1001 = vrot.lane.b32.xlu0 %v989, 64
        %v1002 = vpop.permute.xlu0 %1001
        %1003 = vrot.lane.b32.xlu0 %v991, 64
        %v1004 = vpop.permute.xlu0 %1003
        %v1005 = vsel %vm170, %v994, %v996
        %v1006 = vsel %vm170, %v998, %v1000
        %v1007 = vsel %vm170, %v1002, %v1004
        %v1013 = vrot.slane %v977, 2
        %v1014 = vrot.slane %v978, 2
        %v1015 = vrot.slane %v979, 2
        %v1016 = vsel %vm202, %v1013, %v1015
        %v1017 = vrot.slane %v980, 2
        %v1018 = vsel %vm202, %v1014, %v1017
        %v1019 = vrot.slane %v981, 2
        %v1020 = vsel %vm202, %v1015, %v1019
        %v1021 = vrot.slane %v982, 2
        %v1022 = vsel %vm202, %v1017, %v1021
        %v1023 = vsel %vm170, %v976, %v994
        %v1024 = vsel %vm170, %v978, %v998
        %v1025 = vsel %vm170, %v980, %v1002
        %s1026 = scalar_lea.vmem %s1, 2304
        %v1027 = vld [vmem:[%s1026] sm:$0xff]
        %v1028 = vld [vmem:[%s1026 + $0x8] sm:$0xff]
        %v1029 = vld [vmem:[%s1026 + $0x10] sm:$0xff]
        %v1030 = vld [vmem:[%s1026 + $0x18] sm:$0xff]
        %v1031 = vld [vmem:[%s1026 + $0x20] sm:$0xff]
        %v1032 = vld [vmem:[%s1026 + $0x28] sm:$0xff]
        %v1033 = vld [vmem:[%s1026 + $0x30] sm:$0xff]
        %v1034 = vld [vmem:[%s1026 + $0x38] sm:$0xff]
        %v1035 = vld [vmem:[%s1026 + $0x40] sm:$0xff]
        %v1036 = vld [vmem:[%s1026 + $0x48] sm:$0xff]
        %v1037 = vld [vmem:[%s1026 + $0x50] sm:$0xff]
        %v1038 = vld [vmem:[%s1026 + $0x58] sm:$0xff]
        %v1039 = vld [vmem:[%s1026 + $0x60] sm:$0xff]
        %v1040 = vld [vmem:[%s1026 + $0x68] sm:$0xff]
        %v1041 = vld [vmem:[%s1026 + $0x70] sm:$0xff]
        %v1042 = vld [vmem:[%s1026 + $0x78] sm:$0xff]
        %v1043 = vld [vmem:[%s1026 + $0x80] sm:$0xff]
        %v1044 = vld [vmem:[%s1026 + $0x88] sm:$0xff]
        %v1045 = vld [vmem:[%s1026 + $0x90] sm:$0xff]
        %v1046 = vld [vmem:[%s1026 + $0x98] sm:$0xff]
        %v1047 = vld [vmem:[%s1026 + $0xa0] sm:$0xff]
        %v1048 = vld [vmem:[%s1026 + $0xa8] sm:$0xff]
        %v1049 = vld [vmem:[%s1026 + $0xb0] sm:$0xff]
        %v1050 = vld [vmem:[%s1026 + $0xb8] sm:$0xff]
        %v1051 = vld [vmem:[%s1026 + $0xc0] sm:$0xff]
        %v1052 = vld [vmem:[%s1026 + $0xc8] sm:$0xff]
        %v1053 = vld [vmem:[%s1026 + $0xd0] sm:$0xff]
        %v1054 = vld [vmem:[%s1026 + $0xd8] sm:$0xff]
        %v1055 = vld [vmem:[%s1026 + $0xe0] sm:$0xff]
        %v1056 = vld [vmem:[%s1026 + $0xe8] sm:$0xff]
        %v1057 = vld [vmem:[%s1026 + $0xf0] sm:$0xff]
        %v1058 = vld [vmem:[%s1026 + $0xf8] sm:$0xff]
        %v1059 = vld [vmem:[%s1026 + $0x100] sm:$0xff]
        %v1060 = vld [vmem:[%s1026 + $0x108] sm:$0xff]
        %v1061 = vld [vmem:[%s1026 + $0x110] sm:$0xff]
        %v1062 = vld [vmem:[%s1026 + $0x118] sm:$0xff]
        %v1063 = vld [vmem:[%s1026 + $0x120] sm:$0xff]
        %v1064 = vld [vmem:[%s1026 + $0x128] sm:$0xff]
        %v1065 = vld [vmem:[%s1026 + $0x130] sm:$0xff]
        %v1066 = vld [vmem:[%s1026 + $0x138] sm:$0xff]
        %v1067 = vld [vmem:[%s1026 + $0x140] sm:$0xff]
        %v1068 = vld [vmem:[%s1026 + $0x148] sm:$0xff]
        %v1069 = vld [vmem:[%s1026 + $0x150] sm:$0xff]
        %v1070 = vld [vmem:[%s1026 + $0x158] sm:$0xff]
        %v1071 = vld [vmem:[%s1026 + $0x160] sm:$0xff]
        %v1072 = vld [vmem:[%s1026 + $0x168] sm:$0xff]
        %v1073 = vld [vmem:[%s1026 + $0x170] sm:$0xff]
        %v1074 = vld [vmem:[%s1026 + $0x178] sm:$0xff]
        %v1075 = vld [vmem:[%s1026 + $0x180] sm:$0xff]
        %v1076 = vld [vmem:[%s1026 + $0x188] sm:$0xff]
        %v1077 = vld [vmem:[%s1026 + $0x190] sm:$0xff]
        %v1078 = vld [vmem:[%s1026 + $0x198] sm:$0xff]
        %v1079 = vld [vmem:[%s1026 + $0x1a0] sm:$0xff]
        %v1080 = vld [vmem:[%s1026 + $0x1a8] sm:$0xff]
        %v1081 = vld [vmem:[%s1026 + $0x1b0] sm:$0xff]
        %v1082 = vld [vmem:[%s1026 + $0x1b8] sm:$0xff]
        %v1083 = vld [vmem:[%s1026 + $0x1c0] sm:$0xff]
        %v1084 = vld [vmem:[%s1026 + $0x1c8] sm:$0xff]
        %v1085 = vld [vmem:[%s1026 + $0x1d0] sm:$0xff]
        %v1086 = vld [vmem:[%s1026 + $0x1d8] sm:$0xff]
        %v1087 = vld [vmem:[%s1026 + $0x1e0] sm:$0xff]
        %v1088 = vld [vmem:[%s1026 + $0x1e8] sm:$0xff]
        %v1089 = vld [vmem:[%s1026 + $0x1f0] sm:$0xff]
        %v1090 = vld [vmem:[%s1026 + $0x1f8] sm:$0xff]
        %v1091 = vld [vmem:[%s1026 + $0x200] sm:$0xff]
        %v1092 = vld [vmem:[%s1026 + $0x208] sm:$0xff]
        %v1093 = vld [vmem:[%s1026 + $0x210] sm:$0xff]
        %v1094 = vld [vmem:[%s1026 + $0x218] sm:$0xff]
        %v1095 = vld [vmem:[%s1026 + $0x220] sm:$0xff]
        %v1096 = vld [vmem:[%s1026 + $0x228] sm:$0xff]
        %v1097 = vld [vmem:[%s1026 + $0x230] sm:$0xff]
        %v1098 = vld [vmem:[%s1026 + $0x238] sm:$0xff]
        %s1099 = scalar_lea.vmem %s2, 4
        %v1100 = vld [vmem:[%s1099] sm:$0x1]
        %v1102 = vperm.slane %v1100, 0
        %v1108 = vrot.slane %v975, 7
        %v1109 = vrot.slane %v977, 7
        %v1110 = vsel %vm242, %v1108, %v1109
        %v1111 = vrot.slane %v1023, 7
        %v1112 = vrot.slane %v1024, 7
        %v1113 = vsel %vm242, %v1111, %v1112
        %v1114 = vrot.slane %v1005, 7
        %v1115 = vrot.slane %v1006, 7
        %v1116 = vsel %vm242, %v1114, %v1115
        %v1117 = vrot.slane %v1013, 7
        %v1118 = vrot.slane %v1016, 7
        %v1119 = vsel %vm242, %v1117, %v1118
        %v1120 = vrot.slane %v1014, 7
        %v1121 = vrot.slane %v1018, 7
        %v1122 = vsel %vm242, %v1120, %v1121
        %v1123 = vrot.slane %v979, 7
        %v1124 = vsel %vm242, %v1109, %v1123
        %v1125 = vrot.slane %v1025, 7
        %v1126 = vsel %vm242, %v1112, %v1125
        %v1127 = vrot.slane %v1007, 7
        %v1128 = vsel %vm242, %v1115, %v1127
        %v1129 = vrot.slane %v1020, 7
        %v1130 = vsel %vm242, %v1118, %v1129
        %v1131 = vrot.slane %v1022, 7
        %v1132 = vsel %vm242, %v1121, %v1131
        %v1141 = vsel %vm170, %v1122, 0
        %v1143 = vsel %vm170, %v1132, 0
        %1145 = vmatpush.msra.mxu0 %v1042
        %1146 = vmatpush.msra.mxu0 %v1041
        %1147 = vmatpush.msra.mxu0 %v1040
        %1148 = vmatpush.msra.mxu0 %v1039
        %1149 = vmatpush.msra.mxu0 %v1038
        %1150 = vmatpush.msra.mxu0 %v1037
        %1151 = vmatpush.msra.mxu0 %v1036
        %1152 = vmatpush.msra.mxu0 %v1035
        %1153 = vmatpush.msra.mxu0 %v1034
        %1154 = vmatpush.msra.mxu0 %v1033
        %1155 = vmatpush.msra.mxu0 %v1032
        %1156 = vmatpush.msra.mxu0 %v1031
        %1157 = vmatpush.msra.mxu0 %v1030
        %1158 = vmatpush.msra.mxu0 %v1029
        %1159 = vmatpush.msra.mxu0 %v1028
        %1160 = vmatpush.msra.mxu0 %v1027
        %1161 = vmatmul.f32.gmra.mxu0 %v1110
        %v1162 = vpop.f32.mrf.mxu0
        %v1163 = vadd.f32 %v1102, %v1162
        %1164 = vmatmul.f32.gmra.mxu0 %v1124
        %v1165 = vpop.f32.mrf.mxu0
        %v1166 = vadd.f32 %v1102, %v1165
        %1167 = vdwg.mxu0
        %1168 = vmatpush.msra.mxu0 %v1058
        %1169 = vmatpush.msra.mxu0 %v1057
        %1170 = vmatpush.msra.mxu0 %v1056
        %1171 = vmatpush.msra.mxu0 %v1055
        %1172 = vmatpush.msra.mxu0 %v1054
        %1173 = vmatpush.msra.mxu0 %v1053
        %1174 = vmatpush.msra.mxu0 %v1052
        %1175 = vmatpush.msra.mxu0 %v1051
        %1176 = vmatpush.msra.mxu0 %v1050
        %1177 = vmatpush.msra.mxu0 %v1049
        %1178 = vmatpush.msra.mxu0 %v1048
        %1179 = vmatpush.msra.mxu0 %v1047
        %1180 = vmatpush.msra.mxu0 %v1046
        %1181 = vmatpush.msra.mxu0 %v1045
        %1182 = vmatpush.msra.mxu0 %v1044
        %1183 = vmatpush.msra.mxu0 %v1043
        %1184 = vmatmul.f32.gmra.mxu0 %v1113
        %v1185 = vpop.f32.mrf.mxu0
        %v1186 = vadd.f32 %v1163, %v1185
        %1187 = vmatmul.f32.gmra.mxu0 %v1126
        %v1188 = vpop.f32.mrf.mxu0
        %v1189 = vadd.f32 %v1166, %v1188
        %1190 = vdwg.mxu0
        %1191 = vmatpush.msra.mxu0 %v1074
        %1192 = vmatpush.msra.mxu0 %v1073
        %1193 = vmatpush.msra.mxu0 %v1072
        %1194 = vmatpush.msra.mxu0 %v1071
        %1195 = vmatpush.msra.mxu0 %v1070
        %1196 = vmatpush.msra.mxu0 %v1069
        %1197 = vmatpush.msra.mxu0 %v1068
        %1198 = vmatpush.msra.mxu0 %v1067
        %1199 = vmatpush.msra.mxu0 %v1066
        %1200 = vmatpush.msra.mxu0 %v1065
        %1201 = vmatpush.msra.mxu0 %v1064
        %1202 = vmatpush.msra.mxu0 %v1063
        %1203 = vmatpush.msra.mxu0 %v1062
        %1204 = vmatpush.msra.mxu0 %v1061
        %1205 = vmatpush.msra.mxu0 %v1060
        %1206 = vmatpush.msra.mxu0 %v1059
        %1207 = vmatmul.f32.gmra.mxu0 %v1116
        %v1208 = vpop.f32.mrf.mxu0
        %v1209 = vadd.f32 %v1186, %v1208
        %1210 = vmatmul.f32.gmra.mxu0 %v1128
        %v1211 = vpop.f32.mrf.mxu0
        %v1212 = vadd.f32 %v1189, %v1211
        %1213 = vdwg.mxu0
        %1214 = vmatpush.msra.mxu0 %v1090
        %1215 = vmatpush.msra.mxu0 %v1089
        %1216 = vmatpush.msra.mxu0 %v1088
        %1217 = vmatpush.msra.mxu0 %v1087
        %1218 = vmatpush.msra.mxu0 %v1086
        %1219 = vmatpush.msra.mxu0 %v1085
        %1220 = vmatpush.msra.mxu0 %v1084
        %1221 = vmatpush.msra.mxu0 %v1083
        %1222 = vmatpush.msra.mxu0 %v1082
        %1223 = vmatpush.msra.mxu0 %v1081
        %1224 = vmatpush.msra.mxu0 %v1080
        %1225 = vmatpush.msra.mxu0 %v1079
        %1226 = vmatpush.msra.mxu0 %v1078
        %1227 = vmatpush.msra.mxu0 %v1077
        %1228 = vmatpush.msra.mxu0 %v1076
        %1229 = vmatpush.msra.mxu0 %v1075
        %1230 = vmatmul.f32.gmra.mxu0 %v1119
        %v1231 = vpop.f32.mrf.mxu0
        %v1232 = vadd.f32 %v1209, %v1231
        %1233 = vmatmul.f32.gmra.mxu0 %v1130
        %v1234 = vpop.f32.mrf.mxu0
        %v1235 = vadd.f32 %v1212, %v1234
        %1236 = vdwg.mxu0
        %1237 = vmatpush.msra.mxu0 0.0
        %1238 = vmatpush.msra.mxu0 0.0
        %1239 = vmatpush.msra.mxu0 0.0
        %1240 = vmatpush.msra.mxu0 0.0
        %1241 = vmatpush.msra.mxu0 0.0
        %1242 = vmatpush.msra.mxu0 0.0
        %1243 = vmatpush.msra.mxu0 0.0
        %1244 = vmatpush.msra.mxu0 0.0
        %1245 = vmatpush.msra.mxu0 %v1098
        %1246 = vmatpush.msra.mxu0 %v1097
        %1247 = vmatpush.msra.mxu0 %v1096
        %1248 = vmatpush.msra.mxu0 %v1095
        %1249 = vmatpush.msra.mxu0 %v1094
        %1250 = vmatpush.msra.mxu0 %v1093
        %1251 = vmatpush.msra.mxu0 %v1092
        %1252 = vmatpush.msra.mxu0 %v1091
        %1253 = vmatmul.f32.gmra.mxu0 %v1141
        %v1254 = vpop.f32.mrf.mxu0
        %v1255 = vadd.f32 %v1232, %v1254
        %1256 = vmatmul.f32.gmra.mxu0 %v1143
        %v1257 = vpop.f32.mrf.mxu0
        %v1258 = vadd.f32 %v1235, %v1257
        %1259 = vdwg.mxu0
        %v1260 = vmul.f32 %v1255, 0.2
        %v1261 = vmul.f32 %v1258, 0.2
        %v1262 = vadd.f32 %v1260, %v178
        %v1263 = vadd.f32 %v1261, %v179
        %1264 = vst.msk [vmem:[#allocation2 + $0x10] sm:$0xff] %vm170, %v1262
        %1265 = vst.msk [vmem:[#allocation2 + $0x20] sm:$0xff] %vm170, %v1263
        %v1266 = vld [vmem:[#allocation2] sm:$0xff]
        %v1267 = vld [vmem:[#allocation2 + $0x10] sm:$0xff]
        %v1268 = vld [vmem:[#allocation2 + $0x20] sm:$0xff]
        %v1269 = vld [vmem:[#allocation2 + $0x30] sm:$0xff]
        %v1272 = vrot.slane %v1267, 1
        %v1273 = vrot.slane %v1268, 1
        %v1274 = vsel %vm188, %v1272, %v1273
        %1275 = vrot.lane.b32.xlu0 %v1272, 64
        %v1276 = vpop.permute.xlu0 %1275
        %1277 = vrot.lane.b32.xlu0 %v1274, 64
        %v1278 = vpop.permute.xlu0 %1277
        %1279 = vrot.lane.b32.xlu0 %v1273, 64
        %v1280 = vpop.permute.xlu0 %1279
        %v1285 = vrot.slane %v1267, 2
        %v1286 = vrot.slane %v1268, 2
        %v1287 = vsel %vm202, %v1285, %v1286
        %v1288 = vrot.slane %v1269, 2
        %v1289 = vsel %vm202, %v1286, %v1288
        %v1290 = vsel %vm170, %v1266, %v1276
        %v1291 = vsel %vm170, %v1267, %v1278
        %v1292 = vsel %vm170, %v1268, %v1280
        %s1293 = scalar_lea.vmem %s1, 2880
        %v1294 = vld [vmem:[%s1293] sm:$0xff]
        %v1295 = vld [vmem:[%s1293 + $0x8] sm:$0xff]
        %v1296 = vld [vmem:[%s1293 + $0x10] sm:$0xff]
        %v1297 = vld [vmem:[%s1293 + $0x18] sm:$0xff]
        %v1298 = vld [vmem:[%s1293 + $0x20] sm:$0xff]
        %v1299 = vld [vmem:[%s1293 + $0x28] sm:$0xff]
        %v1300 = vld [vmem:[%s1293 + $0x30] sm:$0xff]
        %v1301 = vld [vmem:[%s1293 + $0x38] sm:$0xff]
        %v1302 = vld [vmem:[%s1293 + $0x40] sm:$0xff]
        %v1303 = vld [vmem:[%s1293 + $0x48] sm:$0xff]
        %v1304 = vld [vmem:[%s1293 + $0x50] sm:$0xff]
        %v1305 = vld [vmem:[%s1293 + $0x58] sm:$0xff]
        %v1306 = vld [vmem:[%s1293 + $0x60] sm:$0xff]
        %v1307 = vld [vmem:[%s1293 + $0x68] sm:$0xff]
        %v1308 = vld [vmem:[%s1293 + $0x70] sm:$0xff]
        %v1309 = vld [vmem:[%s1293 + $0x78] sm:$0xff]
        %v1310 = vld [vmem:[%s1293 + $0x80] sm:$0xff]
        %v1311 = vld [vmem:[%s1293 + $0x88] sm:$0xff]
        %v1312 = vld [vmem:[%s1293 + $0x90] sm:$0xff]
        %v1313 = vld [vmem:[%s1293 + $0x98] sm:$0xff]
        %v1314 = vld [vmem:[%s1293 + $0xa0] sm:$0xff]
        %v1315 = vld [vmem:[%s1293 + $0xa8] sm:$0xff]
        %v1316 = vld [vmem:[%s1293 + $0xb0] sm:$0xff]
        %v1317 = vld [vmem:[%s1293 + $0xb8] sm:$0xff]
        %s1318 = scalar_lea.vmem %s2, 5
        %v1319 = vld [vmem:[%s1318] sm:$0x1]
        %v1321 = vperm.slane %v1319, 0
        %v1326 = vrot.slane %v1290, 7
        %v1327 = vrot.slane %v1291, 7
        %v1328 = vsel %vm242, %v1326, %v1327
        %v1329 = vrot.slane %v1285, 7
        %v1330 = vrot.slane %v1287, 7
        %v1331 = vsel %vm242, %v1329, %v1330
        %v1332 = vrot.slane %v1292, 7
        %v1333 = vsel %vm242, %v1327, %v1332
        %v1334 = vrot.slane %v1289, 7
        %v1335 = vsel %vm242, %v1330, %v1334
        %v1338 = vsel %vm170, %v1331, 0
        %v1340 = vsel %vm170, %v1335, 0
        %1342 = vmatpush.msra.mxu0 %v1309
        %1343 = vmatpush.msra.mxu0 %v1308
        %1344 = vmatpush.msra.mxu0 %v1307
        %1345 = vmatpush.msra.mxu0 %v1306
        %1346 = vmatpush.msra.mxu0 %v1305
        %1347 = vmatpush.msra.mxu0 %v1304
        %1348 = vmatpush.msra.mxu0 %v1303
        %1349 = vmatpush.msra.mxu0 %v1302
        %1350 = vmatpush.msra.mxu0 %v1301
        %1351 = vmatpush.msra.mxu0 %v1300
        %1352 = vmatpush.msra.mxu0 %v1299
        %1353 = vmatpush.msra.mxu0 %v1298
        %1354 = vmatpush.msra.mxu0 %v1297
        %1355 = vmatpush.msra.mxu0 %v1296
        %1356 = vmatpush.msra.mxu0 %v1295
        %1357 = vmatpush.msra.mxu0 %v1294
        %1358 = vmatmul.f32.gmra.mxu0 %v1328
        %v1359 = vpop.f32.mrf.mxu0
        %v1360 = vadd.f32 %v1321, %v1359
        %1361 = vmatmul.f32.gmra.mxu0 %v1333
        %v1362 = vpop.f32.mrf.mxu0
        %v1363 = vadd.f32 %v1321, %v1362
        %1364 = vdwg.mxu0
        %1365 = vmatpush.msra.mxu0 0.0
        %1366 = vmatpush.msra.mxu0 0.0
        %1367 = vmatpush.msra.mxu0 0.0
        %1368 = vmatpush.msra.mxu0 0.0
        %1369 = vmatpush.msra.mxu0 0.0
        %1370 = vmatpush.msra.mxu0 0.0
        %1371 = vmatpush.msra.mxu0 0.0
        %1372 = vmatpush.msra.mxu0 0.0
        %1373 = vmatpush.msra.mxu0 %v1317
        %1374 = vmatpush.msra.mxu0 %v1316
        %1375 = vmatpush.msra.mxu0 %v1315
        %1376 = vmatpush.msra.mxu0 %v1314
        %1377 = vmatpush.msra.mxu0 %v1313
        %1378 = vmatpush.msra.mxu0 %v1312
        %1379 = vmatpush.msra.mxu0 %v1311
        %1380 = vmatpush.msra.mxu0 %v1310
        %1381 = vmatmul.f32.gmra.mxu0 %v1338
        %v1382 = vpop.f32.mrf.mxu0
        %v1383 = vadd.f32 %v1360, %v1382
        %1384 = vmatmul.f32.gmra.mxu0 %v1340
        %v1385 = vpop.f32.mrf.mxu0
        %v1386 = vadd.f32 %v1363, %v1385
        %1387 = vdwg.mxu0
        %vm1388 = vcmp.ge.f32.partialorder %v1383, 0.0
        %vm1389 = vcmp.ge.f32.partialorder %v1386, 0.0
        %v1390 = vmul.f32 %v1383, 0.2
        %v1391 = vmul.f32 %v1386, 0.2
        %v1392 = vsel %vm1388, %v1383, %v1390
        %v1393 = vsel %vm1389, %v1386, %v1391
        %1396 = vrot.lane.b32.xlu0 %v1392, 64
        %v1397 = vpop.permute.xlu0 %1396
        %1398 = vrot.lane.b32.xlu0 %v1393, 64
        %v1399 = vpop.permute.xlu0 %1398
        %1402 = vst.msk [vmem:[#allocation2 + $0x10] sm:$0xff] %vm319, %v1397
        %1403 = vst.msk [vmem:[#allocation2 + $0x20] sm:$0xff] %vm319, %v1399
        %v1404 = vld [vmem:[#allocation2] sm:$0xff]
        %v1405 = vld [vmem:[#allocation2 + $0x10] sm:$0xff]
        %v1406 = vld [vmem:[#allocation2 + $0x20] sm:$0xff]
        %v1407 = vld [vmem:[#allocation2 + $0x30] sm:$0xff]
        %v1410 = vrot.slane %v1405, 1
        %v1411 = vrot.slane %v1406, 1
        %v1412 = vsel %vm188, %v1410, %v1411
        %1413 = vrot.lane.b32.xlu0 %v1410, 96
        %v1414 = vpop.permute.xlu0 %1413
        %1415 = vrot.lane.b32.xlu0 %v1412, 96
        %v1416 = vpop.permute.xlu0 %1415
        %1417 = vrot.lane.b32.xlu0 %v1411, 96
        %v1418 = vpop.permute.xlu0 %1417
        %v1423 = vrot.slane %v1405, 2
        %v1424 = vrot.slane %v1406, 2
        %v1425 = vsel %vm202, %v1423, %v1424
        %v1426 = vrot.slane %v1407, 2
        %v1427 = vsel %vm202, %v1424, %v1426
        %1428 = vrot.lane.b32.xlu0 %v1423, 64
        %v1429 = vpop.permute.xlu0 %1428
        %1430 = vrot.lane.b32.xlu0 %v1425, 64
        %v1431 = vpop.permute.xlu0 %1430
        %1432 = vrot.lane.b32.xlu0 %v1427, 64
        %v1433 = vpop.permute.xlu0 %1432
        %v1437 = vsel %vm355, %v1404, %v1414
        %v1438 = vsel %vm355, %v1405, %v1416
        %v1439 = vsel %vm355, %v1406, %v1418
        %v1440 = vsel %vm170, %v1414, %v1429
        %v1441 = vsel %vm170, %v1416, %v1431
        %v1442 = vsel %vm170, %v1418, %v1433
        %s1443 = scalar_lea.vmem %s1, 3456
        %v1444 = vld [vmem:[%s1443] sm:$0xff]
        %v1445 = vld [vmem:[%s1443 + $0x8] sm:$0xff]
        %v1446 = vld [vmem:[%s1443 + $0x10] sm:$0xff]
        %v1447 = vld [vmem:[%s1443 + $0x18] sm:$0xff]
        %v1448 = vld [vmem:[%s1443 + $0x20] sm:$0xff]
        %v1449 = vld [vmem:[%s1443 + $0x28] sm:$0xff]
        %v1450 = vld [vmem:[%s1443 + $0x30] sm:$0xff]
        %v1451 = vld [vmem:[%s1443 + $0x38] sm:$0xff]
        %v1452 = vld [vmem:[%s1443 + $0x40] sm:$0xff]
        %v1453 = vld [vmem:[%s1443 + $0x48] sm:$0xff]
        %v1454 = vld [vmem:[%s1443 + $0x50] sm:$0xff]
        %v1455 = vld [vmem:[%s1443 + $0x58] sm:$0xff]
        %v1456 = vld [vmem:[%s1443 + $0x60] sm:$0xff]
        %v1457 = vld [vmem:[%s1443 + $0x68] sm:$0xff]
        %v1458 = vld [vmem:[%s1443 + $0x70] sm:$0xff]
        %v1459 = vld [vmem:[%s1443 + $0x78] sm:$0xff]
        %v1460 = vld [vmem:[%s1443 + $0x80] sm:$0xff]
        %v1461 = vld [vmem:[%s1443 + $0x88] sm:$0xff]
        %v1462 = vld [vmem:[%s1443 + $0x90] sm:$0xff]
        %v1463 = vld [vmem:[%s1443 + $0x98] sm:$0xff]
        %v1464 = vld [vmem:[%s1443 + $0xa0] sm:$0xff]
        %v1465 = vld [vmem:[%s1443 + $0xa8] sm:$0xff]
        %v1466 = vld [vmem:[%s1443 + $0xb0] sm:$0xff]
        %v1467 = vld [vmem:[%s1443 + $0xb8] sm:$0xff]
        %v1468 = vld [vmem:[%s1443 + $0xc0] sm:$0xff]
        %v1469 = vld [vmem:[%s1443 + $0xc8] sm:$0xff]
        %v1470 = vld [vmem:[%s1443 + $0xd0] sm:$0xff]
        %v1471 = vld [vmem:[%s1443 + $0xd8] sm:$0xff]
        %v1472 = vld [vmem:[%s1443 + $0xe0] sm:$0xff]
        %v1473 = vld [vmem:[%s1443 + $0xe8] sm:$0xff]
        %v1474 = vld [vmem:[%s1443 + $0xf0] sm:$0xff]
        %v1475 = vld [vmem:[%s1443 + $0xf8] sm:$0xff]
        %v1476 = vld [vmem:[%s1443 + $0x100] sm:$0xff]
        %v1477 = vld [vmem:[%s1443 + $0x108] sm:$0xff]
        %v1478 = vld [vmem:[%s1443 + $0x110] sm:$0xff]
        %v1479 = vld [vmem:[%s1443 + $0x118] sm:$0xff]
        %s1480 = scalar_lea.vmem %s2, 6
        %v1481 = vld [vmem:[%s1480] sm:$0x1]
        %v1483 = vperm.slane %v1481, 0
        %v1491 = vrot.slane %v1437, 7
        %v1492 = vrot.slane %v1438, 7
        %v1493 = vsel %vm242, %v1491, %v1492
        %v1494 = vrot.slane %v1440, 7
        %v1495 = vrot.slane %v1441, 7
        %v1496 = vsel %vm242, %v1494, %v1495
        %v1497 = vrot.slane %v1429, 7
        %v1498 = vrot.slane %v1431, 7
        %v1499 = vsel %vm242, %v1497, %v1498
        %v1500 = vrot.slane %v1439, 7
        %v1501 = vsel %vm242, %v1492, %v1500
        %v1502 = vrot.slane %v1442, 7
        %v1503 = vsel %vm242, %v1495, %v1502
        %v1504 = vrot.slane %v1433, 7
        %v1505 = vsel %vm242, %v1498, %v1504
        %v1510 = vsel %vm429, %v1499, 0
        %v1512 = vsel %vm429, %v1505, 0
        %1514 = vmatpush.msra.mxu0 %v1459
        %1515 = vmatpush.msra.mxu0 %v1458
        %1516 = vmatpush.msra.mxu0 %v1457
        %1517 = vmatpush.msra.mxu0 %v1456
        %1518 = vmatpush.msra.mxu0 %v1455
        %1519 = vmatpush.msra.mxu0 %v1454
        %1520 = vmatpush.msra.mxu0 %v1453
        %1521 = vmatpush.msra.mxu0 %v1452
        %1522 = vmatpush.msra.mxu0 %v1451
        %1523 = vmatpush.msra.mxu0 %v1450
        %1524 = vmatpush.msra.mxu0 %v1449
        %1525 = vmatpush.msra.mxu0 %v1448
        %1526 = vmatpush.msra.mxu0 %v1447
        %1527 = vmatpush.msra.mxu0 %v1446
        %1528 = vmatpush.msra.mxu0 %v1445
        %1529 = vmatpush.msra.mxu0 %v1444
        %1530 = vmatmul.f32.gmra.mxu0 %v1493
        %v1531 = vpop.f32.mrf.mxu0
        %v1532 = vadd.f32 %v1483, %v1531
        %1533 = vmatmul.f32.gmra.mxu0 %v1501
        %v1534 = vpop.f32.mrf.mxu0
        %v1535 = vadd.f32 %v1483, %v1534
        %1536 = vdwg.mxu0
        %1537 = vmatpush.msra.mxu0 %v1475
        %1538 = vmatpush.msra.mxu0 %v1474
        %1539 = vmatpush.msra.mxu0 %v1473
        %1540 = vmatpush.msra.mxu0 %v1472
        %1541 = vmatpush.msra.mxu0 %v1471
        %1542 = vmatpush.msra.mxu0 %v1470
        %1543 = vmatpush.msra.mxu0 %v1469
        %1544 = vmatpush.msra.mxu0 %v1468
        %1545 = vmatpush.msra.mxu0 %v1467
        %1546 = vmatpush.msra.mxu0 %v1466
        %1547 = vmatpush.msra.mxu0 %v1465
        %1548 = vmatpush.msra.mxu0 %v1464
        %1549 = vmatpush.msra.mxu0 %v1463
        %1550 = vmatpush.msra.mxu0 %v1462
        %1551 = vmatpush.msra.mxu0 %v1461
        %1552 = vmatpush.msra.mxu0 %v1460
        %1553 = vmatmul.f32.gmra.mxu0 %v1496
        %v1554 = vpop.f32.mrf.mxu0
        %v1555 = vadd.f32 %v1532, %v1554
        %1556 = vmatmul.f32.gmra.mxu0 %v1503
        %v1557 = vpop.f32.mrf.mxu0
        %v1558 = vadd.f32 %v1535, %v1557
        %1559 = vdwg.mxu0
        %1560 = vmatpush.msra.mxu0 0.0
        %1561 = vmatpush.msra.mxu0 0.0
        %1562 = vmatpush.msra.mxu0 0.0
        %1563 = vmatpush.msra.mxu0 0.0
        %1564 = vmatpush.msra.mxu0 0.0
        %1565 = vmatpush.msra.mxu0 0.0
        %1566 = vmatpush.msra.mxu0 0.0
        %1567 = vmatpush.msra.mxu0 0.0
        %1568 = vmatpush.msra.mxu0 0.0
        %1569 = vmatpush.msra.mxu0 0.0
        %1570 = vmatpush.msra.mxu0 0.0
        %1571 = vmatpush.msra.mxu0 0.0
        %1572 = vmatpush.msra.mxu0 %v1479
        %1573 = vmatpush.msra.mxu0 %v1478
        %1574 = vmatpush.msra.mxu0 %v1477
        %1575 = vmatpush.msra.mxu0 %v1476
        %1576 = vmatmul.f32.gmra.mxu0 %v1510
        %v1577 = vpop.f32.mrf.mxu0
        %v1578 = vadd.f32 %v1555, %v1577
        %1579 = vmatmul.f32.gmra.mxu0 %v1512
        %v1580 = vpop.f32.mrf.mxu0
        %v1581 = vadd.f32 %v1558, %v1580
        %1582 = vdwg.mxu0
        %vm1583 = vcmp.ge.f32.partialorder %v1578, 0.0
        %vm1584 = vcmp.ge.f32.partialorder %v1581, 0.0
        %v1585 = vmul.f32 %v1578, 0.2
        %v1586 = vmul.f32 %v1581, 0.2
        %v1587 = vsel %vm1583, %v1578, %v1585
        %v1588 = vsel %vm1584, %v1581, %v1586
        %1591 = vrot.lane.b32.xlu0 %v1587, 96
        %v1592 = vpop.permute.xlu0 %1591
        %1593 = vrot.lane.b32.xlu0 %v1588, 96
        %v1594 = vpop.permute.xlu0 %1593
        %1597 = vst.msk [vmem:[#allocation2 + $0x10] sm:$0xff] %vm517, %v1592
        %1598 = vst.msk [vmem:[#allocation2 + $0x20] sm:$0xff] %vm517, %v1594
        %v1599 = vld [vmem:[#allocation2] sm:$0xff]
        %v1600 = vld [vmem:[#allocation2 + $0x10] sm:$0xff]
        %v1601 = vld [vmem:[#allocation2 + $0x20] sm:$0xff]
        %v1602 = vld [vmem:[#allocation2 + $0x30] sm:$0xff]
        %v1605 = vrot.slane %v1600, 1
        %v1606 = vrot.slane %v1601, 1
        %v1607 = vsel %vm188, %v1605, %v1606
        %v1609 = vrot.slane %v1600, 2
        %v1610 = vrot.slane %v1601, 2
        %v1611 = vsel %vm202, %v1609, %v1610
        %v1612 = vrot.slane %v1602, 2
        %v1613 = vsel %vm202, %v1610, %v1612
        %s1614 = scalar_lea.vmem %s1, 4032
        %v1615 = vld [vmem:[%s1614] sm:$0xff]
        %v1616 = vld [vmem:[%s1614 + $0x8] sm:$0xff]
        %v1617 = vld [vmem:[%s1614 + $0x10] sm:$0xff]
        %v1618 = vld [vmem:[%s1614 + $0x18] sm:$0xff]
        %v1619 = vld [vmem:[%s1614 + $0x20] sm:$0xff]
        %v1620 = vld [vmem:[%s1614 + $0x28] sm:$0xff]
        %v1621 = vld [vmem:[%s1614 + $0x30] sm:$0xff]
        %v1622 = vld [vmem:[%s1614 + $0x38] sm:$0xff]
        %v1623 = vld [vmem:[%s1614 + $0x40] sm:$0xff]
        %v1624 = vld [vmem:[%s1614 + $0x48] sm:$0xff]
        %v1625 = vld [vmem:[%s1614 + $0x50] sm:$0xff]
        %v1626 = vld [vmem:[%s1614 + $0x58] sm:$0xff]
        %v1627 = vld [vmem:[%s1614 + $0x60] sm:$0xff]
        %v1628 = vld [vmem:[%s1614 + $0x68] sm:$0xff]
        %v1629 = vld [vmem:[%s1614 + $0x70] sm:$0xff]
        %v1630 = vld [vmem:[%s1614 + $0x78] sm:$0xff]
        %v1631 = vld [vmem:[%s1614 + $0x80] sm:$0xff]
        %v1632 = vld [vmem:[%s1614 + $0x88] sm:$0xff]
        %v1633 = vld [vmem:[%s1614 + $0x90] sm:$0xff]
        %v1634 = vld [vmem:[%s1614 + $0x98] sm:$0xff]
        %v1635 = vld [vmem:[%s1614 + $0xa0] sm:$0xff]
        %v1636 = vld [vmem:[%s1614 + $0xa8] sm:$0xff]
        %v1637 = vld [vmem:[%s1614 + $0xb0] sm:$0xff]
        %v1638 = vld [vmem:[%s1614 + $0xb8] sm:$0xff]
        %v1639 = vld [vmem:[%s1614 + $0xc0] sm:$0xff]
        %v1640 = vld [vmem:[%s1614 + $0xc8] sm:$0xff]
        %v1641 = vld [vmem:[%s1614 + $0xd0] sm:$0xff]
        %v1642 = vld [vmem:[%s1614 + $0xd8] sm:$0xff]
        %v1643 = vld [vmem:[%s1614 + $0xe0] sm:$0xff]
        %v1644 = vld [vmem:[%s1614 + $0xe8] sm:$0xff]
        %v1645 = vld [vmem:[%s1614 + $0xf0] sm:$0xff]
        %v1646 = vld [vmem:[%s1614 + $0xf8] sm:$0xff]
        %v1647 = vld [vmem:[%s1614 + $0x100] sm:$0xff]
        %v1648 = vld [vmem:[%s1614 + $0x108] sm:$0xff]
        %v1649 = vld [vmem:[%s1614 + $0x110] sm:$0xff]
        %v1650 = vld [vmem:[%s1614 + $0x118] sm:$0xff]
        %v1651 = vld [vmem:[%s1614 + $0x120] sm:$0xff]
        %v1652 = vld [vmem:[%s1614 + $0x128] sm:$0xff]
        %v1653 = vld [vmem:[%s1614 + $0x130] sm:$0xff]
        %v1654 = vld [vmem:[%s1614 + $0x138] sm:$0xff]
        %v1655 = vld [vmem:[%s1614 + $0x140] sm:$0xff]
        %v1656 = vld [vmem:[%s1614 + $0x148] sm:$0xff]
        %v1657 = vld [vmem:[%s1614 + $0x150] sm:$0xff]
        %v1658 = vld [vmem:[%s1614 + $0x158] sm:$0xff]
        %v1659 = vld [vmem:[%s1614 + $0x160] sm:$0xff]
        %v1660 = vld [vmem:[%s1614 + $0x168] sm:$0xff]
        %v1661 = vld [vmem:[%s1614 + $0x170] sm:$0xff]
        %v1662 = vld [vmem:[%s1614 + $0x178] sm:$0xff]
        %s1663 = scalar_lea.vmem %s2, 7
        %v1664 = vld [vmem:[%s1663] sm:$0x1]
        %v1666 = vperm.slane %v1664, 0
        %v1669 = vrot.slane %v1599, 7
        %v1670 = vrot.slane %v1600, 7
        %v1671 = vsel %vm242, %v1669, %v1670
        %v1672 = vrot.slane %v1605, 7
        %v1673 = vrot.slane %v1607, 7
        %v1674 = vsel %vm242, %v1672, %v1673
        %v1675 = vrot.slane %v1609, 7
        %v1676 = vrot.slane %v1611, 7
        %v1677 = vsel %vm242, %v1675, %v1676
        %v1678 = vrot.slane %v1601, 7
        %v1679 = vsel %vm242, %v1670, %v1678
        %v1680 = vrot.slane %v1606, 7
        %v1681 = vsel %vm242, %v1673, %v1680
        %v1682 = vrot.slane %v1613, 7
        %v1683 = vsel %vm242, %v1676, %v1682
        %1690 = vmatpush.msra.mxu0 %v1630
        %1691 = vmatpush.msra.mxu0 %v1629
        %1692 = vmatpush.msra.mxu0 %v1628
        %1693 = vmatpush.msra.mxu0 %v1627
        %1694 = vmatpush.msra.mxu0 %v1626
        %1695 = vmatpush.msra.mxu0 %v1625
        %1696 = vmatpush.msra.mxu0 %v1624
        %1697 = vmatpush.msra.mxu0 %v1623
        %1698 = vmatpush.msra.mxu0 %v1622
        %1699 = vmatpush.msra.mxu0 %v1621
        %1700 = vmatpush.msra.mxu0 %v1620
        %1701 = vmatpush.msra.mxu0 %v1619
        %1702 = vmatpush.msra.mxu0 %v1618
        %1703 = vmatpush.msra.mxu0 %v1617
        %1704 = vmatpush.msra.mxu0 %v1616
        %1705 = vmatpush.msra.mxu0 %v1615
        %1706 = vmatmul.f32.gmra.mxu0 %v1671
        %v1707 = vpop.f32.mrf.mxu0
        %v1708 = vadd.f32 %v1666, %v1707
        %1709 = vmatmul.f32.gmra.mxu0 %v1679
        %v1710 = vpop.f32.mrf.mxu0
        %v1711 = vadd.f32 %v1666, %v1710
        %1712 = vdwg.mxu0
        %1713 = vmatpush.msra.mxu0 %v1646
        %1714 = vmatpush.msra.mxu0 %v1645
        %1715 = vmatpush.msra.mxu0 %v1644
        %1716 = vmatpush.msra.mxu0 %v1643
        %1717 = vmatpush.msra.mxu0 %v1642
        %1718 = vmatpush.msra.mxu0 %v1641
        %1719 = vmatpush.msra.mxu0 %v1640
        %1720 = vmatpush.msra.mxu0 %v1639
        %1721 = vmatpush.msra.mxu0 %v1638
        %1722 = vmatpush.msra.mxu0 %v1637
        %1723 = vmatpush.msra.mxu0 %v1636
        %1724 = vmatpush.msra.mxu0 %v1635
        %1725 = vmatpush.msra.mxu0 %v1634
        %1726 = vmatpush.msra.mxu0 %v1633
        %1727 = vmatpush.msra.mxu0 %v1632
        %1728 = vmatpush.msra.mxu0 %v1631
        %1729 = vmatmul.f32.gmra.mxu0 %v1674
        %v1730 = vpop.f32.mrf.mxu0
        %v1731 = vadd.f32 %v1708, %v1730
        %1732 = vmatmul.f32.gmra.mxu0 %v1681
        %v1733 = vpop.f32.mrf.mxu0
        %v1734 = vadd.f32 %v1711, %v1733
        %1735 = vdwg.mxu0
        %1736 = vmatpush.msra.mxu0 %v1662
        %1737 = vmatpush.msra.mxu0 %v1661
        %1738 = vmatpush.msra.mxu0 %v1660
        %1739 = vmatpush.msra.mxu0 %v1659
        %1740 = vmatpush.msra.mxu0 %v1658
        %1741 = vmatpush.msra.mxu0 %v1657
        %1742 = vmatpush.msra.mxu0 %v1656
        %1743 = vmatpush.msra.mxu0 %v1655
        %1744 = vmatpush.msra.mxu0 %v1654
        %1745 = vmatpush.msra.mxu0 %v1653
        %1746 = vmatpush.msra.mxu0 %v1652
        %1747 = vmatpush.msra.mxu0 %v1651
        %1748 = vmatpush.msra.mxu0 %v1650
        %1749 = vmatpush.msra.mxu0 %v1649
        %1750 = vmatpush.msra.mxu0 %v1648
        %1751 = vmatpush.msra.mxu0 %v1647
        %1752 = vmatmul.f32.gmra.mxu0 %v1677
        %v1753 = vpop.f32.mrf.mxu0
        %v1754 = vadd.f32 %v1731, %v1753
        %1755 = vmatmul.f32.gmra.mxu0 %v1683
        %v1756 = vpop.f32.mrf.mxu0
        %v1757 = vadd.f32 %v1734, %v1756
        %1758 = vdwg.mxu0
        %vm1759 = vcmp.ge.f32.partialorder %v1754, 0.0
        %vm1760 = vcmp.ge.f32.partialorder %v1757, 0.0
        %v1761 = vmul.f32 %v1754, 0.2
        %v1762 = vmul.f32 %v1757, 0.2
        %v1763 = vsel %vm1759, %v1754, %v1761
        %v1764 = vsel %vm1760, %v1757, %v1762
        %1765 = vst.msk [vmem:[#allocation2 + $0x18] sm:$0xff] %vm429, %v1763
        %1766 = vst.msk [vmem:[#allocation2 + $0x28] sm:$0xff] %vm429, %v1764
        %v1767 = vld [vmem:[#allocation2] sm:$0xff]
        %v1768 = vld [vmem:[#allocation2 + $0x8] sm:$0xff]
        %v1769 = vld [vmem:[#allocation2 + $0x10] sm:$0xff]
        %v1770 = vld [vmem:[#allocation2 + $0x18] sm:$0xff]
        %v1771 = vld [vmem:[#allocation2 + $0x20] sm:$0xff]
        %v1772 = vld [vmem:[#allocation2 + $0x28] sm:$0xff]
        %v1773 = vld [vmem:[#allocation2 + $0x30] sm:$0xff]
        %v1774 = vld [vmem:[#allocation2 + $0x38] sm:$0xff]
        %v1779 = vrot.slane %v1769, 1
        %v1780 = vrot.slane %v1770, 1
        %v1781 = vrot.slane %v1771, 1
        %v1782 = vsel %vm188, %v1779, %v1781
        %v1783 = vrot.slane %v1772, 1
        %v1784 = vsel %vm188, %v1780, %v1783
        %1785 = vrot.lane.b32.xlu0 %v1779, 32
        %v1786 = vpop.permute.xlu0 %1785
        %1787 = vrot.lane.b32.xlu0 %v1780, 32
        %v1788 = vpop.permute.xlu0 %1787
        %1789 = vrot.lane.b32.xlu0 %v1782, 32
        %v1790 = vpop.permute.xlu0 %1789
        %1791 = vrot.lane.b32.xlu0 %v1784, 32
        %v1792 = vpop.permute.xlu0 %1791
        %1793 = vrot.lane.b32.xlu0 %v1781, 32
        %v1794 = vpop.permute.xlu0 %1793
        %1795 = vrot.lane.b32.xlu0 %v1783, 32
        %v1796 = vpop.permute.xlu0 %1795
        %v1797 = vsel %vm429, %v1786, %v1788
        %v1798 = vsel %vm429, %v1790, %v1792
        %v1799 = vsel %vm429, %v1794, %v1796
        %v1808 = vrot.slane %v1769, 2
        %v1809 = vrot.slane %v1770, 2
        %v1810 = vrot.slane %v1771, 2
        %v1811 = vsel %vm202, %v1808, %v1810
        %v1812 = vrot.slane %v1772, 2
        %v1813 = vsel %vm202, %v1809, %v1812
        %v1814 = vrot.slane %v1773, 2
        %v1815 = vsel %vm202, %v1810, %v1814
        %v1816 = vrot.slane %v1774, 2
        %v1817 = vsel %vm202, %v1812, %v1816
        %1818 = vrot.lane.b32.xlu0 %v1808, 64
        %v1819 = vpop.permute.xlu0 %1818
        %1820 = vrot.lane.b32.xlu0 %v1809, 64
        %v1821 = vpop.permute.xlu0 %1820
        %1822 = vrot.lane.b32.xlu0 %v1811, 64
        %v1823 = vpop.permute.xlu0 %1822
        %1824 = vrot.lane.b32.xlu0 %v1813, 64
        %v1825 = vpop.permute.xlu0 %1824
        %1826 = vrot.lane.b32.xlu0 %v1815, 64
        %v1827 = vpop.permute.xlu0 %1826
        %1828 = vrot.lane.b32.xlu0 %v1817, 64
        %v1829 = vpop.permute.xlu0 %1828
        %v1830 = vsel %vm170, %v1819, %v1821
        %v1831 = vsel %vm170, %v1823, %v1825
        %v1832 = vsel %vm170, %v1827, %v1829
        %v1836 = vsel %vm429, %v1768, %v1786
        %v1837 = vsel %vm429, %v1770, %v1790
        %v1838 = vsel %vm429, %v1772, %v1794
        %v1839 = vsel %vm170, %v1797, %v1819
        %v1840 = vsel %vm170, %v1798, %v1823
        %v1841 = vsel %vm170, %v1799, %v1827
        %s1842 = scalar_lea.vmem %s1, 4608
        %v1843 = vld [vmem:[%s1842] sm:$0xff]
        %v1844 = vld [vmem:[%s1842 + $0x8] sm:$0xff]
        %v1845 = vld [vmem:[%s1842 + $0x10] sm:$0xff]
        %v1846 = vld [vmem:[%s1842 + $0x18] sm:$0xff]
        %v1847 = vld [vmem:[%s1842 + $0x20] sm:$0xff]
        %v1848 = vld [vmem:[%s1842 + $0x28] sm:$0xff]
        %v1849 = vld [vmem:[%s1842 + $0x30] sm:$0xff]
        %v1850 = vld [vmem:[%s1842 + $0x38] sm:$0xff]
        %v1851 = vld [vmem:[%s1842 + $0x40] sm:$0xff]
        %v1852 = vld [vmem:[%s1842 + $0x48] sm:$0xff]
        %v1853 = vld [vmem:[%s1842 + $0x50] sm:$0xff]
        %v1854 = vld [vmem:[%s1842 + $0x58] sm:$0xff]
        %v1855 = vld [vmem:[%s1842 + $0x60] sm:$0xff]
        %v1856 = vld [vmem:[%s1842 + $0x68] sm:$0xff]
        %v1857 = vld [vmem:[%s1842 + $0x70] sm:$0xff]
        %v1858 = vld [vmem:[%s1842 + $0x78] sm:$0xff]
        %v1859 = vld [vmem:[%s1842 + $0x80] sm:$0xff]
        %v1860 = vld [vmem:[%s1842 + $0x88] sm:$0xff]
        %v1861 = vld [vmem:[%s1842 + $0x90] sm:$0xff]
        %v1862 = vld [vmem:[%s1842 + $0x98] sm:$0xff]
        %v1863 = vld [vmem:[%s1842 + $0xa0] sm:$0xff]
        %v1864 = vld [vmem:[%s1842 + $0xa8] sm:$0xff]
        %v1865 = vld [vmem:[%s1842 + $0xb0] sm:$0xff]
        %v1866 = vld [vmem:[%s1842 + $0xb8] sm:$0xff]
        %v1867 = vld [vmem:[%s1842 + $0xc0] sm:$0xff]
        %v1868 = vld [vmem:[%s1842 + $0xc8] sm:$0xff]
        %v1869 = vld [vmem:[%s1842 + $0xd0] sm:$0xff]
        %v1870 = vld [vmem:[%s1842 + $0xd8] sm:$0xff]
        %v1871 = vld [vmem:[%s1842 + $0xe0] sm:$0xff]
        %v1872 = vld [vmem:[%s1842 + $0xe8] sm:$0xff]
        %v1873 = vld [vmem:[%s1842 + $0xf0] sm:$0xff]
        %v1874 = vld [vmem:[%s1842 + $0xf8] sm:$0xff]
        %v1875 = vld [vmem:[%s1842 + $0x100] sm:$0xff]
        %v1876 = vld [vmem:[%s1842 + $0x108] sm:$0xff]
        %v1877 = vld [vmem:[%s1842 + $0x110] sm:$0xff]
        %v1878 = vld [vmem:[%s1842 + $0x118] sm:$0xff]
        %v1879 = vld [vmem:[%s1842 + $0x120] sm:$0xff]
        %v1880 = vld [vmem:[%s1842 + $0x128] sm:$0xff]
        %v1881 = vld [vmem:[%s1842 + $0x130] sm:$0xff]
        %v1882 = vld [vmem:[%s1842 + $0x138] sm:$0xff]
        %v1883 = vld [vmem:[%s1842 + $0x140] sm:$0xff]
        %v1884 = vld [vmem:[%s1842 + $0x148] sm:$0xff]
        %v1885 = vld [vmem:[%s1842 + $0x150] sm:$0xff]
        %v1886 = vld [vmem:[%s1842 + $0x158] sm:$0xff]
        %v1887 = vld [vmem:[%s1842 + $0x160] sm:$0xff]
        %v1888 = vld [vmem:[%s1842 + $0x168] sm:$0xff]
        %v1889 = vld [vmem:[%s1842 + $0x170] sm:$0xff]
        %v1890 = vld [vmem:[%s1842 + $0x178] sm:$0xff]
        %v1891 = vld [vmem:[%s1842 + $0x180] sm:$0xff]
        %v1892 = vld [vmem:[%s1842 + $0x188] sm:$0xff]
        %v1893 = vld [vmem:[%s1842 + $0x190] sm:$0xff]
        %v1894 = vld [vmem:[%s1842 + $0x198] sm:$0xff]
        %v1895 = vld [vmem:[%s1842 + $0x1a0] sm:$0xff]
        %v1896 = vld [vmem:[%s1842 + $0x1a8] sm:$0xff]
        %v1897 = vld [vmem:[%s1842 + $0x1b0] sm:$0xff]
        %v1898 = vld [vmem:[%s1842 + $0x1b8] sm:$0xff]
        %v1899 = vld [vmem:[%s1842 + $0x1c0] sm:$0xff]
        %v1900 = vld [vmem:[%s1842 + $0x1c8] sm:$0xff]
        %v1901 = vld [vmem:[%s1842 + $0x1d0] sm:$0xff]
        %v1902 = vld [vmem:[%s1842 + $0x1d8] sm:$0xff]
        %s1903 = scalar_lea.vmem %s2, 8
        %v1904 = vld [vmem:[%s1903] sm:$0x1]
        %v1906 = vperm.slane %v1904, 0
        %v1915 = vrot.slane %v1767, 7
        %v1916 = vrot.slane %v1769, 7
        %v1917 = vsel %vm242, %v1915, %v1916
        %v1918 = vrot.slane %v1836, 7
        %v1919 = vrot.slane %v1837, 7
        %v1920 = vsel %vm242, %v1918, %v1919
        %v1921 = vrot.slane %v1839, 7
        %v1922 = vrot.slane %v1840, 7
        %v1923 = vsel %vm242, %v1921, %v1922
        %v1924 = vrot.slane %v1830, 7
        %v1925 = vrot.slane %v1831, 7
        %v1926 = vsel %vm242, %v1924, %v1925
        %v1927 = vrot.slane %v1771, 7
        %v1928 = vsel %vm242, %v1916, %v1927
        %v1929 = vrot.slane %v1838, 7
        %v1930 = vsel %vm242, %v1919, %v1929
        %v1931 = vrot.slane %v1841, 7
        %v1932 = vsel %vm242, %v1922, %v1931
        %v1933 = vrot.slane %v1832, 7
        %v1934 = vsel %vm242, %v1925, %v1933
        %v1941 = vsel %vm355, %v1926, 0
        %v1943 = vsel %vm355, %v1934, 0
        %1945 = vmatpush.msra.mxu0 %v1858
        %1946 = vmatpush.msra.mxu0 %v1857
        %1947 = vmatpush.msra.mxu0 %v1856
        %1948 = vmatpush.msra.mxu0 %v1855
        %1949 = vmatpush.msra.mxu0 %v1854
        %1950 = vmatpush.msra.mxu0 %v1853
        %1951 = vmatpush.msra.mxu0 %v1852
        %1952 = vmatpush.msra.mxu0 %v1851
        %1953 = vmatpush.msra.mxu0 %v1850
        %1954 = vmatpush.msra.mxu0 %v1849
        %1955 = vmatpush.msra.mxu0 %v1848
        %1956 = vmatpush.msra.mxu0 %v1847
        %1957 = vmatpush.msra.mxu0 %v1846
        %1958 = vmatpush.msra.mxu0 %v1845
        %1959 = vmatpush.msra.mxu0 %v1844
        %1960 = vmatpush.msra.mxu0 %v1843
        %1961 = vmatmul.f32.gmra.mxu0 %v1917
        %v1962 = vpop.f32.mrf.mxu0
        %v1963 = vadd.f32 %v1906, %v1962
        %1964 = vmatmul.f32.gmra.mxu0 %v1928
        %v1965 = vpop.f32.mrf.mxu0
        %v1966 = vadd.f32 %v1906, %v1965
        %1967 = vdwg.mxu0
        %1968 = vmatpush.msra.mxu0 %v1874
        %1969 = vmatpush.msra.mxu0 %v1873
        %1970 = vmatpush.msra.mxu0 %v1872
        %1971 = vmatpush.msra.mxu0 %v1871
        %1972 = vmatpush.msra.mxu0 %v1870
        %1973 = vmatpush.msra.mxu0 %v1869
        %1974 = vmatpush.msra.mxu0 %v1868
        %1975 = vmatpush.msra.mxu0 %v1867
        %1976 = vmatpush.msra.mxu0 %v1866
        %1977 = vmatpush.msra.mxu0 %v1865
        %1978 = vmatpush.msra.mxu0 %v1864
        %1979 = vmatpush.msra.mxu0 %v1863
        %1980 = vmatpush.msra.mxu0 %v1862
        %1981 = vmatpush.msra.mxu0 %v1861
        %1982 = vmatpush.msra.mxu0 %v1860
        %1983 = vmatpush.msra.mxu0 %v1859
        %1984 = vmatmul.f32.gmra.mxu0 %v1920
        %v1985 = vpop.f32.mrf.mxu0
        %v1986 = vadd.f32 %v1963, %v1985
        %1987 = vmatmul.f32.gmra.mxu0 %v1930
        %v1988 = vpop.f32.mrf.mxu0
        %v1989 = vadd.f32 %v1966, %v1988
        %1990 = vdwg.mxu0
        %1991 = vmatpush.msra.mxu0 %v1890
        %1992 = vmatpush.msra.mxu0 %v1889
        %1993 = vmatpush.msra.mxu0 %v1888
        %1994 = vmatpush.msra.mxu0 %v1887
        %1995 = vmatpush.msra.mxu0 %v1886
        %1996 = vmatpush.msra.mxu0 %v1885
        %1997 = vmatpush.msra.mxu0 %v1884
        %1998 = vmatpush.msra.mxu0 %v1883
        %1999 = vmatpush.msra.mxu0 %v1882
        %2000 = vmatpush.msra.mxu0 %v1881
        %2001 = vmatpush.msra.mxu0 %v1880
        %2002 = vmatpush.msra.mxu0 %v1879
        %2003 = vmatpush.msra.mxu0 %v1878
        %2004 = vmatpush.msra.mxu0 %v1877
        %2005 = vmatpush.msra.mxu0 %v1876
        %2006 = vmatpush.msra.mxu0 %v1875
        %2007 = vmatmul.f32.gmra.mxu0 %v1923
        %v2008 = vpop.f32.mrf.mxu0
        %v2009 = vadd.f32 %v1986, %v2008
        %2010 = vmatmul.f32.gmra.mxu0 %v1932
        %v2011 = vpop.f32.mrf.mxu0
        %v2012 = vadd.f32 %v1989, %v2011
        %2013 = vdwg.mxu0
        %2014 = vmatpush.msra.mxu0 0.0
        %2015 = vmatpush.msra.mxu0 0.0
        %2016 = vmatpush.msra.mxu0 0.0
        %2017 = vmatpush.msra.mxu0 0.0
        %2018 = vmatpush.msra.mxu0 %v1902
        %2019 = vmatpush.msra.mxu0 %v1901
        %2020 = vmatpush.msra.mxu0 %v1900
        %2021 = vmatpush.msra.mxu0 %v1899
        %2022 = vmatpush.msra.mxu0 %v1898
        %2023 = vmatpush.msra.mxu0 %v1897
        %2024 = vmatpush.msra.mxu0 %v1896
        %2025 = vmatpush.msra.mxu0 %v1895
        %2026 = vmatpush.msra.mxu0 %v1894
        %2027 = vmatpush.msra.mxu0 %v1893
        %2028 = vmatpush.msra.mxu0 %v1892
        %2029 = vmatpush.msra.mxu0 %v1891
        %2030 = vmatmul.f32.gmra.mxu0 %v1941
        %v2031 = vpop.f32.mrf.mxu0
        %v2032 = vadd.f32 %v2009, %v2031
        %2033 = vmatmul.f32.gmra.mxu0 %v1943
        %v2034 = vpop.f32.mrf.mxu0
        %v2035 = vadd.f32 %v2012, %v2034
        %2036 = vdwg.mxu0
        %vm2037 = vcmp.ge.f32.partialorder %v2032, 0.0
        %vm2038 = vcmp.ge.f32.partialorder %v2035, 0.0
        %v2039 = vmul.f32 %v2032, 0.2
        %v2040 = vmul.f32 %v2035, 0.2
        %v2041 = vsel %vm2037, %v2032, %v2039
        %v2042 = vsel %vm2038, %v2035, %v2040
        %2045 = vrot.lane.b32.xlu0 %v2041, 32
        %v2046 = vpop.permute.xlu0 %2045
        %2047 = vrot.lane.b32.xlu0 %v2042, 32
        %v2048 = vpop.permute.xlu0 %2047
        %2051 = vst.msk [vmem:[#allocation2 + $0x18] sm:$0xff] %vm972, %v2046
        %2052 = vst.msk [vmem:[#allocation2 + $0x28] sm:$0xff] %vm972, %v2048
        %v2053 = vld [vmem:[#allocation2] sm:$0xff]
        %v2054 = vld [vmem:[#allocation2 + $0x8] sm:$0xff]
        %v2055 = vld [vmem:[#allocation2 + $0x10] sm:$0xff]
        %v2056 = vld [vmem:[#allocation2 + $0x18] sm:$0xff]
        %v2057 = vld [vmem:[#allocation2 + $0x20] sm:$0xff]
        %v2058 = vld [vmem:[#allocation2 + $0x28] sm:$0xff]
        %v2059 = vld [vmem:[#allocation2 + $0x30] sm:$0xff]
        %v2060 = vld [vmem:[#allocation2 + $0x38] sm:$0xff]
        %v2065 = vrot.slane %v2055, 1
        %v2066 = vrot.slane %v2056, 1
        %v2067 = vrot.slane %v2057, 1
        %v2068 = vsel %vm188, %v2065, %v2067
        %v2069 = vrot.slane %v2058, 1
        %v2070 = vsel %vm188, %v2066, %v2069
        %2071 = vrot.lane.b32.xlu0 %v2065, 64
        %v2072 = vpop.permute.xlu0 %2071
        %2073 = vrot.lane.b32.xlu0 %v2066, 64
        %v2074 = vpop.permute.xlu0 %2073
        %2075 = vrot.lane.b32.xlu0 %v2068, 64
        %v2076 = vpop.permute.xlu0 %2075
        %2077 = vrot.lane.b32.xlu0 %v2070, 64
        %v2078 = vpop.permute.xlu0 %2077
        %2079 = vrot.lane.b32.xlu0 %v2067, 64
        %v2080 = vpop.permute.xlu0 %2079
        %2081 = vrot.lane.b32.xlu0 %v2069, 64
        %v2082 = vpop.permute.xlu0 %2081
        %v2083 = vsel %vm170, %v2072, %v2074
        %v2084 = vsel %vm170, %v2076, %v2078
        %v2085 = vsel %vm170, %v2080, %v2082
        %v2091 = vrot.slane %v2055, 2
        %v2092 = vrot.slane %v2056, 2
        %v2093 = vrot.slane %v2057, 2
        %v2094 = vsel %vm202, %v2091, %v2093
        %v2095 = vrot.slane %v2058, 2
        %v2096 = vsel %vm202, %v2092, %v2095
        %v2097 = vrot.slane %v2059, 2
        %v2098 = vsel %vm202, %v2093, %v2097
        %v2099 = vrot.slane %v2060, 2
        %v2100 = vsel %vm202, %v2095, %v2099
        %v2101 = vsel %vm170, %v2054, %v2072
        %v2102 = vsel %vm170, %v2056, %v2076
        %v2103 = vsel %vm170, %v2058, %v2080
        %s2104 = scalar_lea.vmem %s1, 5184
        %v2105 = vld [vmem:[%s2104] sm:$0xff]
        %v2106 = vld [vmem:[%s2104 + $0x8] sm:$0xff]
        %v2107 = vld [vmem:[%s2104 + $0x10] sm:$0xff]
        %v2108 = vld [vmem:[%s2104 + $0x18] sm:$0xff]
        %v2109 = vld [vmem:[%s2104 + $0x20] sm:$0xff]
        %v2110 = vld [vmem:[%s2104 + $0x28] sm:$0xff]
        %v2111 = vld [vmem:[%s2104 + $0x30] sm:$0xff]
        %v2112 = vld [vmem:[%s2104 + $0x38] sm:$0xff]
        %v2113 = vld [vmem:[%s2104 + $0x40] sm:$0xff]
        %v2114 = vld [vmem:[%s2104 + $0x48] sm:$0xff]
        %v2115 = vld [vmem:[%s2104 + $0x50] sm:$0xff]
        %v2116 = vld [vmem:[%s2104 + $0x58] sm:$0xff]
        %v2117 = vld [vmem:[%s2104 + $0x60] sm:$0xff]
        %v2118 = vld [vmem:[%s2104 + $0x68] sm:$0xff]
        %v2119 = vld [vmem:[%s2104 + $0x70] sm:$0xff]
        %v2120 = vld [vmem:[%s2104 + $0x78] sm:$0xff]
        %v2121 = vld [vmem:[%s2104 + $0x80] sm:$0xff]
        %v2122 = vld [vmem:[%s2104 + $0x88] sm:$0xff]
        %v2123 = vld [vmem:[%s2104 + $0x90] sm:$0xff]
        %v2124 = vld [vmem:[%s2104 + $0x98] sm:$0xff]
        %v2125 = vld [vmem:[%s2104 + $0xa0] sm:$0xff]
        %v2126 = vld [vmem:[%s2104 + $0xa8] sm:$0xff]
        %v2127 = vld [vmem:[%s2104 + $0xb0] sm:$0xff]
        %v2128 = vld [vmem:[%s2104 + $0xb8] sm:$0xff]
        %v2129 = vld [vmem:[%s2104 + $0xc0] sm:$0xff]
        %v2130 = vld [vmem:[%s2104 + $0xc8] sm:$0xff]
        %v2131 = vld [vmem:[%s2104 + $0xd0] sm:$0xff]
        %v2132 = vld [vmem:[%s2104 + $0xd8] sm:$0xff]
        %v2133 = vld [vmem:[%s2104 + $0xe0] sm:$0xff]
        %v2134 = vld [vmem:[%s2104 + $0xe8] sm:$0xff]
        %v2135 = vld [vmem:[%s2104 + $0xf0] sm:$0xff]
        %v2136 = vld [vmem:[%s2104 + $0xf8] sm:$0xff]
        %v2137 = vld [vmem:[%s2104 + $0x100] sm:$0xff]
        %v2138 = vld [vmem:[%s2104 + $0x108] sm:$0xff]
        %v2139 = vld [vmem:[%s2104 + $0x110] sm:$0xff]
        %v2140 = vld [vmem:[%s2104 + $0x118] sm:$0xff]
        %v2141 = vld [vmem:[%s2104 + $0x120] sm:$0xff]
        %v2142 = vld [vmem:[%s2104 + $0x128] sm:$0xff]
        %v2143 = vld [vmem:[%s2104 + $0x130] sm:$0xff]
        %v2144 = vld [vmem:[%s2104 + $0x138] sm:$0xff]
        %v2145 = vld [vmem:[%s2104 + $0x140] sm:$0xff]
        %v2146 = vld [vmem:[%s2104 + $0x148] sm:$0xff]
        %v2147 = vld [vmem:[%s2104 + $0x150] sm:$0xff]
        %v2148 = vld [vmem:[%s2104 + $0x158] sm:$0xff]
        %v2149 = vld [vmem:[%s2104 + $0x160] sm:$0xff]
        %v2150 = vld [vmem:[%s2104 + $0x168] sm:$0xff]
        %v2151 = vld [vmem:[%s2104 + $0x170] sm:$0xff]
        %v2152 = vld [vmem:[%s2104 + $0x178] sm:$0xff]
        %v2153 = vld [vmem:[%s2104 + $0x180] sm:$0xff]
        %v2154 = vld [vmem:[%s2104 + $0x188] sm:$0xff]
        %v2155 = vld [vmem:[%s2104 + $0x190] sm:$0xff]
        %v2156 = vld [vmem:[%s2104 + $0x198] sm:$0xff]
        %v2157 = vld [vmem:[%s2104 + $0x1a0] sm:$0xff]
        %v2158 = vld [vmem:[%s2104 + $0x1a8] sm:$0xff]
        %v2159 = vld [vmem:[%s2104 + $0x1b0] sm:$0xff]
        %v2160 = vld [vmem:[%s2104 + $0x1b8] sm:$0xff]
        %v2161 = vld [vmem:[%s2104 + $0x1c0] sm:$0xff]
        %v2162 = vld [vmem:[%s2104 + $0x1c8] sm:$0xff]
        %v2163 = vld [vmem:[%s2104 + $0x1d0] sm:$0xff]
        %v2164 = vld [vmem:[%s2104 + $0x1d8] sm:$0xff]
        %v2165 = vld [vmem:[%s2104 + $0x1e0] sm:$0xff]
        %v2166 = vld [vmem:[%s2104 + $0x1e8] sm:$0xff]
        %v2167 = vld [vmem:[%s2104 + $0x1f0] sm:$0xff]
        %v2168 = vld [vmem:[%s2104 + $0x1f8] sm:$0xff]
        %v2169 = vld [vmem:[%s2104 + $0x200] sm:$0xff]
        %v2170 = vld [vmem:[%s2104 + $0x208] sm:$0xff]
        %v2171 = vld [vmem:[%s2104 + $0x210] sm:$0xff]
        %v2172 = vld [vmem:[%s2104 + $0x218] sm:$0xff]
        %v2173 = vld [vmem:[%s2104 + $0x220] sm:$0xff]
        %v2174 = vld [vmem:[%s2104 + $0x228] sm:$0xff]
        %v2175 = vld [vmem:[%s2104 + $0x230] sm:$0xff]
        %v2176 = vld [vmem:[%s2104 + $0x238] sm:$0xff]
        %s2177 = scalar_lea.vmem %s2, 9
        %v2178 = vld [vmem:[%s2177] sm:$0x1]
        %v2180 = vperm.slane %v2178, 0
        %v2186 = vrot.slane %v2053, 7
        %v2187 = vrot.slane %v2055, 7
        %v2188 = vsel %vm242, %v2186, %v2187
        %v2189 = vrot.slane %v2101, 7
        %v2190 = vrot.slane %v2102, 7
        %v2191 = vsel %vm242, %v2189, %v2190
        %v2192 = vrot.slane %v2083, 7
        %v2193 = vrot.slane %v2084, 7
        %v2194 = vsel %vm242, %v2192, %v2193
        %v2195 = vrot.slane %v2091, 7
        %v2196 = vrot.slane %v2094, 7
        %v2197 = vsel %vm242, %v2195, %v2196
        %v2198 = vrot.slane %v2092, 7
        %v2199 = vrot.slane %v2096, 7
        %v2200 = vsel %vm242, %v2198, %v2199
        %v2201 = vrot.slane %v2057, 7
        %v2202 = vsel %vm242, %v2187, %v2201
        %v2203 = vrot.slane %v2103, 7
        %v2204 = vsel %vm242, %v2190, %v2203
        %v2205 = vrot.slane %v2085, 7
        %v2206 = vsel %vm242, %v2193, %v2205
        %v2207 = vrot.slane %v2098, 7
        %v2208 = vsel %vm242, %v2196, %v2207
        %v2209 = vrot.slane %v2100, 7
        %v2210 = vsel %vm242, %v2199, %v2209
        %v2219 = vsel %vm170, %v2200, 0
        %v2221 = vsel %vm170, %v2210, 0
        %2223 = vmatpush.msra.mxu0 %v2120
        %2224 = vmatpush.msra.mxu0 %v2119
        %2225 = vmatpush.msra.mxu0 %v2118
        %2226 = vmatpush.msra.mxu0 %v2117
        %2227 = vmatpush.msra.mxu0 %v2116
        %2228 = vmatpush.msra.mxu0 %v2115
        %2229 = vmatpush.msra.mxu0 %v2114
        %2230 = vmatpush.msra.mxu0 %v2113
        %2231 = vmatpush.msra.mxu0 %v2112
        %2232 = vmatpush.msra.mxu0 %v2111
        %2233 = vmatpush.msra.mxu0 %v2110
        %2234 = vmatpush.msra.mxu0 %v2109
        %2235 = vmatpush.msra.mxu0 %v2108
        %2236 = vmatpush.msra.mxu0 %v2107
        %2237 = vmatpush.msra.mxu0 %v2106
        %2238 = vmatpush.msra.mxu0 %v2105
        %2239 = vmatmul.f32.gmra.mxu0 %v2188
        %v2240 = vpop.f32.mrf.mxu0
        %v2241 = vadd.f32 %v2180, %v2240
        %2242 = vmatmul.f32.gmra.mxu0 %v2202
        %v2243 = vpop.f32.mrf.mxu0
        %v2244 = vadd.f32 %v2180, %v2243
        %2245 = vdwg.mxu0
        %2246 = vmatpush.msra.mxu0 %v2136
        %2247 = vmatpush.msra.mxu0 %v2135
        %2248 = vmatpush.msra.mxu0 %v2134
        %2249 = vmatpush.msra.mxu0 %v2133
        %2250 = vmatpush.msra.mxu0 %v2132
        %2251 = vmatpush.msra.mxu0 %v2131
        %2252 = vmatpush.msra.mxu0 %v2130
        %2253 = vmatpush.msra.mxu0 %v2129
        %2254 = vmatpush.msra.mxu0 %v2128
        %2255 = vmatpush.msra.mxu0 %v2127
        %2256 = vmatpush.msra.mxu0 %v2126
        %2257 = vmatpush.msra.mxu0 %v2125
        %2258 = vmatpush.msra.mxu0 %v2124
        %2259 = vmatpush.msra.mxu0 %v2123
        %2260 = vmatpush.msra.mxu0 %v2122
        %2261 = vmatpush.msra.mxu0 %v2121
        %2262 = vmatmul.f32.gmra.mxu0 %v2191
        %v2263 = vpop.f32.mrf.mxu0
        %v2264 = vadd.f32 %v2241, %v2263
        %2265 = vmatmul.f32.gmra.mxu0 %v2204
        %v2266 = vpop.f32.mrf.mxu0
        %v2267 = vadd.f32 %v2244, %v2266
        %2268 = vdwg.mxu0
        %2269 = vmatpush.msra.mxu0 %v2152
        %2270 = vmatpush.msra.mxu0 %v2151
        %2271 = vmatpush.msra.mxu0 %v2150
        %2272 = vmatpush.msra.mxu0 %v2149
        %2273 = vmatpush.msra.mxu0 %v2148
        %2274 = vmatpush.msra.mxu0 %v2147
        %2275 = vmatpush.msra.mxu0 %v2146
        %2276 = vmatpush.msra.mxu0 %v2145
        %2277 = vmatpush.msra.mxu0 %v2144
        %2278 = vmatpush.msra.mxu0 %v2143
        %2279 = vmatpush.msra.mxu0 %v2142
        %2280 = vmatpush.msra.mxu0 %v2141
        %2281 = vmatpush.msra.mxu0 %v2140
        %2282 = vmatpush.msra.mxu0 %v2139
        %2283 = vmatpush.msra.mxu0 %v2138
        %2284 = vmatpush.msra.mxu0 %v2137
        %2285 = vmatmul.f32.gmra.mxu0 %v2194
        %v2286 = vpop.f32.mrf.mxu0
        %v2287 = vadd.f32 %v2264, %v2286
        %2288 = vmatmul.f32.gmra.mxu0 %v2206
        %v2289 = vpop.f32.mrf.mxu0
        %v2290 = vadd.f32 %v2267, %v2289
        %2291 = vdwg.mxu0
        %2292 = vmatpush.msra.mxu0 %v2168
        %2293 = vmatpush.msra.mxu0 %v2167
        %2294 = vmatpush.msra.mxu0 %v2166
        %2295 = vmatpush.msra.mxu0 %v2165
        %2296 = vmatpush.msra.mxu0 %v2164
        %2297 = vmatpush.msra.mxu0 %v2163
        %2298 = vmatpush.msra.mxu0 %v2162
        %2299 = vmatpush.msra.mxu0 %v2161
        %2300 = vmatpush.msra.mxu0 %v2160
        %2301 = vmatpush.msra.mxu0 %v2159
        %2302 = vmatpush.msra.mxu0 %v2158
        %2303 = vmatpush.msra.mxu0 %v2157
        %2304 = vmatpush.msra.mxu0 %v2156
        %2305 = vmatpush.msra.mxu0 %v2155
        %2306 = vmatpush.msra.mxu0 %v2154
        %2307 = vmatpush.msra.mxu0 %v2153
        %2308 = vmatmul.f32.gmra.mxu0 %v2197
        %v2309 = vpop.f32.mrf.mxu0
        %v2310 = vadd.f32 %v2287, %v2309
        %2311 = vmatmul.f32.gmra.mxu0 %v2208
        %v2312 = vpop.f32.mrf.mxu0
        %v2313 = vadd.f32 %v2290, %v2312
        %2314 = vdwg.mxu0
        %2315 = vmatpush.msra.mxu0 0.0
        %2316 = vmatpush.msra.mxu0 0.0
        %2317 = vmatpush.msra.mxu0 0.0
        %2318 = vmatpush.msra.mxu0 0.0
        %2319 = vmatpush.msra.mxu0 0.0
        %2320 = vmatpush.msra.mxu0 0.0
        %2321 = vmatpush.msra.mxu0 0.0
        %2322 = vmatpush.msra.mxu0 0.0
        %2323 = vmatpush.msra.mxu0 %v2176
        %2324 = vmatpush.msra.mxu0 %v2175
        %2325 = vmatpush.msra.mxu0 %v2174
        %2326 = vmatpush.msra.mxu0 %v2173
        %2327 = vmatpush.msra.mxu0 %v2172
        %2328 = vmatpush.msra.mxu0 %v2171
        %2329 = vmatpush.msra.mxu0 %v2170
        %2330 = vmatpush.msra.mxu0 %v2169
        %2331 = vmatmul.f32.gmra.mxu0 %v2219
        %v2332 = vpop.f32.mrf.mxu0
        %v2333 = vadd.f32 %v2310, %v2332
        %2334 = vmatmul.f32.gmra.mxu0 %v2221
        %v2335 = vpop.f32.mrf.mxu0
        %v2336 = vadd.f32 %v2313, %v2335
        %2337 = vdwg.mxu0
        %v2338 = vmul.f32 %v2333, 0.2
        %v2339 = vmul.f32 %v2336, 0.2
        %v2340 = vadd.f32 %v2338, %v1262
        %v2341 = vadd.f32 %v2339, %v1263
        %2342 = vst.msk [vmem:[#allocation2 + $0x10] sm:$0xff] %vm170, %v2340
        %2343 = vst.msk [vmem:[#allocation2 + $0x20] sm:$0xff] %vm170, %v2341
        %v2344 = vld [vmem:[#allocation2] sm:$0xff]
        %v2345 = vld [vmem:[#allocation2 + $0x10] sm:$0xff]
        %v2346 = vld [vmem:[#allocation2 + $0x20] sm:$0xff]
        %v2347 = vld [vmem:[#allocation2 + $0x30] sm:$0xff]
        %v2350 = vrot.slane %v2345, 1
        %v2351 = vrot.slane %v2346, 1
        %v2352 = vsel %vm188, %v2350, %v2351
        %2353 = vrot.lane.b32.xlu0 %v2350, 64
        %v2354 = vpop.permute.xlu0 %2353
        %2355 = vrot.lane.b32.xlu0 %v2352, 64
        %v2356 = vpop.permute.xlu0 %2355
        %2357 = vrot.lane.b32.xlu0 %v2351, 64
        %v2358 = vpop.permute.xlu0 %2357
        %v2363 = vrot.slane %v2345, 2
        %v2364 = vrot.slane %v2346, 2
        %v2365 = vsel %vm202, %v2363, %v2364
        %v2366 = vrot.slane %v2347, 2
        %v2367 = vsel %vm202, %v2364, %v2366
        %v2368 = vsel %vm170, %v2344, %v2354
        %v2369 = vsel %vm170, %v2345, %v2356
        %v2370 = vsel %vm170, %v2346, %v2358
        %s2371 = scalar_lea.vmem %s1, 5760
        %v2372 = vld [vmem:[%s2371] sm:$0xff]
        %v2373 = vld [vmem:[%s2371 + $0x8] sm:$0xff]
        %v2374 = vld [vmem:[%s2371 + $0x10] sm:$0xff]
        %v2375 = vld [vmem:[%s2371 + $0x18] sm:$0xff]
        %v2376 = vld [vmem:[%s2371 + $0x20] sm:$0xff]
        %v2377 = vld [vmem:[%s2371 + $0x28] sm:$0xff]
        %v2378 = vld [vmem:[%s2371 + $0x30] sm:$0xff]
        %v2379 = vld [vmem:[%s2371 + $0x38] sm:$0xff]
        %v2380 = vld [vmem:[%s2371 + $0x40] sm:$0xff]
        %v2381 = vld [vmem:[%s2371 + $0x48] sm:$0xff]
        %v2382 = vld [vmem:[%s2371 + $0x50] sm:$0xff]
        %v2383 = vld [vmem:[%s2371 + $0x58] sm:$0xff]
        %v2384 = vld [vmem:[%s2371 + $0x60] sm:$0xff]
        %v2385 = vld [vmem:[%s2371 + $0x68] sm:$0xff]
        %v2386 = vld [vmem:[%s2371 + $0x70] sm:$0xff]
        %v2387 = vld [vmem:[%s2371 + $0x78] sm:$0xff]
        %v2388 = vld [vmem:[%s2371 + $0x80] sm:$0xff]
        %v2389 = vld [vmem:[%s2371 + $0x88] sm:$0xff]
        %v2390 = vld [vmem:[%s2371 + $0x90] sm:$0xff]
        %v2391 = vld [vmem:[%s2371 + $0x98] sm:$0xff]
        %v2392 = vld [vmem:[%s2371 + $0xa0] sm:$0xff]
        %v2393 = vld [vmem:[%s2371 + $0xa8] sm:$0xff]
        %v2394 = vld [vmem:[%s2371 + $0xb0] sm:$0xff]
        %v2395 = vld [vmem:[%s2371 + $0xb8] sm:$0xff]
        %s2396 = scalar_lea.vmem %s2, 10
        %v2397 = vld [vmem:[%s2396] sm:$0x1]
        %v2399 = vperm.slane %v2397, 0
        %v2404 = vrot.slane %v2368, 7
        %v2405 = vrot.slane %v2369, 7
        %v2406 = vsel %vm242, %v2404, %v2405
        %v2407 = vrot.slane %v2363, 7
        %v2408 = vrot.slane %v2365, 7
        %v2409 = vsel %vm242, %v2407, %v2408
        %v2410 = vrot.slane %v2370, 7
        %v2411 = vsel %vm242, %v2405, %v2410
        %v2412 = vrot.slane %v2367, 7
        %v2413 = vsel %vm242, %v2408, %v2412
        %v2416 = vsel %vm170, %v2409, 0
        %v2418 = vsel %vm170, %v2413, 0
        %2420 = vmatpush.msra.mxu0 %v2387
        %2421 = vmatpush.msra.mxu0 %v2386
        %2422 = vmatpush.msra.mxu0 %v2385
        %2423 = vmatpush.msra.mxu0 %v2384
        %2424 = vmatpush.msra.mxu0 %v2383
        %2425 = vmatpush.msra.mxu0 %v2382
        %2426 = vmatpush.msra.mxu0 %v2381
        %2427 = vmatpush.msra.mxu0 %v2380
        %2428 = vmatpush.msra.mxu0 %v2379
        %2429 = vmatpush.msra.mxu0 %v2378
        %2430 = vmatpush.msra.mxu0 %v2377
        %2431 = vmatpush.msra.mxu0 %v2376
        %2432 = vmatpush.msra.mxu0 %v2375
        %2433 = vmatpush.msra.mxu0 %v2374
        %2434 = vmatpush.msra.mxu0 %v2373
        %2435 = vmatpush.msra.mxu0 %v2372
        %2436 = vmatmul.f32.gmra.mxu0 %v2406
        %v2437 = vpop.f32.mrf.mxu0
        %v2438 = vadd.f32 %v2399, %v2437
        %2439 = vmatmul.f32.gmra.mxu0 %v2411
        %v2440 = vpop.f32.mrf.mxu0
        %v2441 = vadd.f32 %v2399, %v2440
        %2442 = vdwg.mxu0
        %2443 = vmatpush.msra.mxu0 0.0
        %2444 = vmatpush.msra.mxu0 0.0
        %2445 = vmatpush.msra.mxu0 0.0
        %2446 = vmatpush.msra.mxu0 0.0
        %2447 = vmatpush.msra.mxu0 0.0
        %2448 = vmatpush.msra.mxu0 0.0
        %2449 = vmatpush.msra.mxu0 0.0
        %2450 = vmatpush.msra.mxu0 0.0
        %2451 = vmatpush.msra.mxu0 %v2395
        %2452 = vmatpush.msra.mxu0 %v2394
        %2453 = vmatpush.msra.mxu0 %v2393
        %2454 = vmatpush.msra.mxu0 %v2392
        %2455 = vmatpush.msra.mxu0 %v2391
        %2456 = vmatpush.msra.mxu0 %v2390
        %2457 = vmatpush.msra.mxu0 %v2389
        %2458 = vmatpush.msra.mxu0 %v2388
        %2459 = vmatmul.f32.gmra.mxu0 %v2416
        %v2460 = vpop.f32.mrf.mxu0
        %v2461 = vadd.f32 %v2438, %v2460
        %2462 = vmatmul.f32.gmra.mxu0 %v2418
        %v2463 = vpop.f32.mrf.mxu0
        %v2464 = vadd.f32 %v2441, %v2463
        %2465 = vdwg.mxu0
        %vm2466 = vcmp.ge.f32.partialorder %v2461, 0.0
        %vm2467 = vcmp.ge.f32.partialorder %v2464, 0.0
        %v2468 = vmul.f32 %v2461, 0.2
        %v2469 = vmul.f32 %v2464, 0.2
        %v2470 = vsel %vm2466, %v2461, %v2468
        %v2471 = vsel %vm2467, %v2464, %v2469
        %2474 = vrot.lane.b32.xlu0 %v2470, 64
        %v2475 = vpop.permute.xlu0 %2474
        %2476 = vrot.lane.b32.xlu0 %v2471, 64
        %v2477 = vpop.permute.xlu0 %2476
        %2480 = vst.msk [vmem:[#allocation2 + $0x10] sm:$0xff] %vm319, %v2475
        %2481 = vst.msk [vmem:[#allocation2 + $0x20] sm:$0xff] %vm319, %v2477
        %v2482 = vld [vmem:[#allocation2] sm:$0xff]
        %v2483 = vld [vmem:[#allocation2 + $0x10] sm:$0xff]
        %v2484 = vld [vmem:[#allocation2 + $0x20] sm:$0xff]
        %v2485 = vld [vmem:[#allocation2 + $0x30] sm:$0xff]
        %v2488 = vrot.slane %v2483, 1
        %v2489 = vrot.slane %v2484, 1
        %v2490 = vsel %vm188, %v2488, %v2489
        %2491 = vrot.lane.b32.xlu0 %v2488, 96
        %v2492 = vpop.permute.xlu0 %2491
        %2493 = vrot.lane.b32.xlu0 %v2490, 96
        %v2494 = vpop.permute.xlu0 %2493
        %2495 = vrot.lane.b32.xlu0 %v2489, 96
        %v2496 = vpop.permute.xlu0 %2495
        %v2501 = vrot.slane %v2483, 2
        %v2502 = vrot.slane %v2484, 2
        %v2503 = vsel %vm202, %v2501, %v2502
        %v2504 = vrot.slane %v2485, 2
        %v2505 = vsel %vm202, %v2502, %v2504
        %2506 = vrot.lane.b32.xlu0 %v2501, 64
        %v2507 = vpop.permute.xlu0 %2506
        %2508 = vrot.lane.b32.xlu0 %v2503, 64
        %v2509 = vpop.permute.xlu0 %2508
        %2510 = vrot.lane.b32.xlu0 %v2505, 64
        %v2511 = vpop.permute.xlu0 %2510
        %v2515 = vsel %vm355, %v2482, %v2492
        %v2516 = vsel %vm355, %v2483, %v2494
        %v2517 = vsel %vm355, %v2484, %v2496
        %v2518 = vsel %vm170, %v2492, %v2507
        %v2519 = vsel %vm170, %v2494, %v2509
        %v2520 = vsel %vm170, %v2496, %v2511
        %s2521 = scalar_lea.vmem %s1, 6336
        %v2522 = vld [vmem:[%s2521] sm:$0xff]
        %v2523 = vld [vmem:[%s2521 + $0x8] sm:$0xff]
        %v2524 = vld [vmem:[%s2521 + $0x10] sm:$0xff]
        %v2525 = vld [vmem:[%s2521 + $0x18] sm:$0xff]
        %v2526 = vld [vmem:[%s2521 + $0x20] sm:$0xff]
        %v2527 = vld [vmem:[%s2521 + $0x28] sm:$0xff]
        %v2528 = vld [vmem:[%s2521 + $0x30] sm:$0xff]
        %v2529 = vld [vmem:[%s2521 + $0x38] sm:$0xff]
        %v2530 = vld [vmem:[%s2521 + $0x40] sm:$0xff]
        %v2531 = vld [vmem:[%s2521 + $0x48] sm:$0xff]
        %v2532 = vld [vmem:[%s2521 + $0x50] sm:$0xff]
        %v2533 = vld [vmem:[%s2521 + $0x58] sm:$0xff]
        %v2534 = vld [vmem:[%s2521 + $0x60] sm:$0xff]
        %v2535 = vld [vmem:[%s2521 + $0x68] sm:$0xff]
        %v2536 = vld [vmem:[%s2521 + $0x70] sm:$0xff]
        %v2537 = vld [vmem:[%s2521 + $0x78] sm:$0xff]
        %v2538 = vld [vmem:[%s2521 + $0x80] sm:$0xff]
        %v2539 = vld [vmem:[%s2521 + $0x88] sm:$0xff]
        %v2540 = vld [vmem:[%s2521 + $0x90] sm:$0xff]
        %v2541 = vld [vmem:[%s2521 + $0x98] sm:$0xff]
        %v2542 = vld [vmem:[%s2521 + $0xa0] sm:$0xff]
        %v2543 = vld [vmem:[%s2521 + $0xa8] sm:$0xff]
        %v2544 = vld [vmem:[%s2521 + $0xb0] sm:$0xff]
        %v2545 = vld [vmem:[%s2521 + $0xb8] sm:$0xff]
        %v2546 = vld [vmem:[%s2521 + $0xc0] sm:$0xff]
        %v2547 = vld [vmem:[%s2521 + $0xc8] sm:$0xff]
        %v2548 = vld [vmem:[%s2521 + $0xd0] sm:$0xff]
        %v2549 = vld [vmem:[%s2521 + $0xd8] sm:$0xff]
        %v2550 = vld [vmem:[%s2521 + $0xe0] sm:$0xff]
        %v2551 = vld [vmem:[%s2521 + $0xe8] sm:$0xff]
        %v2552 = vld [vmem:[%s2521 + $0xf0] sm:$0xff]
        %v2553 = vld [vmem:[%s2521 + $0xf8] sm:$0xff]
        %v2554 = vld [vmem:[%s2521 + $0x100] sm:$0xff]
        %v2555 = vld [vmem:[%s2521 + $0x108] sm:$0xff]
        %v2556 = vld [vmem:[%s2521 + $0x110] sm:$0xff]
        %v2557 = vld [vmem:[%s2521 + $0x118] sm:$0xff]
        %s2558 = scalar_lea.vmem %s2, 11
        %v2559 = vld [vmem:[%s2558] sm:$0x1]
        %v2561 = vperm.slane %v2559, 0
        %v2569 = vrot.slane %v2515, 7
        %v2570 = vrot.slane %v2516, 7
        %v2571 = vsel %vm242, %v2569, %v2570
        %v2572 = vrot.slane %v2518, 7
        %v2573 = vrot.slane %v2519, 7
        %v2574 = vsel %vm242, %v2572, %v2573
        %v2575 = vrot.slane %v2507, 7
        %v2576 = vrot.slane %v2509, 7
        %v2577 = vsel %vm242, %v2575, %v2576
        %v2578 = vrot.slane %v2517, 7
        %v2579 = vsel %vm242, %v2570, %v2578
        %v2580 = vrot.slane %v2520, 7
        %v2581 = vsel %vm242, %v2573, %v2580
        %v2582 = vrot.slane %v2511, 7
        %v2583 = vsel %vm242, %v2576, %v2582
        %v2588 = vsel %vm429, %v2577, 0
        %v2590 = vsel %vm429, %v2583, 0
        %2592 = vmatpush.msra.mxu0 %v2537
        %2593 = vmatpush.msra.mxu0 %v2536
        %2594 = vmatpush.msra.mxu0 %v2535
        %2595 = vmatpush.msra.mxu0 %v2534
        %2596 = vmatpush.msra.mxu0 %v2533
        %2597 = vmatpush.msra.mxu0 %v2532
        %2598 = vmatpush.msra.mxu0 %v2531
        %2599 = vmatpush.msra.mxu0 %v2530
        %2600 = vmatpush.msra.mxu0 %v2529
        %2601 = vmatpush.msra.mxu0 %v2528
        %2602 = vmatpush.msra.mxu0 %v2527
        %2603 = vmatpush.msra.mxu0 %v2526
        %2604 = vmatpush.msra.mxu0 %v2525
        %2605 = vmatpush.msra.mxu0 %v2524
        %2606 = vmatpush.msra.mxu0 %v2523
        %2607 = vmatpush.msra.mxu0 %v2522
        %2608 = vmatmul.f32.gmra.mxu0 %v2571
        %v2609 = vpop.f32.mrf.mxu0
        %v2610 = vadd.f32 %v2561, %v2609
        %2611 = vmatmul.f32.gmra.mxu0 %v2579
        %v2612 = vpop.f32.mrf.mxu0
        %v2613 = vadd.f32 %v2561, %v2612
        %2614 = vdwg.mxu0
        %2615 = vmatpush.msra.mxu0 %v2553
        %2616 = vmatpush.msra.mxu0 %v2552
        %2617 = vmatpush.msra.mxu0 %v2551
        %2618 = vmatpush.msra.mxu0 %v2550
        %2619 = vmatpush.msra.mxu0 %v2549
        %2620 = vmatpush.msra.mxu0 %v2548
        %2621 = vmatpush.msra.mxu0 %v2547
        %2622 = vmatpush.msra.mxu0 %v2546
        %2623 = vmatpush.msra.mxu0 %v2545
        %2624 = vmatpush.msra.mxu0 %v2544
        %2625 = vmatpush.msra.mxu0 %v2543
        %2626 = vmatpush.msra.mxu0 %v2542
        %2627 = vmatpush.msra.mxu0 %v2541
        %2628 = vmatpush.msra.mxu0 %v2540
        %2629 = vmatpush.msra.mxu0 %v2539
        %2630 = vmatpush.msra.mxu0 %v2538
        %2631 = vmatmul.f32.gmra.mxu0 %v2574
        %v2632 = vpop.f32.mrf.mxu0
        %v2633 = vadd.f32 %v2610, %v2632
        %2634 = vmatmul.f32.gmra.mxu0 %v2581
        %v2635 = vpop.f32.mrf.mxu0
        %v2636 = vadd.f32 %v2613, %v2635
        %2637 = vdwg.mxu0
        %2638 = vmatpush.msra.mxu0 0.0
        %2639 = vmatpush.msra.mxu0 0.0
        %2640 = vmatpush.msra.mxu0 0.0
        %2641 = vmatpush.msra.mxu0 0.0
        %2642 = vmatpush.msra.mxu0 0.0
        %2643 = vmatpush.msra.mxu0 0.0
        %2644 = vmatpush.msra.mxu0 0.0
        %2645 = vmatpush.msra.mxu0 0.0
        %2646 = vmatpush.msra.mxu0 0.0
        %2647 = vmatpush.msra.mxu0 0.0
        %2648 = vmatpush.msra.mxu0 0.0
        %2649 = vmatpush.msra.mxu0 0.0
        %2650 = vmatpush.msra.mxu0 %v2557
        %2651 = vmatpush.msra.mxu0 %v2556
        %2652 = vmatpush.msra.mxu0 %v2555
        %2653 = vmatpush.msra.mxu0 %v2554
        %2654 = vmatmul.f32.gmra.mxu0 %v2588
        %v2655 = vpop.f32.mrf.mxu0
        %v2656 = vadd.f32 %v2633, %v2655
        %2657 = vmatmul.f32.gmra.mxu0 %v2590
        %v2658 = vpop.f32.mrf.mxu0
        %v2659 = vadd.f32 %v2636, %v2658
        %2660 = vdwg.mxu0
        %vm2661 = vcmp.ge.f32.partialorder %v2656, 0.0
        %vm2662 = vcmp.ge.f32.partialorder %v2659, 0.0
        %v2663 = vmul.f32 %v2656, 0.2
        %v2664 = vmul.f32 %v2659, 0.2
        %v2665 = vsel %vm2661, %v2656, %v2663
        %v2666 = vsel %vm2662, %v2659, %v2664
        %2669 = vrot.lane.b32.xlu0 %v2665, 96
        %v2670 = vpop.permute.xlu0 %2669
        %2671 = vrot.lane.b32.xlu0 %v2666, 96
        %v2672 = vpop.permute.xlu0 %2671
        %2675 = vst.msk [vmem:[#allocation2 + $0x10] sm:$0xff] %vm517, %v2670
        %2676 = vst.msk [vmem:[#allocation2 + $0x20] sm:$0xff] %vm517, %v2672
        %v2677 = vld [vmem:[#allocation2] sm:$0xff]
        %v2678 = vld [vmem:[#allocation2 + $0x10] sm:$0xff]
        %v2679 = vld [vmem:[#allocation2 + $0x20] sm:$0xff]
        %v2680 = vld [vmem:[#allocation2 + $0x30] sm:$0xff]
        %v2683 = vrot.slane %v2678, 1
        %v2684 = vrot.slane %v2679, 1
        %v2685 = vsel %vm188, %v2683, %v2684
        %v2687 = vrot.slane %v2678, 2
        %v2688 = vrot.slane %v2679, 2
        %v2689 = vsel %vm202, %v2687, %v2688
        %v2690 = vrot.slane %v2680, 2
        %v2691 = vsel %vm202, %v2688, %v2690
        %s2692 = scalar_lea.vmem %s1, 6912
        %v2693 = vld [vmem:[%s2692] sm:$0xff]
        %v2694 = vld [vmem:[%s2692 + $0x8] sm:$0xff]
        %v2695 = vld [vmem:[%s2692 + $0x10] sm:$0xff]
        %v2696 = vld [vmem:[%s2692 + $0x18] sm:$0xff]
        %v2697 = vld [vmem:[%s2692 + $0x20] sm:$0xff]
        %v2698 = vld [vmem:[%s2692 + $0x28] sm:$0xff]
        %v2699 = vld [vmem:[%s2692 + $0x30] sm:$0xff]
        %v2700 = vld [vmem:[%s2692 + $0x38] sm:$0xff]
        %v2701 = vld [vmem:[%s2692 + $0x40] sm:$0xff]
        %v2702 = vld [vmem:[%s2692 + $0x48] sm:$0xff]
        %v2703 = vld [vmem:[%s2692 + $0x50] sm:$0xff]
        %v2704 = vld [vmem:[%s2692 + $0x58] sm:$0xff]
        %v2705 = vld [vmem:[%s2692 + $0x60] sm:$0xff]
        %v2706 = vld [vmem:[%s2692 + $0x68] sm:$0xff]
        %v2707 = vld [vmem:[%s2692 + $0x70] sm:$0xff]
        %v2708 = vld [vmem:[%s2692 + $0x78] sm:$0xff]
        %v2709 = vld [vmem:[%s2692 + $0x80] sm:$0xff]
        %v2710 = vld [vmem:[%s2692 + $0x88] sm:$0xff]
        %v2711 = vld [vmem:[%s2692 + $0x90] sm:$0xff]
        %v2712 = vld [vmem:[%s2692 + $0x98] sm:$0xff]
        %v2713 = vld [vmem:[%s2692 + $0xa0] sm:$0xff]
        %v2714 = vld [vmem:[%s2692 + $0xa8] sm:$0xff]
        %v2715 = vld [vmem:[%s2692 + $0xb0] sm:$0xff]
        %v2716 = vld [vmem:[%s2692 + $0xb8] sm:$0xff]
        %v2717 = vld [vmem:[%s2692 + $0xc0] sm:$0xff]
        %v2718 = vld [vmem:[%s2692 + $0xc8] sm:$0xff]
        %v2719 = vld [vmem:[%s2692 + $0xd0] sm:$0xff]
        %v2720 = vld [vmem:[%s2692 + $0xd8] sm:$0xff]
        %v2721 = vld [vmem:[%s2692 + $0xe0] sm:$0xff]
        %v2722 = vld [vmem:[%s2692 + $0xe8] sm:$0xff]
        %v2723 = vld [vmem:[%s2692 + $0xf0] sm:$0xff]
        %v2724 = vld [vmem:[%s2692 + $0xf8] sm:$0xff]
        %v2725 = vld [vmem:[%s2692 + $0x100] sm:$0xff]
        %v2726 = vld [vmem:[%s2692 + $0x108] sm:$0xff]
        %v2727 = vld [vmem:[%s2692 + $0x110] sm:$0xff]
        %v2728 = vld [vmem:[%s2692 + $0x118] sm:$0xff]
        %v2729 = vld [vmem:[%s2692 + $0x120] sm:$0xff]
        %v2730 = vld [vmem:[%s2692 + $0x128] sm:$0xff]
        %v2731 = vld [vmem:[%s2692 + $0x130] sm:$0xff]
        %v2732 = vld [vmem:[%s2692 + $0x138] sm:$0xff]
        %v2733 = vld [vmem:[%s2692 + $0x140] sm:$0xff]
        %v2734 = vld [vmem:[%s2692 + $0x148] sm:$0xff]
        %v2735 = vld [vmem:[%s2692 + $0x150] sm:$0xff]
        %v2736 = vld [vmem:[%s2692 + $0x158] sm:$0xff]
        %v2737 = vld [vmem:[%s2692 + $0x160] sm:$0xff]
        %v2738 = vld [vmem:[%s2692 + $0x168] sm:$0xff]
        %v2739 = vld [vmem:[%s2692 + $0x170] sm:$0xff]
        %v2740 = vld [vmem:[%s2692 + $0x178] sm:$0xff]
        %s2741 = scalar_lea.vmem %s2, 12
        %v2742 = vld [vmem:[%s2741] sm:$0x1]
        %v2744 = vperm.slane %v2742, 0
        %v2747 = vrot.slane %v2677, 7
        %v2748 = vrot.slane %v2678, 7
        %v2749 = vsel %vm242, %v2747, %v2748
        %v2750 = vrot.slane %v2683, 7
        %v2751 = vrot.slane %v2685, 7
        %v2752 = vsel %vm242, %v2750, %v2751
        %v2753 = vrot.slane %v2687, 7
        %v2754 = vrot.slane %v2689, 7
        %v2755 = vsel %vm242, %v2753, %v2754
        %v2756 = vrot.slane %v2679, 7
        %v2757 = vsel %vm242, %v2748, %v2756
        %v2758 = vrot.slane %v2684, 7
        %v2759 = vsel %vm242, %v2751, %v2758
        %v2760 = vrot.slane %v2691, 7
        %v2761 = vsel %vm242, %v2754, %v2760
        %2768 = vmatpush.msra.mxu0 %v2708
        %2769 = vmatpush.msra.mxu0 %v2707
        %2770 = vmatpush.msra.mxu0 %v2706
        %2771 = vmatpush.msra.mxu0 %v2705
        %2772 = vmatpush.msra.mxu0 %v2704
        %2773 = vmatpush.msra.mxu0 %v2703
        %2774 = vmatpush.msra.mxu0 %v2702
        %2775 = vmatpush.msra.mxu0 %v2701
        %2776 = vmatpush.msra.mxu0 %v2700
        %2777 = vmatpush.msra.mxu0 %v2699
        %2778 = vmatpush.msra.mxu0 %v2698
        %2779 = vmatpush.msra.mxu0 %v2697
        %2780 = vmatpush.msra.mxu0 %v2696
        %2781 = vmatpush.msra.mxu0 %v2695
        %2782 = vmatpush.msra.mxu0 %v2694
        %2783 = vmatpush.msra.mxu0 %v2693
        %2784 = vmatmul.f32.gmra.mxu0 %v2749
        %v2785 = vpop.f32.mrf.mxu0
        %v2786 = vadd.f32 %v2744, %v2785
        %2787 = vmatmul.f32.gmra.mxu0 %v2757
        %v2788 = vpop.f32.mrf.mxu0
        %v2789 = vadd.f32 %v2744, %v2788
        %2790 = vdwg.mxu0
        %2791 = vmatpush.msra.mxu0 %v2724
        %2792 = vmatpush.msra.mxu0 %v2723
        %2793 = vmatpush.msra.mxu0 %v2722
        %2794 = vmatpush.msra.mxu0 %v2721
        %2795 = vmatpush.msra.mxu0 %v2720
        %2796 = vmatpush.msra.mxu0 %v2719
        %2797 = vmatpush.msra.mxu0 %v2718
        %2798 = vmatpush.msra.mxu0 %v2717
        %2799 = vmatpush.msra.mxu0 %v2716
        %2800 = vmatpush.msra.mxu0 %v2715
        %2801 = vmatpush.msra.mxu0 %v2714
        %2802 = vmatpush.msra.mxu0 %v2713
        %2803 = vmatpush.msra.mxu0 %v2712
        %2804 = vmatpush.msra.mxu0 %v2711
        %2805 = vmatpush.msra.mxu0 %v2710
        %2806 = vmatpush.msra.mxu0 %v2709
        %2807 = vmatmul.f32.gmra.mxu0 %v2752
        %v2808 = vpop.f32.mrf.mxu0
        %v2809 = vadd.f32 %v2786, %v2808
        %2810 = vmatmul.f32.gmra.mxu0 %v2759
        %v2811 = vpop.f32.mrf.mxu0
        %v2812 = vadd.f32 %v2789, %v2811
        %2813 = vdwg.mxu0
        %2814 = vmatpush.msra.mxu0 %v2740
        %2815 = vmatpush.msra.mxu0 %v2739
        %2816 = vmatpush.msra.mxu0 %v2738
        %2817 = vmatpush.msra.mxu0 %v2737
        %2818 = vmatpush.msra.mxu0 %v2736
        %2819 = vmatpush.msra.mxu0 %v2735
        %2820 = vmatpush.msra.mxu0 %v2734
        %2821 = vmatpush.msra.mxu0 %v2733
        %2822 = vmatpush.msra.mxu0 %v2732
        %2823 = vmatpush.msra.mxu0 %v2731
        %2824 = vmatpush.msra.mxu0 %v2730
        %2825 = vmatpush.msra.mxu0 %v2729
        %2826 = vmatpush.msra.mxu0 %v2728
        %2827 = vmatpush.msra.mxu0 %v2727
        %2828 = vmatpush.msra.mxu0 %v2726
        %2829 = vmatpush.msra.mxu0 %v2725
        %2830 = vmatmul.f32.gmra.mxu0 %v2755
        %v2831 = vpop.f32.mrf.mxu0
        %v2832 = vadd.f32 %v2809, %v2831
        %2833 = vmatmul.f32.gmra.mxu0 %v2761
        %v2834 = vpop.f32.mrf.mxu0
        %v2835 = vadd.f32 %v2812, %v2834
        %2836 = vdwg.mxu0
        %vm2837 = vcmp.ge.f32.partialorder %v2832, 0.0
        %vm2838 = vcmp.ge.f32.partialorder %v2835, 0.0
        %v2839 = vmul.f32 %v2832, 0.2
        %v2840 = vmul.f32 %v2835, 0.2
        %v2841 = vsel %vm2837, %v2832, %v2839
        %v2842 = vsel %vm2838, %v2835, %v2840
        %2843 = vst.msk [vmem:[#allocation2 + $0x18] sm:$0xff] %vm429, %v2841
        %2844 = vst.msk [vmem:[#allocation2 + $0x28] sm:$0xff] %vm429, %v2842
        %v2845 = vld [vmem:[#allocation2] sm:$0xff]
        %v2846 = vld [vmem:[#allocation2 + $0x8] sm:$0xff]
        %v2847 = vld [vmem:[#allocation2 + $0x10] sm:$0xff]
        %v2848 = vld [vmem:[#allocation2 + $0x18] sm:$0xff]
        %v2849 = vld [vmem:[#allocation2 + $0x20] sm:$0xff]
        %v2850 = vld [vmem:[#allocation2 + $0x28] sm:$0xff]
        %v2851 = vld [vmem:[#allocation2 + $0x30] sm:$0xff]
        %v2852 = vld [vmem:[#allocation2 + $0x38] sm:$0xff]
        %v2857 = vrot.slane %v2847, 1
        %v2858 = vrot.slane %v2848, 1
        %v2859 = vrot.slane %v2849, 1
        %v2860 = vsel %vm188, %v2857, %v2859
        %v2861 = vrot.slane %v2850, 1
        %v2862 = vsel %vm188, %v2858, %v2861
        %2863 = vrot.lane.b32.xlu0 %v2857, 32
        %v2864 = vpop.permute.xlu0 %2863
        %2865 = vrot.lane.b32.xlu0 %v2858, 32
        %v2866 = vpop.permute.xlu0 %2865
        %2867 = vrot.lane.b32.xlu0 %v2860, 32
        %v2868 = vpop.permute.xlu0 %2867
        %2869 = vrot.lane.b32.xlu0 %v2862, 32
        %v2870 = vpop.permute.xlu0 %2869
        %2871 = vrot.lane.b32.xlu0 %v2859, 32
        %v2872 = vpop.permute.xlu0 %2871
        %2873 = vrot.lane.b32.xlu0 %v2861, 32
        %v2874 = vpop.permute.xlu0 %2873
        %v2875 = vsel %vm429, %v2864, %v2866
        %v2876 = vsel %vm429, %v2868, %v2870
        %v2877 = vsel %vm429, %v2872, %v2874
        %v2886 = vrot.slane %v2847, 2
        %v2887 = vrot.slane %v2848, 2
        %v2888 = vrot.slane %v2849, 2
        %v2889 = vsel %vm202, %v2886, %v2888
        %v2890 = vrot.slane %v2850, 2
        %v2891 = vsel %vm202, %v2887, %v2890
        %v2892 = vrot.slane %v2851, 2
        %v2893 = vsel %vm202, %v2888, %v2892
        %v2894 = vrot.slane %v2852, 2
        %v2895 = vsel %vm202, %v2890, %v2894
        %2896 = vrot.lane.b32.xlu0 %v2886, 64
        %v2897 = vpop.permute.xlu0 %2896
        %2898 = vrot.lane.b32.xlu0 %v2887, 64
        %v2899 = vpop.permute.xlu0 %2898
        %2900 = vrot.lane.b32.xlu0 %v2889, 64
        %v2901 = vpop.permute.xlu0 %2900
        %2902 = vrot.lane.b32.xlu0 %v2891, 64
        %v2903 = vpop.permute.xlu0 %2902
        %2904 = vrot.lane.b32.xlu0 %v2893, 64
        %v2905 = vpop.permute.xlu0 %2904
        %2906 = vrot.lane.b32.xlu0 %v2895, 64
        %v2907 = vpop.permute.xlu0 %2906
        %v2908 = vsel %vm170, %v2897, %v2899
        %v2909 = vsel %vm170, %v2901, %v2903
        %v2910 = vsel %vm170, %v2905, %v2907
        %v2914 = vsel %vm429, %v2846, %v2864
        %v2915 = vsel %vm429, %v2848, %v2868
        %v2916 = vsel %vm429, %v2850, %v2872
        %v2917 = vsel %vm170, %v2875, %v2897
        %v2918 = vsel %vm170, %v2876, %v2901
        %v2919 = vsel %vm170, %v2877, %v2905
        %s2920 = scalar_lea.vmem %s1, 7488
        %v2921 = vld [vmem:[%s2920] sm:$0xff]
        %v2922 = vld [vmem:[%s2920 + $0x8] sm:$0xff]
        %v2923 = vld [vmem:[%s2920 + $0x10] sm:$0xff]
        %v2924 = vld [vmem:[%s2920 + $0x18] sm:$0xff]
        %v2925 = vld [vmem:[%s2920 + $0x20] sm:$0xff]
        %v2926 = vld [vmem:[%s2920 + $0x28] sm:$0xff]
        %v2927 = vld [vmem:[%s2920 + $0x30] sm:$0xff]
        %v2928 = vld [vmem:[%s2920 + $0x38] sm:$0xff]
        %v2929 = vld [vmem:[%s2920 + $0x40] sm:$0xff]
        %v2930 = vld [vmem:[%s2920 + $0x48] sm:$0xff]
        %v2931 = vld [vmem:[%s2920 + $0x50] sm:$0xff]
        %v2932 = vld [vmem:[%s2920 + $0x58] sm:$0xff]
        %v2933 = vld [vmem:[%s2920 + $0x60] sm:$0xff]
        %v2934 = vld [vmem:[%s2920 + $0x68] sm:$0xff]
        %v2935 = vld [vmem:[%s2920 + $0x70] sm:$0xff]
        %v2936 = vld [vmem:[%s2920 + $0x78] sm:$0xff]
        %v2937 = vld [vmem:[%s2920 + $0x80] sm:$0xff]
        %v2938 = vld [vmem:[%s2920 + $0x88] sm:$0xff]
        %v2939 = vld [vmem:[%s2920 + $0x90] sm:$0xff]
        %v2940 = vld [vmem:[%s2920 + $0x98] sm:$0xff]
        %v2941 = vld [vmem:[%s2920 + $0xa0] sm:$0xff]
        %v2942 = vld [vmem:[%s2920 + $0xa8] sm:$0xff]
        %v2943 = vld [vmem:[%s2920 + $0xb0] sm:$0xff]
        %v2944 = vld [vmem:[%s2920 + $0xb8] sm:$0xff]
        %v2945 = vld [vmem:[%s2920 + $0xc0] sm:$0xff]
        %v2946 = vld [vmem:[%s2920 + $0xc8] sm:$0xff]
        %v2947 = vld [vmem:[%s2920 + $0xd0] sm:$0xff]
        %v2948 = vld [vmem:[%s2920 + $0xd8] sm:$0xff]
        %v2949 = vld [vmem:[%s2920 + $0xe0] sm:$0xff]
        %v2950 = vld [vmem:[%s2920 + $0xe8] sm:$0xff]
        %v2951 = vld [vmem:[%s2920 + $0xf0] sm:$0xff]
        %v2952 = vld [vmem:[%s2920 + $0xf8] sm:$0xff]
        %v2953 = vld [vmem:[%s2920 + $0x100] sm:$0xff]
        %v2954 = vld [vmem:[%s2920 + $0x108] sm:$0xff]
        %v2955 = vld [vmem:[%s2920 + $0x110] sm:$0xff]
        %v2956 = vld [vmem:[%s2920 + $0x118] sm:$0xff]
        %v2957 = vld [vmem:[%s2920 + $0x120] sm:$0xff]
        %v2958 = vld [vmem:[%s2920 + $0x128] sm:$0xff]
        %v2959 = vld [vmem:[%s2920 + $0x130] sm:$0xff]
        %v2960 = vld [vmem:[%s2920 + $0x138] sm:$0xff]
        %v2961 = vld [vmem:[%s2920 + $0x140] sm:$0xff]
        %v2962 = vld [vmem:[%s2920 + $0x148] sm:$0xff]
        %v2963 = vld [vmem:[%s2920 + $0x150] sm:$0xff]
        %v2964 = vld [vmem:[%s2920 + $0x158] sm:$0xff]
        %v2965 = vld [vmem:[%s2920 + $0x160] sm:$0xff]
        %v2966 = vld [vmem:[%s2920 + $0x168] sm:$0xff]
        %v2967 = vld [vmem:[%s2920 + $0x170] sm:$0xff]
        %v2968 = vld [vmem:[%s2920 + $0x178] sm:$0xff]
        %v2969 = vld [vmem:[%s2920 + $0x180] sm:$0xff]
        %v2970 = vld [vmem:[%s2920 + $0x188] sm:$0xff]
        %v2971 = vld [vmem:[%s2920 + $0x190] sm:$0xff]
        %v2972 = vld [vmem:[%s2920 + $0x198] sm:$0xff]
        %v2973 = vld [vmem:[%s2920 + $0x1a0] sm:$0xff]
        %v2974 = vld [vmem:[%s2920 + $0x1a8] sm:$0xff]
        %v2975 = vld [vmem:[%s2920 + $0x1b0] sm:$0xff]
        %v2976 = vld [vmem:[%s2920 + $0x1b8] sm:$0xff]
        %v2977 = vld [vmem:[%s2920 + $0x1c0] sm:$0xff]
        %v2978 = vld [vmem:[%s2920 + $0x1c8] sm:$0xff]
        %v2979 = vld [vmem:[%s2920 + $0x1d0] sm:$0xff]
        %v2980 = vld [vmem:[%s2920 + $0x1d8] sm:$0xff]
        %s2981 = scalar_lea.vmem %s2, 13
        %v2982 = vld [vmem:[%s2981] sm:$0x1]
        %v2984 = vperm.slane %v2982, 0
        %v2993 = vrot.slane %v2845, 7
        %v2994 = vrot.slane %v2847, 7
        %v2995 = vsel %vm242, %v2993, %v2994
        %v2996 = vrot.slane %v2914, 7
        %v2997 = vrot.slane %v2915, 7
        %v2998 = vsel %vm242, %v2996, %v2997
        %v2999 = vrot.slane %v2917, 7
        %v3000 = vrot.slane %v2918, 7
        %v3001 = vsel %vm242, %v2999, %v3000
        %v3002 = vrot.slane %v2908, 7
        %v3003 = vrot.slane %v2909, 7
        %v3004 = vsel %vm242, %v3002, %v3003
        %v3005 = vrot.slane %v2849, 7
        %v3006 = vsel %vm242, %v2994, %v3005
        %v3007 = vrot.slane %v2916, 7
        %v3008 = vsel %vm242, %v2997, %v3007
        %v3009 = vrot.slane %v2919, 7
        %v3010 = vsel %vm242, %v3000, %v3009
        %v3011 = vrot.slane %v2910, 7
        %v3012 = vsel %vm242, %v3003, %v3011
        %v3019 = vsel %vm355, %v3004, 0
        %v3021 = vsel %vm355, %v3012, 0
        %3023 = vmatpush.msra.mxu0 %v2936
        %3024 = vmatpush.msra.mxu0 %v2935
        %3025 = vmatpush.msra.mxu0 %v2934
        %3026 = vmatpush.msra.mxu0 %v2933
        %3027 = vmatpush.msra.mxu0 %v2932
        %3028 = vmatpush.msra.mxu0 %v2931
        %3029 = vmatpush.msra.mxu0 %v2930
        %3030 = vmatpush.msra.mxu0 %v2929
        %3031 = vmatpush.msra.mxu0 %v2928
        %3032 = vmatpush.msra.mxu0 %v2927
        %3033 = vmatpush.msra.mxu0 %v2926
        %3034 = vmatpush.msra.mxu0 %v2925
        %3035 = vmatpush.msra.mxu0 %v2924
        %3036 = vmatpush.msra.mxu0 %v2923
        %3037 = vmatpush.msra.mxu0 %v2922
        %3038 = vmatpush.msra.mxu0 %v2921
        %3039 = vmatmul.f32.gmra.mxu0 %v2995
        %v3040 = vpop.f32.mrf.mxu0
        %v3041 = vadd.f32 %v2984, %v3040
        %3042 = vmatmul.f32.gmra.mxu0 %v3006
        %v3043 = vpop.f32.mrf.mxu0
        %v3044 = vadd.f32 %v2984, %v3043
        %3045 = vdwg.mxu0
        %3046 = vmatpush.msra.mxu0 %v2952
        %3047 = vmatpush.msra.mxu0 %v2951
        %3048 = vmatpush.msra.mxu0 %v2950
        %3049 = vmatpush.msra.mxu0 %v2949
        %3050 = vmatpush.msra.mxu0 %v2948
        %3051 = vmatpush.msra.mxu0 %v2947
        %3052 = vmatpush.msra.mxu0 %v2946
        %3053 = vmatpush.msra.mxu0 %v2945
        %3054 = vmatpush.msra.mxu0 %v2944
        %3055 = vmatpush.msra.mxu0 %v2943
        %3056 = vmatpush.msra.mxu0 %v2942
        %3057 = vmatpush.msra.mxu0 %v2941
        %3058 = vmatpush.msra.mxu0 %v2940
        %3059 = vmatpush.msra.mxu0 %v2939
        %3060 = vmatpush.msra.mxu0 %v2938
        %3061 = vmatpush.msra.mxu0 %v2937
        %3062 = vmatmul.f32.gmra.mxu0 %v2998
        %v3063 = vpop.f32.mrf.mxu0
        %v3064 = vadd.f32 %v3041, %v3063
        %3065 = vmatmul.f32.gmra.mxu0 %v3008
        %v3066 = vpop.f32.mrf.mxu0
        %v3067 = vadd.f32 %v3044, %v3066
        %3068 = vdwg.mxu0
        %3069 = vmatpush.msra.mxu0 %v2968
        %3070 = vmatpush.msra.mxu0 %v2967
        %3071 = vmatpush.msra.mxu0 %v2966
        %3072 = vmatpush.msra.mxu0 %v2965
        %3073 = vmatpush.msra.mxu0 %v2964
        %3074 = vmatpush.msra.mxu0 %v2963
        %3075 = vmatpush.msra.mxu0 %v2962
        %3076 = vmatpush.msra.mxu0 %v2961
        %3077 = vmatpush.msra.mxu0 %v2960
        %3078 = vmatpush.msra.mxu0 %v2959
        %3079 = vmatpush.msra.mxu0 %v2958
        %3080 = vmatpush.msra.mxu0 %v2957
        %3081 = vmatpush.msra.mxu0 %v2956
        %3082 = vmatpush.msra.mxu0 %v2955
        %3083 = vmatpush.msra.mxu0 %v2954
        %3084 = vmatpush.msra.mxu0 %v2953
        %3085 = vmatmul.f32.gmra.mxu0 %v3001
        %v3086 = vpop.f32.mrf.mxu0
        %v3087 = vadd.f32 %v3064, %v3086
        %3088 = vmatmul.f32.gmra.mxu0 %v3010
        %v3089 = vpop.f32.mrf.mxu0
        %v3090 = vadd.f32 %v3067, %v3089
        %3091 = vdwg.mxu0
        %3092 = vmatpush.msra.mxu0 0.0
        %3093 = vmatpush.msra.mxu0 0.0
        %3094 = vmatpush.msra.mxu0 0.0
        %3095 = vmatpush.msra.mxu0 0.0
        %3096 = vmatpush.msra.mxu0 %v2980
        %3097 = vmatpush.msra.mxu0 %v2979
        %3098 = vmatpush.msra.mxu0 %v2978
        %3099 = vmatpush.msra.mxu0 %v2977
        %3100 = vmatpush.msra.mxu0 %v2976
        %3101 = vmatpush.msra.mxu0 %v2975
        %3102 = vmatpush.msra.mxu0 %v2974
        %3103 = vmatpush.msra.mxu0 %v2973
        %3104 = vmatpush.msra.mxu0 %v2972
        %3105 = vmatpush.msra.mxu0 %v2971
        %3106 = vmatpush.msra.mxu0 %v2970
        %3107 = vmatpush.msra.mxu0 %v2969
        %3108 = vmatmul.f32.gmra.mxu0 %v3019
        %v3109 = vpop.f32.mrf.mxu0
        %v3110 = vadd.f32 %v3087, %v3109
        %3111 = vmatmul.f32.gmra.mxu0 %v3021
        %v3112 = vpop.f32.mrf.mxu0
        %v3113 = vadd.f32 %v3090, %v3112
        %3114 = vdwg.mxu0
        %vm3115 = vcmp.ge.f32.partialorder %v3110, 0.0
        %vm3116 = vcmp.ge.f32.partialorder %v3113, 0.0
        %v3117 = vmul.f32 %v3110, 0.2
        %v3118 = vmul.f32 %v3113, 0.2
        %v3119 = vsel %vm3115, %v3110, %v3117
        %v3120 = vsel %vm3116, %v3113, %v3118
        %3123 = vrot.lane.b32.xlu0 %v3119, 32
        %v3124 = vpop.permute.xlu0 %3123
        %3125 = vrot.lane.b32.xlu0 %v3120, 32
        %v3126 = vpop.permute.xlu0 %3125
        %3129 = vst.msk [vmem:[#allocation2 + $0x18] sm:$0xff] %vm972, %v3124
        %3130 = vst.msk [vmem:[#allocation2 + $0x28] sm:$0xff] %vm972, %v3126
        %v3131 = vld [vmem:[#allocation2] sm:$0xff]
        %v3132 = vld [vmem:[#allocation2 + $0x8] sm:$0xff]
        %v3133 = vld [vmem:[#allocation2 + $0x10] sm:$0xff]
        %v3134 = vld [vmem:[#allocation2 + $0x18] sm:$0xff]
        %v3135 = vld [vmem:[#allocation2 + $0x20] sm:$0xff]
        %v3136 = vld [vmem:[#allocation2 + $0x28] sm:$0xff]
        %v3137 = vld [vmem:[#allocation2 + $0x30] sm:$0xff]
        %v3138 = vld [vmem:[#allocation2 + $0x38] sm:$0xff]
        %v3143 = vrot.slane %v3133, 1
        %v3144 = vrot.slane %v3134, 1
        %v3145 = vrot.slane %v3135, 1
        %v3146 = vsel %vm188, %v3143, %v3145
        %v3147 = vrot.slane %v3136, 1
        %v3148 = vsel %vm188, %v3144, %v3147
        %3149 = vrot.lane.b32.xlu0 %v3143, 64
        %v3150 = vpop.permute.xlu0 %3149
        %3151 = vrot.lane.b32.xlu0 %v3144, 64
        %v3152 = vpop.permute.xlu0 %3151
        %3153 = vrot.lane.b32.xlu0 %v3146, 64
        %v3154 = vpop.permute.xlu0 %3153
        %3155 = vrot.lane.b32.xlu0 %v3148, 64
        %v3156 = vpop.permute.xlu0 %3155
        %3157 = vrot.lane.b32.xlu0 %v3145, 64
        %v3158 = vpop.permute.xlu0 %3157
        %3159 = vrot.lane.b32.xlu0 %v3147, 64
        %v3160 = vpop.permute.xlu0 %3159
        %v3161 = vsel %vm170, %v3150, %v3152
        %v3162 = vsel %vm170, %v3154, %v3156
        %v3163 = vsel %vm170, %v3158, %v3160
        %v3169 = vrot.slane %v3133, 2
        %v3170 = vrot.slane %v3134, 2
        %v3171 = vrot.slane %v3135, 2
        %v3172 = vsel %vm202, %v3169, %v3171
        %v3173 = vrot.slane %v3136, 2
        %v3174 = vsel %vm202, %v3170, %v3173
        %v3175 = vrot.slane %v3137, 2
        %v3176 = vsel %vm202, %v3171, %v3175
        %v3177 = vrot.slane %v3138, 2
        %v3178 = vsel %vm202, %v3173, %v3177
        %v3179 = vsel %vm170, %v3132, %v3150
        %v3180 = vsel %vm170, %v3134, %v3154
        %v3181 = vsel %vm170, %v3136, %v3158
        %s3182 = scalar_lea.vmem %s1, 8064
        %v3183 = vld [vmem:[%s3182] sm:$0xff]
        %v3184 = vld [vmem:[%s3182 + $0x8] sm:$0xff]
        %v3185 = vld [vmem:[%s3182 + $0x10] sm:$0xff]
        %v3186 = vld [vmem:[%s3182 + $0x18] sm:$0xff]
        %v3187 = vld [vmem:[%s3182 + $0x20] sm:$0xff]
        %v3188 = vld [vmem:[%s3182 + $0x28] sm:$0xff]
        %v3189 = vld [vmem:[%s3182 + $0x30] sm:$0xff]
        %v3190 = vld [vmem:[%s3182 + $0x38] sm:$0xff]
        %v3191 = vld [vmem:[%s3182 + $0x40] sm:$0xff]
        %v3192 = vld [vmem:[%s3182 + $0x48] sm:$0xff]
        %v3193 = vld [vmem:[%s3182 + $0x50] sm:$0xff]
        %v3194 = vld [vmem:[%s3182 + $0x58] sm:$0xff]
        %v3195 = vld [vmem:[%s3182 + $0x60] sm:$0xff]
        %v3196 = vld [vmem:[%s3182 + $0x68] sm:$0xff]
        %v3197 = vld [vmem:[%s3182 + $0x70] sm:$0xff]
        %v3198 = vld [vmem:[%s3182 + $0x78] sm:$0xff]
        %v3199 = vld [vmem:[%s3182 + $0x80] sm:$0xff]
        %v3200 = vld [vmem:[%s3182 + $0x88] sm:$0xff]
        %v3201 = vld [vmem:[%s3182 + $0x90] sm:$0xff]
        %v3202 = vld [vmem:[%s3182 + $0x98] sm:$0xff]
        %v3203 = vld [vmem:[%s3182 + $0xa0] sm:$0xff]
        %v3204 = vld [vmem:[%s3182 + $0xa8] sm:$0xff]
        %v3205 = vld [vmem:[%s3182 + $0xb0] sm:$0xff]
        %v3206 = vld [vmem:[%s3182 + $0xb8] sm:$0xff]
        %v3207 = vld [vmem:[%s3182 + $0xc0] sm:$0xff]
        %v3208 = vld [vmem:[%s3182 + $0xc8] sm:$0xff]
        %v3209 = vld [vmem:[%s3182 + $0xd0] sm:$0xff]
        %v3210 = vld [vmem:[%s3182 + $0xd8] sm:$0xff]
        %v3211 = vld [vmem:[%s3182 + $0xe0] sm:$0xff]
        %v3212 = vld [vmem:[%s3182 + $0xe8] sm:$0xff]
        %v3213 = vld [vmem:[%s3182 + $0xf0] sm:$0xff]
        %v3214 = vld [vmem:[%s3182 + $0xf8] sm:$0xff]
        %v3215 = vld [vmem:[%s3182 + $0x100] sm:$0xff]
        %v3216 = vld [vmem:[%s3182 + $0x108] sm:$0xff]
        %v3217 = vld [vmem:[%s3182 + $0x110] sm:$0xff]
        %v3218 = vld [vmem:[%s3182 + $0x118] sm:$0xff]
        %v3219 = vld [vmem:[%s3182 + $0x120] sm:$0xff]
        %v3220 = vld [vmem:[%s3182 + $0x128] sm:$0xff]
        %v3221 = vld [vmem:[%s3182 + $0x130] sm:$0xff]
        %v3222 = vld [vmem:[%s3182 + $0x138] sm:$0xff]
        %v3223 = vld [vmem:[%s3182 + $0x140] sm:$0xff]
        %v3224 = vld [vmem:[%s3182 + $0x148] sm:$0xff]
        %v3225 = vld [vmem:[%s3182 + $0x150] sm:$0xff]
        %v3226 = vld [vmem:[%s3182 + $0x158] sm:$0xff]
        %v3227 = vld [vmem:[%s3182 + $0x160] sm:$0xff]
        %v3228 = vld [vmem:[%s3182 + $0x168] sm:$0xff]
        %v3229 = vld [vmem:[%s3182 + $0x170] sm:$0xff]
        %v3230 = vld [vmem:[%s3182 + $0x178] sm:$0xff]
        %v3231 = vld [vmem:[%s3182 + $0x180] sm:$0xff]
        %v3232 = vld [vmem:[%s3182 + $0x188] sm:$0xff]
        %v3233 = vld [vmem:[%s3182 + $0x190] sm:$0xff]
        %v3234 = vld [vmem:[%s3182 + $0x198] sm:$0xff]
        %v3235 = vld [vmem:[%s3182 + $0x1a0] sm:$0xff]
        %v3236 = vld [vmem:[%s3182 + $0x1a8] sm:$0xff]
        %v3237 = vld [vmem:[%s3182 + $0x1b0] sm:$0xff]
        %v3238 = vld [vmem:[%s3182 + $0x1b8] sm:$0xff]
        %v3239 = vld [vmem:[%s3182 + $0x1c0] sm:$0xff]
        %v3240 = vld [vmem:[%s3182 + $0x1c8] sm:$0xff]
        %v3241 = vld [vmem:[%s3182 + $0x1d0] sm:$0xff]
        %v3242 = vld [vmem:[%s3182 + $0x1d8] sm:$0xff]
        %v3243 = vld [vmem:[%s3182 + $0x1e0] sm:$0xff]
        %v3244 = vld [vmem:[%s3182 + $0x1e8] sm:$0xff]
        %v3245 = vld [vmem:[%s3182 + $0x1f0] sm:$0xff]
        %v3246 = vld [vmem:[%s3182 + $0x1f8] sm:$0xff]
        %v3247 = vld [vmem:[%s3182 + $0x200] sm:$0xff]
        %v3248 = vld [vmem:[%s3182 + $0x208] sm:$0xff]
        %v3249 = vld [vmem:[%s3182 + $0x210] sm:$0xff]
        %v3250 = vld [vmem:[%s3182 + $0x218] sm:$0xff]
        %v3251 = vld [vmem:[%s3182 + $0x220] sm:$0xff]
        %v3252 = vld [vmem:[%s3182 + $0x228] sm:$0xff]
        %v3253 = vld [vmem:[%s3182 + $0x230] sm:$0xff]
        %v3254 = vld [vmem:[%s3182 + $0x238] sm:$0xff]
        %s3255 = scalar_lea.vmem %s2, 14
        %v3256 = vld [vmem:[%s3255] sm:$0x1]
        %v3258 = vperm.slane %v3256, 0
        %v3264 = vrot.slane %v3131, 7
        %v3265 = vrot.slane %v3133, 7
        %v3266 = vsel %vm242, %v3264, %v3265
        %v3267 = vrot.slane %v3179, 7
        %v3268 = vrot.slane %v3180, 7
        %v3269 = vsel %vm242, %v3267, %v3268
        %v3270 = vrot.slane %v3161, 7
        %v3271 = vrot.slane %v3162, 7
        %v3272 = vsel %vm242, %v3270, %v3271
        %v3273 = vrot.slane %v3169, 7
        %v3274 = vrot.slane %v3172, 7
        %v3275 = vsel %vm242, %v3273, %v3274
        %v3276 = vrot.slane %v3170, 7
        %v3277 = vrot.slane %v3174, 7
        %v3278 = vsel %vm242, %v3276, %v3277
        %v3279 = vrot.slane %v3135, 7
        %v3280 = vsel %vm242, %v3265, %v3279
        %v3281 = vrot.slane %v3181, 7
        %v3282 = vsel %vm242, %v3268, %v3281
        %v3283 = vrot.slane %v3163, 7
        %v3284 = vsel %vm242, %v3271, %v3283
        %v3285 = vrot.slane %v3176, 7
        %v3286 = vsel %vm242, %v3274, %v3285
        %v3287 = vrot.slane %v3178, 7
        %v3288 = vsel %vm242, %v3277, %v3287
        %v3297 = vsel %vm170, %v3278, 0
        %v3299 = vsel %vm170, %v3288, 0
        %3301 = vmatpush.msra.mxu0 %v3198
        %3302 = vmatpush.msra.mxu0 %v3197
        %3303 = vmatpush.msra.mxu0 %v3196
        %3304 = vmatpush.msra.mxu0 %v3195
        %3305 = vmatpush.msra.mxu0 %v3194
        %3306 = vmatpush.msra.mxu0 %v3193
        %3307 = vmatpush.msra.mxu0 %v3192
        %3308 = vmatpush.msra.mxu0 %v3191
        %3309 = vmatpush.msra.mxu0 %v3190
        %3310 = vmatpush.msra.mxu0 %v3189
        %3311 = vmatpush.msra.mxu0 %v3188
        %3312 = vmatpush.msra.mxu0 %v3187
        %3313 = vmatpush.msra.mxu0 %v3186
        %3314 = vmatpush.msra.mxu0 %v3185
        %3315 = vmatpush.msra.mxu0 %v3184
        %3316 = vmatpush.msra.mxu0 %v3183
        %3317 = vmatmul.f32.gmra.mxu0 %v3266
        %v3318 = vpop.f32.mrf.mxu0
        %v3319 = vadd.f32 %v3258, %v3318
        %3320 = vmatmul.f32.gmra.mxu0 %v3280
        %v3321 = vpop.f32.mrf.mxu0
        %v3322 = vadd.f32 %v3258, %v3321
        %3323 = vdwg.mxu0
        %3324 = vmatpush.msra.mxu0 %v3214
        %3325 = vmatpush.msra.mxu0 %v3213
        %3326 = vmatpush.msra.mxu0 %v3212
        %3327 = vmatpush.msra.mxu0 %v3211
        %3328 = vmatpush.msra.mxu0 %v3210
        %3329 = vmatpush.msra.mxu0 %v3209
        %3330 = vmatpush.msra.mxu0 %v3208
        %3331 = vmatpush.msra.mxu0 %v3207
        %3332 = vmatpush.msra.mxu0 %v3206
        %3333 = vmatpush.msra.mxu0 %v3205
        %3334 = vmatpush.msra.mxu0 %v3204
        %3335 = vmatpush.msra.mxu0 %v3203
        %3336 = vmatpush.msra.mxu0 %v3202
        %3337 = vmatpush.msra.mxu0 %v3201
        %3338 = vmatpush.msra.mxu0 %v3200
        %3339 = vmatpush.msra.mxu0 %v3199
        %3340 = vmatmul.f32.gmra.mxu0 %v3269
        %v3341 = vpop.f32.mrf.mxu0
        %v3342 = vadd.f32 %v3319, %v3341
        %3343 = vmatmul.f32.gmra.mxu0 %v3282
        %v3344 = vpop.f32.mrf.mxu0
        %v3345 = vadd.f32 %v3322, %v3344
        %3346 = vdwg.mxu0
        %3347 = vmatpush.msra.mxu0 %v3230
        %3348 = vmatpush.msra.mxu0 %v3229
        %3349 = vmatpush.msra.mxu0 %v3228
        %3350 = vmatpush.msra.mxu0 %v3227
        %3351 = vmatpush.msra.mxu0 %v3226
        %3352 = vmatpush.msra.mxu0 %v3225
        %3353 = vmatpush.msra.mxu0 %v3224
        %3354 = vmatpush.msra.mxu0 %v3223
        %3355 = vmatpush.msra.mxu0 %v3222
        %3356 = vmatpush.msra.mxu0 %v3221
        %3357 = vmatpush.msra.mxu0 %v3220
        %3358 = vmatpush.msra.mxu0 %v3219
        %3359 = vmatpush.msra.mxu0 %v3218
        %3360 = vmatpush.msra.mxu0 %v3217
        %3361 = vmatpush.msra.mxu0 %v3216
        %3362 = vmatpush.msra.mxu0 %v3215
        %3363 = vmatmul.f32.gmra.mxu0 %v3272
        %v3364 = vpop.f32.mrf.mxu0
        %v3365 = vadd.f32 %v3342, %v3364
        %3366 = vmatmul.f32.gmra.mxu0 %v3284
        %v3367 = vpop.f32.mrf.mxu0
        %v3368 = vadd.f32 %v3345, %v3367
        %3369 = vdwg.mxu0
        %3370 = vmatpush.msra.mxu0 %v3246
        %3371 = vmatpush.msra.mxu0 %v3245
        %3372 = vmatpush.msra.mxu0 %v3244
        %3373 = vmatpush.msra.mxu0 %v3243
        %3374 = vmatpush.msra.mxu0 %v3242
        %3375 = vmatpush.msra.mxu0 %v3241
        %3376 = vmatpush.msra.mxu0 %v3240
        %3377 = vmatpush.msra.mxu0 %v3239
        %3378 = vmatpush.msra.mxu0 %v3238
        %3379 = vmatpush.msra.mxu0 %v3237
        %3380 = vmatpush.msra.mxu0 %v3236
        %3381 = vmatpush.msra.mxu0 %v3235
        %3382 = vmatpush.msra.mxu0 %v3234
        %3383 = vmatpush.msra.mxu0 %v3233
        %3384 = vmatpush.msra.mxu0 %v3232
        %3385 = vmatpush.msra.mxu0 %v3231
        %3386 = vmatmul.f32.gmra.mxu0 %v3275
        %v3387 = vpop.f32.mrf.mxu0
        %v3388 = vadd.f32 %v3365, %v3387
        %3389 = vmatmul.f32.gmra.mxu0 %v3286
        %v3390 = vpop.f32.mrf.mxu0
        %v3391 = vadd.f32 %v3368, %v3390
        %3392 = vdwg.mxu0
        %3393 = vmatpush.msra.mxu0 0.0
        %3394 = vmatpush.msra.mxu0 0.0
        %3395 = vmatpush.msra.mxu0 0.0
        %3396 = vmatpush.msra.mxu0 0.0
        %3397 = vmatpush.msra.mxu0 0.0
        %3398 = vmatpush.msra.mxu0 0.0
        %3399 = vmatpush.msra.mxu0 0.0
        %3400 = vmatpush.msra.mxu0 0.0
        %3401 = vmatpush.msra.mxu0 %v3254
        %3402 = vmatpush.msra.mxu0 %v3253
        %3403 = vmatpush.msra.mxu0 %v3252
        %3404 = vmatpush.msra.mxu0 %v3251
        %3405 = vmatpush.msra.mxu0 %v3250
        %3406 = vmatpush.msra.mxu0 %v3249
        %3407 = vmatpush.msra.mxu0 %v3248
        %3408 = vmatpush.msra.mxu0 %v3247
        %3409 = vmatmul.f32.gmra.mxu0 %v3297
        %v3410 = vpop.f32.mrf.mxu0
        %v3411 = vadd.f32 %v3388, %v3410
        %3412 = vmatmul.f32.gmra.mxu0 %v3299
        %v3413 = vpop.f32.mrf.mxu0
        %v3414 = vadd.f32 %v3391, %v3413
        %3415 = vdwg.mxu0
        %v3416 = vmul.f32 %v3411, 0.2
        %v3417 = vmul.f32 %v3414, 0.2
        %v3418 = vadd.f32 %v3416, %v2340
        %v3419 = vadd.f32 %v3417, %v2341
        %v3420 = vmul.f32 %v3418, 0.2
        %v3421 = vmul.f32 %v3419, 0.2
        %v3422 = vadd.f32 %v3420, %v178
        %v3423 = vadd.f32 %v3421, %v179
        %3424 = vst.msk [vmem:[%s163] sm:$0xff] %vm170, %v3422
        %3425 = vst.msk [vmem:[%s163 + $0x8] sm:$0xff] %vm170, %v3423
        %s3426 = sand.u32 %s93, 1
        %s3427 = scalar_lea.sflag [#allocation4], %s3426
        %s3428 = sand.u32 %s93, 1
        %s3429 = smul.addr %s3428, 16
        %s3430 = scalar_lea.vmem [#allocation3], %s3429
        // Predicated region
        $region33: #{tpu_custom_call.1} parent=31 // pred_check
          %p3431 = pneg %p103
        $region34: #{tpu_custom_call.1} parent=31 // pred_check_branch
          %3433 = sbr.rel (%p3431) target = $region36
        $region35: #{tpu_custom_call.1} parent=31 // pred_region
          %3435 = vsyncadd %s3427, 0
          %s3436 = smul.addr %s17, 2
          %s3437 = smul.addr %s3436, 8
          %s3438 = scalar_lea.hbm %s3, %s3437
          %s3439 = sshll.u32 %s3430, 4
          %s3440 = int_to_ptr.vmem [resolvable:$true] %s3439
          %s3441 = sshll.u32 %s3438, 4
          %s3442 = int_to_ptr.hbm [resolvable:$true] %s3441
          %3447 = dma.vmem_to_hbm [thread:$0]  %s3440, 256, %s3442, %s3427, 128, 128, 8
        $region36: #{tpu_custom_call.1} parent=31 // pred_fallthru
          _
      $region32: #{tpu_custom_call.1} parent=5 // pred_fallthru
        _
      %p3448 = scmp.le.s32.totalorder 2, %s12
      // Predicated region
      $region37: #{tpu_custom_call.1} parent=5 // pred_check
        %p3449 = pneg %p3448
      $region38: #{tpu_custom_call.1} parent=5 // pred_check_branch
        %3451 = sbr.rel (%p3449) target = $region40
      $region39: #{tpu_custom_call.1} parent=5 // pred_region
        %s3452 = ssub.s32 %s12, 2
        // Predicated region
        $region41: #{tpu_custom_call.1} parent=39 // pred_check
          %p3453 = pneg %p109
        $region42: #{tpu_custom_call.1} parent=39 // pred_check_branch
          %3455 = sbr.rel (%p3453) target = $region44
        $region43: #{tpu_custom_call.1} parent=39 // pred_region
          %s3456 = sand.u32 %s94, 1
          %s3457 = scalar_lea.sflag [#allocation4], %s3456
          %s3458 = sand.u32 %s94, 1
          %s3459 = smul.addr %s3458, 16
          %s3460 = scalar_lea.vmem [#allocation3], %s3459
          %3462 = dma.done %s3457, 256
        $region44: #{tpu_custom_call.1} parent=39 // pred_fallthru
          _
      $region40: #{tpu_custom_call.1} parent=5 // pred_fallthru
        _
    $region6: #{tpu_custom_call.1} parent=1 // loop_footer
      %s16 = sadd.s32 1, %s12
    $region7: #{tpu_custom_call.1} parent=1 // loop_footer_branch
      %11 = sbr.rel target = $region3
    $region8: #{tpu_custom_call.1} parent=1 // loop_exit
      _
    %3463 = vsyncpa [#allocation4], 1
    %s3464 = scalar_lea.sflag [#allocation4], 1
    %3465 = vsyncpa %s3464, 1

</llo_original>
